<compile_context>
chip_gen: v5e
topology: v5e:2x2
jax: 0.10.0
libtpu: 0.0.40
codegen_flags: <defaults>
</compile_context>

<pallas_src>
import functools

import jax
import jax.numpy as jnp
from jax import lax
from jax.experimental import pallas as pl
from jax.experimental.pallas import tpu as pltpu


def _fused_conv_kernel(x_ref, w_ref, b_ref, o_ref, acc_ref, *, K, stride):
    """One (image, output-row-tile) step of the fused normalized conv.

    x_ref   : (Hp, Wp, C)        padded NHWC image slab (resident across row tiles)
    w_ref   : (K*K, C, OCp)      pre-normalized, pre-transposed weight taps
    b_ref   : (1, OCp)           padded bias (f32)
    o_ref   : (TH, OWp, OCp)     output row tile (lane-dense OCp, OWp % 8 == 0)
    acc_ref : (TH*OWp, OCp) f32  VMEM scratch accumulator (persistent)
    """
    TH, OWp, OCp = o_ref.shape
    C = x_ref.shape[-1]

    t = pl.program_id(1)
    row0 = t * (TH * stride)

    # K*K shifted-slice matmuls == im2col GEMM without materializing patches.
    # All taps accumulate in-place into the f32 scratch (MXU accumulator path);
    # the first tap overwrites, so no zero/bias init pass is needed.
    # TODO(synk): for very small C (below the MXU contraction width), build a
    # (TH*OWp, C*K*K) patch tile in VMEM and issue one wide-contraction GEMM
    # instead of K*K skinny matmuls.
    first = True
    for kh in range(K):
        for kw in range(K):
            if stride == 1:
                xs = x_ref[pl.ds(row0 + kh, TH), pl.ds(kw, OWp), :]
            else:
                # TODO(synk): for stride > 1, replace strided window loads with
                # a wrapper-side space-to-depth rearrangement so all in-kernel
                # reads are contiguous.
                xs = x_ref[pl.ds(row0 + kh, TH, stride), pl.ds(kw, OWp, stride), :]
            d = jnp.dot(
                xs.reshape(TH * OWp, C),
                w_ref[kh * K + kw],
                preferred_element_type=jnp.float32,
            )
            if first:
                acc_ref[...] = d
                first = False
            else:
                acc_ref[...] += d

    # Epilogue: bias add fused with the cast/store (single VALU pass).
    out = acc_ref[...] + b_ref[...]
    o_ref[...] = out.reshape(TH, OWp, OCp).astype(o_ref.dtype)


@functools.lru_cache(maxsize=1)
def _tpu_vmem_capacity_bytes():
    """Best-effort per-core VMEM capacity query (0 if unavailable)."""
    try:
        info = pltpu.get_tpu_info()
        return int(getattr(info, "vmem_capacity_bytes", 0) or 0)
    except Exception:
        return 0


@functools.partial(jax.jit, static_argnames=("kernel_size", "padding", "stride"))
def normalized_conv2d(x, weight, bias, *, kernel_size, padding, stride=1):
    """x: (N, C, H, W); weight: (OC, C*K*K); bias: (OC,). Returns (N, OC, OH, OW)."""
    N, C, H, W = x.shape
    OC = weight.shape[0]
    K, p, s = kernel_size, padding, stride
    assert weight.shape[1] == C * K * K

    OH = (H + 2 * p - K) // s + 1
    OW = (W + 2 * p - K) // s + 1

    # --- hoisted weight normalization (once, tiny; f32 math) -----------------
    w32 = weight.astype(jnp.float32)
    norm = jnp.sqrt(jnp.sum(w32 * w32, axis=1, keepdims=True))
    w_n = w32 / jnp.maximum(norm, 1e-12)                     # F.normalize eps
    # (OC, C*K*K) -> (K*K, C, OC): tap-major, contraction dim C, lanes = OC.
    w_taps = w_n.reshape(OC, C, K, K).transpose(2, 3, 1, 0).reshape(K * K, C, OC)

    # Lane-dense output channels (multiple of 128) -> unmasked vst's.
    OCp = pl.cdiv(OC, 128) * 128
    if OCp != OC:
        w_taps = jnp.pad(w_taps, ((0, 0), (0, 0), (0, OCp - OC)))
    bias_p = jnp.pad(bias.astype(jnp.float32), (0, OCp - OC)).reshape(1, OCp)

    # Feed the MXU in the input dtype (bf16 stays bf16); accumulate in f32.
    # NOTE: with bf16 activations the L2-normalized weights are quantized to
    # bf16 before the MXU (slightly different from PyTorch's f32-weight conv).
    w_taps = w_taps.astype(x.dtype)

    # --- generation-aware VMEM budget & output-row tiling ---------------------
    vmem_cap = _tpu_vmem_capacity_bytes()
    small_vmem = (0 < vmem_cap <= 64 * 1024 * 1024)          # v7x-class part
    if vmem_cap:
        vmem_limit = (48 if small_vmem else 100) * 1024 * 1024
    else:
        vmem_limit = 64 * 1024 * 1024                        # unknown: middle ground
    target_rows = 1024 if small_vmem else 2048               # GEMM rows per grid step

    OW_pad = pl.cdiv(OW, 8) * 8                              # free (TH,OW) collapses
    itemsize = jnp.dtype(x.dtype).itemsize

    TH = max(1, min(OH, max(1, target_rows // OW_pad)))

    def _est_bytes(th):
        hp_ub = (pl.cdiv(OH, th) * th - 1) * s + K
        wp_ub = (OW_pad - 1) * s + K
        return (2 * hp_ub * wp_ub * C * itemsize             # input slab (x2 buffers)
                + 2 * K * K * C * OCp * itemsize             # weight taps (x2 buffers)
                + 2 * th * OW_pad * OCp * itemsize           # output tile (x2 buffers)
                + th * OW_pad * OCp * 4)                     # f32 accumulator scratch

    while TH > 1 and _est_bytes(TH) > vmem_limit:
        TH = max(1, TH // 2)
    # TODO(synk): if the padded image slab alone exceeds the VMEM budget (large
    # FPN levels on 64-MiB parts), switch the input to memory_space=pl.ANY with
    # manual double-buffered make_async_copy fetching only the
    # (TH*stride + K - 1) halo rows per row tile.

    T = pl.cdiv(OH, TH)
    OH_pad = T * TH

    # --- NCHW -> padded NHWC, once (no K*K patches array in HBM) --------------
    # TODO(synk): run NHWC end-to-end in the surrounding model to drop these
    # wrapper-side transposes (each costs a full extra HBM read+write pass).
    Hp_need = (OH_pad - 1) * s + K               # rows the last tile may read
    Wp_need = (OW_pad - 1) * s + K               # cols the widest slice may read
    pad_bottom = max(0, Hp_need - (H + p))
    pad_right = max(0, Wp_need - (W + p))
    Hp = H + p + pad_bottom
    Wp = W + p + pad_right
    xh = jnp.pad(x, ((0, 0), (0, 0), (p, pad_bottom), (p, pad_right)))
    xh = xh.transpose(0, 2, 3, 1)                # (N, Hp, Wp, C)

    kernel = functools.partial(_fused_conv_kernel, K=K, stride=s)

    flops = 2 * N * OH * OW * OC * C * K * K
    bytes_accessed = (xh.size * itemsize
                      + w_taps.size * itemsize
                      + N * OH_pad * OW_pad * OCp * itemsize)

    out_nhwc = pl.pallas_call(
        kernel,
        out_shape=jax.ShapeDtypeStruct((N, OH_pad, OW_pad, OCp), x.dtype),
        grid_spec=pltpu.PrefetchScalarGridSpec(
            num_scalar_prefetch=0,
            grid=(N, T),
            in_specs=[
                # Full padded image; index constant along t -> fetched once/image.
                pl.BlockSpec((None, Hp, Wp, C), lambda n, t: (n, 0, 0, 0)),
                # Weight taps + bias: constant across the whole grid.
                pl.BlockSpec((K * K, C, OCp), lambda n, t: (0, 0, 0)),
                pl.BlockSpec((1, OCp), lambda n, t: (0, 0)),
            ],
            out_specs=pl.BlockSpec((None, TH, OW_pad, OCp), lambda n, t: (n, t, 0, 0)),
            scratch_shapes=[pltpu.VMEM((TH * OW_pad, OCp), jnp.float32)],
        ),
        compiler_params=pltpu.CompilerParams(
            # Row tiles are independent (no accumulator carried across t), so
            # both axes can be split across TensorCores (matters at N=1 on v7x).
            dimension_semantics=("parallel", "parallel"),
            vmem_limit_bytes=vmem_limit,
        ),
        cost_estimate=pl.CostEstimate(
            flops=int(flops),
            transcendentals=0,
            bytes_accessed=int(bytes_accessed),
        ),
    )(xh, w_taps, bias_p)

    # Slice off OC / OH / OW padding and return NCHW to match the PyTorch module.
    out = out_nhwc[:, :OH, :OW, :OC].transpose(0, 3, 1, 2)
    return out


def _reference(x, weight, bias, *, kernel_size, padding, stride):
    OC = weight.shape[0]
    C = x.shape[1]
    w = weight / jnp.maximum(
        jnp.sqrt(jnp.sum(weight * weight, axis=1, keepdims=True)), 1e-12
    )
    w = w.reshape(OC, C, kernel_size, kernel_size)
    out = lax.conv_general_dilated(
        x, w, window_strides=(stride, stride),
        padding=[(padding, padding), (padding, padding)],
        dimension_numbers=("NCHW", "OIHW", "NCHW"),
    )
    return out + bias.reshape(1, OC, 1, 1)


if __name__ == "__main__":
    # Module config (small, consistent with the PyTorch module).
    in_channels, out_channels = 4, 8
    kernel_size, padding, stride = 3, 1, 1
    N, H, W = 2, 16, 16

    key = jax.random.PRNGKey(0)
    kx, kw, kb = jax.random.split(key, 3)
    x = jax.random.normal(kx, (N, in_channels, H, W), dtype=jnp.float32)
    weight = jax.random.normal(
        kw, (out_channels, in_channels * kernel_size * kernel_size), dtype=jnp.float32
    )
    bias = jax.random.normal(kb, (out_channels,), dtype=jnp.float32)

    out = normalized_conv2d(
        x, weight, bias, kernel_size=kernel_size, padding=padding, stride=stride
    )
    out = jax.block_until_ready(out)

    ref = _reference(
        x, weight, bias, kernel_size=kernel_size, padding=padding, stride=stride
    )
    assert out.shape == (N, out_channels, H, W)
    assert jnp.max(jnp.abs(out - ref)) < 1e-4, "mismatch vs reference conv"

    print("KERNEL_OK")
</pallas_src>

<mosaic_0001>
module attributes {stable_mosaic.version = 11 : i64} {
  func.func @_fused_conv_kernel(%arg0: i32, %arg1: i32, %arg2: memref<1x18x18x4xf32, #tpu.memory_space<vmem>>, %arg3: memref<9x4x128xf32, #tpu.memory_space<vmem>>, %arg4: memref<1x128xf32, #tpu.memory_space<vmem>>, %arg5: memref<1x16x16x128xf32, #tpu.memory_space<vmem>>, %arg6: memref<256x128xf32, #tpu.memory_space<vmem>>) attributes {dimension_semantics = [#tpu.dimension_semantics<parallel>, #tpu.dimension_semantics<parallel>], iteration_bounds = array<i64: 2, 1>, scalar_prefetch = 0 : i64, scratch_operands = 1 : i64, tpu.core_type = #tpu.core_type<tc>, window_params = [{transform_indices = @transform_0, window_bounds = array<i64: 1, 18, 18, 4>}, {pipeline_mode = #tpu.pipeline_mode<synchronous>, transform_indices = @transform_1, window_bounds = array<i64: 9, 4, 128>}, {pipeline_mode = #tpu.pipeline_mode<synchronous>, transform_indices = @transform_2, window_bounds = array<i64: 1, 128>}, {transform_indices = @transform_3, window_bounds = array<i64: 1, 16, 16, 128>}]} {
    %c16_i32 = arith.constant 16 : i32
    %0 = arith.muli %arg1, %c16_i32 : i32
    %c0_i32 = arith.constant 0 : i32
    %1 = arith.addi %0, %c0_i32 : i32
    %c0 = arith.constant 0 : index
    %2 = arith.index_cast %1 : i32 to index
    %c0_0 = arith.constant 0 : index
    %c0_1 = arith.constant 0 : index
    %3 = vector.load %arg2[%c0, %2, %c0_0, %c0_1] : memref<1x18x18x4xf32, #tpu.memory_space<vmem>>, vector<1x16x16x4xf32>
    %4 = vector.shape_cast %3 : vector<1x16x16x4xf32> to vector<16x16x4xf32>
    %5 = vector.shape_cast %4 : vector<16x16x4xf32> to vector<256x4xf32>
    %c0_2 = arith.constant 0 : index
    %c0_3 = arith.constant 0 : index
    %c0_4 = arith.constant 0 : index
    %6 = vector.load %arg3[%c0_2, %c0_3, %c0_4] : memref<9x4x128xf32, #tpu.memory_space<vmem>>, vector<1x4x128xf32>
    %7 = vector.shape_cast %6 : vector<1x4x128xf32> to vector<4x128xf32>
    %cst = arith.constant dense<0.000000e+00> : vector<256x128xf32>
    %8 = tpu.matmul %5, %7, %cst {dimension_numbers = #tpu.dot_dimension_numbers<[1], [0], [0], [1], [0, 0, 1, 1], [], []>} : vector<256x4xf32>, vector<4x128xf32>, vector<256x128xf32> -> vector<256x128xf32>
    %c0_5 = arith.constant 0 : index
    %c0_6 = arith.constant 0 : index
    %9 = vector.load %arg6[%c0_5, %c0_6] : memref<256x128xf32, #tpu.memory_space<vmem>>, vector<256x128xf32>
    tpu.vector_store %arg6[%c0_5, %c0_6], %8 {strides = array<i32>} : memref<256x128xf32, #tpu.memory_space<vmem>>, vector<256x128xf32>,
    %c0_i32_7 = arith.constant 0 : i32
    %10 = arith.addi %0, %c0_i32_7 : i32
    %c0_8 = arith.constant 0 : index
    %11 = arith.index_cast %10 : i32 to index
    %c1 = arith.constant 1 : index
    %c0_9 = arith.constant 0 : index
    %12 = vector.load %arg2[%c0_8, %11, %c1, %c0_9] : memref<1x18x18x4xf32, #tpu.memory_space<vmem>>, vector<1x16x16x4xf32>
    %13 = vector.shape_cast %12 : vector<1x16x16x4xf32> to vector<16x16x4xf32>
    %14 = vector.shape_cast %13 : vector<16x16x4xf32> to vector<256x4xf32>
    %c1_10 = arith.constant 1 : index
    %c0_11 = arith.constant 0 : index
    %c0_12 = arith.constant 0 : index
    %15 = vector.load %arg3[%c1_10, %c0_11, %c0_12] : memref<9x4x128xf32, #tpu.memory_space<vmem>>, vector<1x4x128xf32>
    %16 = vector.shape_cast %15 : vector<1x4x128xf32> to vector<4x128xf32>
    %cst_13 = arith.constant dense<0.000000e+00> : vector<256x128xf32>
    %17 = tpu.matmul %14, %16, %cst_13 {dimension_numbers = #tpu.dot_dimension_numbers<[1], [0], [0], [1], [0, 0, 1, 1], [], []>} : vector<256x4xf32>, vector<4x128xf32>, vector<256x128xf32> -> vector<256x128xf32>
    %c0_14 = arith.constant 0 : index
    %c0_15 = arith.constant 0 : index
    %18 = vector.load %arg6[%c0_14, %c0_15] : memref<256x128xf32, #tpu.memory_space<vmem>>, vector<256x128xf32>
    %19 = arith.addf %18, %17 : vector<256x128xf32>
    %c0_16 = arith.constant 0 : index
    %c0_17 = arith.constant 0 : index
    %20 = vector.load %arg6[%c0_16, %c0_17] : memref<256x128xf32, #tpu.memory_space<vmem>>, vector<256x128xf32>
    tpu.vector_store %arg6[%c0_16, %c0_17], %19 {strides = array<i32>} : memref<256x128xf32, #tpu.memory_space<vmem>>, vector<256x128xf32>,
    %c0_i32_18 = arith.constant 0 : i32
    %21 = arith.addi %0, %c0_i32_18 : i32
    %c0_19 = arith.constant 0 : index
    %22 = arith.index_cast %21 : i32 to index
    %c2 = arith.constant 2 : index
    %c0_20 = arith.constant 0 : index
    %23 = vector.load %arg2[%c0_19, %22, %c2, %c0_20] : memref<1x18x18x4xf32, #tpu.memory_space<vmem>>, vector<1x16x16x4xf32>
    %24 = vector.shape_cast %23 : vector<1x16x16x4xf32> to vector<16x16x4xf32>
    %25 = vector.shape_cast %24 : vector<16x16x4xf32> to vector<256x4xf32>
    %c2_21 = arith.constant 2 : index
    %c0_22 = arith.constant 0 : index
    %c0_23 = arith.constant 0 : index
    %26 = vector.load %arg3[%c2_21, %c0_22, %c0_23] : memref<9x4x128xf32, #tpu.memory_space<vmem>>, vector<1x4x128xf32>
    %27 = vector.shape_cast %26 : vector<1x4x128xf32> to vector<4x128xf32>
    %cst_24 = arith.constant dense<0.000000e+00> : vector<256x128xf32>
    %28 = tpu.matmul %25, %27, %cst_24 {dimension_numbers = #tpu.dot_dimension_numbers<[1], [0], [0], [1], [0, 0, 1, 1], [], []>} : vector<256x4xf32>, vector<4x128xf32>, vector<256x128xf32> -> vector<256x128xf32>
    %c0_25 = arith.constant 0 : index
    %c0_26 = arith.constant 0 : index
    %29 = vector.load %arg6[%c0_25, %c0_26] : memref<256x128xf32, #tpu.memory_space<vmem>>, vector<256x128xf32>
    %30 = arith.addf %29, %28 : vector<256x128xf32>
    %c0_27 = arith.constant 0 : index
    %c0_28 = arith.constant 0 : index
    %31 = vector.load %arg6[%c0_27, %c0_28] : memref<256x128xf32, #tpu.memory_space<vmem>>, vector<256x128xf32>
    tpu.vector_store %arg6[%c0_27, %c0_28], %30 {strides = array<i32>} : memref<256x128xf32, #tpu.memory_space<vmem>>, vector<256x128xf32>,
    %c1_i32 = arith.constant 1 : i32
    %32 = arith.addi %0, %c1_i32 : i32
    %c0_29 = arith.constant 0 : index
    %33 = arith.index_cast %32 : i32 to index
    %c0_30 = arith.constant 0 : index
    %c0_31 = arith.constant 0 : index
    %34 = vector.load %arg2[%c0_29, %33, %c0_30, %c0_31] : memref<1x18x18x4xf32, #tpu.memory_space<vmem>>, vector<1x16x16x4xf32>
    %35 = vector.shape_cast %34 : vector<1x16x16x4xf32> to vector<16x16x4xf32>
    %36 = vector.shape_cast %35 : vector<16x16x4xf32> to vector<256x4xf32>
    %c3 = arith.constant 3 : index
    %c0_32 = arith.constant 0 : index
    %c0_33 = arith.constant 0 : index
    %37 = vector.load %arg3[%c3, %c0_32, %c0_33] : memref<9x4x128xf32, #tpu.memory_space<vmem>>, vector<1x4x128xf32>
    %38 = vector.shape_cast %37 : vector<1x4x128xf32> to vector<4x128xf32>
    %cst_34 = arith.constant dense<0.000000e+00> : vector<256x128xf32>
    %39 = tpu.matmul %36, %38, %cst_34 {dimension_numbers = #tpu.dot_dimension_numbers<[1], [0], [0], [1], [0, 0, 1, 1], [], []>} : vector<256x4xf32>, vector<4x128xf32>, vector<256x128xf32> -> vector<256x128xf32>
    %c0_35 = arith.constant 0 : index
    %c0_36 = arith.constant 0 : index
    %40 = vector.load %arg6[%c0_35, %c0_36] : memref<256x128xf32, #tpu.memory_space<vmem>>, vector<256x128xf32>
    %41 = arith.addf %40, %39 : vector<256x128xf32>
    %c0_37 = arith.constant 0 : index
    %c0_38 = arith.constant 0 : index
    %42 = vector.load %arg6[%c0_37, %c0_38] : memref<256x128xf32, #tpu.memory_space<vmem>>, vector<256x128xf32>
    tpu.vector_store %arg6[%c0_37, %c0_38], %41 {strides = array<i32>} : memref<256x128xf32, #tpu.memory_space<vmem>>, vector<256x128xf32>,
    %c1_i32_39 = arith.constant 1 : i32
    %43 = arith.addi %0, %c1_i32_39 : i32
    %c0_40 = arith.constant 0 : index
    %44 = arith.index_cast %43 : i32 to index
    %c1_41 = arith.constant 1 : index
    %c0_42 = arith.constant 0 : index
    %45 = vector.load %arg2[%c0_40, %44, %c1_41, %c0_42] : memref<1x18x18x4xf32, #tpu.memory_space<vmem>>, vector<1x16x16x4xf32>
    %46 = vector.shape_cast %45 : vector<1x16x16x4xf32> to vector<16x16x4xf32>
    %47 = vector.shape_cast %46 : vector<16x16x4xf32> to vector<256x4xf32>
    %c4 = arith.constant 4 : index
    %c0_43 = arith.constant 0 : index
    %c0_44 = arith.constant 0 : index
    %48 = vector.load %arg3[%c4, %c0_43, %c0_44] : memref<9x4x128xf32, #tpu.memory_space<vmem>>, vector<1x4x128xf32>
    %49 = vector.shape_cast %48 : vector<1x4x128xf32> to vector<4x128xf32>
    %cst_45 = arith.constant dense<0.000000e+00> : vector<256x128xf32>
    %50 = tpu.matmul %47, %49, %cst_45 {dimension_numbers = #tpu.dot_dimension_numbers<[1], [0], [0], [1], [0, 0, 1, 1], [], []>} : vector<256x4xf32>, vector<4x128xf32>, vector<256x128xf32> -> vector<256x128xf32>
    %c0_46 = arith.constant 0 : index
    %c0_47 = arith.constant 0 : index
    %51 = vector.load %arg6[%c0_46, %c0_47] : memref<256x128xf32, #tpu.memory_space<vmem>>, vector<256x128xf32>
    %52 = arith.addf %51, %50 : vector<256x128xf32>
    %c0_48 = arith.constant 0 : index
    %c0_49 = arith.constant 0 : index
    %53 = vector.load %arg6[%c0_48, %c0_49] : memref<256x128xf32, #tpu.memory_space<vmem>>, vector<256x128xf32>
    tpu.vector_store %arg6[%c0_48, %c0_49], %52 {strides = array<i32>} : memref<256x128xf32, #tpu.memory_space<vmem>>, vector<256x128xf32>,
    %c1_i32_50 = arith.constant 1 : i32
    %54 = arith.addi %0, %c1_i32_50 : i32
    %c0_51 = arith.constant 0 : index
    %55 = arith.index_cast %54 : i32 to index
    %c2_52 = arith.constant 2 : index
    %c0_53 = arith.constant 0 : index
    %56 = vector.load %arg2[%c0_51, %55, %c2_52, %c0_53] : memref<1x18x18x4xf32, #tpu.memory_space<vmem>>, vector<1x16x16x4xf32>
    %57 = vector.shape_cast %56 : vector<1x16x16x4xf32> to vector<16x16x4xf32>
    %58 = vector.shape_cast %57 : vector<16x16x4xf32> to vector<256x4xf32>
    %c5 = arith.constant 5 : index
    %c0_54 = arith.constant 0 : index
    %c0_55 = arith.constant 0 : index
    %59 = vector.load %arg3[%c5, %c0_54, %c0_55] : memref<9x4x128xf32, #tpu.memory_space<vmem>>, vector<1x4x128xf32>
    %60 = vector.shape_cast %59 : vector<1x4x128xf32> to vector<4x128xf32>
    %cst_56 = arith.constant dense<0.000000e+00> : vector<256x128xf32>
    %61 = tpu.matmul %58, %60, %cst_56 {dimension_numbers = #tpu.dot_dimension_numbers<[1], [0], [0], [1], [0, 0, 1, 1], [], []>} : vector<256x4xf32>, vector<4x128xf32>, vector<256x128xf32> -> vector<256x128xf32>
    %c0_57 = arith.constant 0 : index
    %c0_58 = arith.constant 0 : index
    %62 = vector.load %arg6[%c0_57, %c0_58] : memref<256x128xf32, #tpu.memory_space<vmem>>, vector<256x128xf32>
    %63 = arith.addf %62, %61 : vector<256x128xf32>
    %c0_59 = arith.constant 0 : index
    %c0_60 = arith.constant 0 : index
    %64 = vector.load %arg6[%c0_59, %c0_60] : memref<256x128xf32, #tpu.memory_space<vmem>>, vector<256x128xf32>
    tpu.vector_store %arg6[%c0_59, %c0_60], %63 {strides = array<i32>} : memref<256x128xf32, #tpu.memory_space<vmem>>, vector<256x128xf32>,
    %c2_i32 = arith.constant 2 : i32
    %65 = arith.addi %0, %c2_i32 : i32
    %c0_61 = arith.constant 0 : index
    %66 = arith.index_cast %65 : i32 to index
    %c0_62 = arith.constant 0 : index
    %c0_63 = arith.constant 0 : index
    %67 = vector.load %arg2[%c0_61, %66, %c0_62, %c0_63] : memref<1x18x18x4xf32, #tpu.memory_space<vmem>>, vector<1x16x16x4xf32>
    %68 = vector.shape_cast %67 : vector<1x16x16x4xf32> to vector<16x16x4xf32>
    %69 = vector.shape_cast %68 : vector<16x16x4xf32> to vector<256x4xf32>
    %c6 = arith.constant 6 : index
    %c0_64 = arith.constant 0 : index
    %c0_65 = arith.constant 0 : index
    %70 = vector.load %arg3[%c6, %c0_64, %c0_65] : memref<9x4x128xf32, #tpu.memory_space<vmem>>, vector<1x4x128xf32>
    %71 = vector.shape_cast %70 : vector<1x4x128xf32> to vector<4x128xf32>
    %cst_66 = arith.constant dense<0.000000e+00> : vector<256x128xf32>
    %72 = tpu.matmul %69, %71, %cst_66 {dimension_numbers = #tpu.dot_dimension_numbers<[1], [0], [0], [1], [0, 0, 1, 1], [], []>} : vector<256x4xf32>, vector<4x128xf32>, vector<256x128xf32> -> vector<256x128xf32>
    %c0_67 = arith.constant 0 : index
    %c0_68 = arith.constant 0 : index
    %73 = vector.load %arg6[%c0_67, %c0_68] : memref<256x128xf32, #tpu.memory_space<vmem>>, vector<256x128xf32>
    %74 = arith.addf %73, %72 : vector<256x128xf32>
    %c0_69 = arith.constant 0 : index
    %c0_70 = arith.constant 0 : index
    %75 = vector.load %arg6[%c0_69, %c0_70] : memref<256x128xf32, #tpu.memory_space<vmem>>, vector<256x128xf32>
    tpu.vector_store %arg6[%c0_69, %c0_70], %74 {strides = array<i32>} : memref<256x128xf32, #tpu.memory_space<vmem>>, vector<256x128xf32>,
    %c2_i32_71 = arith.constant 2 : i32
    %76 = arith.addi %0, %c2_i32_71 : i32
    %c0_72 = arith.constant 0 : index
    %77 = arith.index_cast %76 : i32 to index
    %c1_73 = arith.constant 1 : index
    %c0_74 = arith.constant 0 : index
    %78 = vector.load %arg2[%c0_72, %77, %c1_73, %c0_74] : memref<1x18x18x4xf32, #tpu.memory_space<vmem>>, vector<1x16x16x4xf32>
    %79 = vector.shape_cast %78 : vector<1x16x16x4xf32> to vector<16x16x4xf32>
    %80 = vector.shape_cast %79 : vector<16x16x4xf32> to vector<256x4xf32>
    %c7 = arith.constant 7 : index
    %c0_75 = arith.constant 0 : index
    %c0_76 = arith.constant 0 : index
    %81 = vector.load %arg3[%c7, %c0_75, %c0_76] : memref<9x4x128xf32, #tpu.memory_space<vmem>>, vector<1x4x128xf32>
    %82 = vector.shape_cast %81 : vector<1x4x128xf32> to vector<4x128xf32>
    %cst_77 = arith.constant dense<0.000000e+00> : vector<256x128xf32>
    %83 = tpu.matmul %80, %82, %cst_77 {dimension_numbers = #tpu.dot_dimension_numbers<[1], [0], [0], [1], [0, 0, 1, 1], [], []>} : vector<256x4xf32>, vector<4x128xf32>, vector<256x128xf32> -> vector<256x128xf32>
    %c0_78 = arith.constant 0 : index
    %c0_79 = arith.constant 0 : index
    %84 = vector.load %arg6[%c0_78, %c0_79] : memref<256x128xf32, #tpu.memory_space<vmem>>, vector<256x128xf32>
    %85 = arith.addf %84, %83 : vector<256x128xf32>
    %c0_80 = arith.constant 0 : index
    %c0_81 = arith.constant 0 : index
    %86 = vector.load %arg6[%c0_80, %c0_81] : memref<256x128xf32, #tpu.memory_space<vmem>>, vector<256x128xf32>
    tpu.vector_store %arg6[%c0_80, %c0_81], %85 {strides = array<i32>} : memref<256x128xf32, #tpu.memory_space<vmem>>, vector<256x128xf32>,
    %c2_i32_82 = arith.constant 2 : i32
    %87 = arith.addi %0, %c2_i32_82 : i32
    %c0_83 = arith.constant 0 : index
    %88 = arith.index_cast %87 : i32 to index
    %c2_84 = arith.constant 2 : index
    %c0_85 = arith.constant 0 : index
    %89 = vector.load %arg2[%c0_83, %88, %c2_84, %c0_85] : memref<1x18x18x4xf32, #tpu.memory_space<vmem>>, vector<1x16x16x4xf32>
    %90 = vector.shape_cast %89 : vector<1x16x16x4xf32> to vector<16x16x4xf32>
    %91 = vector.shape_cast %90 : vector<16x16x4xf32> to vector<256x4xf32>
    %c8 = arith.constant 8 : index
    %c0_86 = arith.constant 0 : index
    %c0_87 = arith.constant 0 : index
    %92 = vector.load %arg3[%c8, %c0_86, %c0_87] : memref<9x4x128xf32, #tpu.memory_space<vmem>>, vector<1x4x128xf32>
    %93 = vector.shape_cast %92 : vector<1x4x128xf32> to vector<4x128xf32>
    %cst_88 = arith.constant dense<0.000000e+00> : vector<256x128xf32>
    %94 = tpu.matmul %91, %93, %cst_88 {dimension_numbers = #tpu.dot_dimension_numbers<[1], [0], [0], [1], [0, 0, 1, 1], [], []>} : vector<256x4xf32>, vector<4x128xf32>, vector<256x128xf32> -> vector<256x128xf32>
    %c0_89 = arith.constant 0 : index
    %c0_90 = arith.constant 0 : index
    %95 = vector.load %arg6[%c0_89, %c0_90] : memref<256x128xf32, #tpu.memory_space<vmem>>, vector<256x128xf32>
    %96 = arith.addf %95, %94 : vector<256x128xf32>
    %c0_91 = arith.constant 0 : index
    %c0_92 = arith.constant 0 : index
    %97 = vector.load %arg6[%c0_91, %c0_92] : memref<256x128xf32, #tpu.memory_space<vmem>>, vector<256x128xf32>
    tpu.vector_store %arg6[%c0_91, %c0_92], %96 {strides = array<i32>} : memref<256x128xf32, #tpu.memory_space<vmem>>, vector<256x128xf32>,
    %c0_93 = arith.constant 0 : index
    %c0_94 = arith.constant 0 : index
    %98 = vector.load %arg6[%c0_93, %c0_94] : memref<256x128xf32, #tpu.memory_space<vmem>>, vector<256x128xf32>
    %c0_95 = arith.constant 0 : index
    %c0_96 = arith.constant 0 : index
    %99 = vector.load %arg4[%c0_95, %c0_96] : memref<1x128xf32, #tpu.memory_space<vmem>>, vector<1x128xf32>
    %100 = vector.broadcast %99 : vector<1x128xf32> to vector<256x128xf32>
    %101 = arith.addf %98, %100 : vector<256x128xf32>
    %102 = vector.shape_cast %101 : vector<256x128xf32> to vector<16x16x128xf32>
    %c0_97 = arith.constant 0 : index
    %c0_98 = arith.constant 0 : index
    %c0_99 = arith.constant 0 : index
    %c0_100 = arith.constant 0 : index
    %103 = vector.load %arg5[%c0_97, %c0_98, %c0_99, %c0_100] : memref<1x16x16x128xf32, #tpu.memory_space<vmem>>, vector<1x16x16x128xf32>
    %104 = vector.shape_cast %103 : vector<1x16x16x128xf32> to vector<16x16x128xf32>
    %105 = vector.shape_cast %102 : vector<16x16x128xf32> to vector<1x16x16x128xf32>
    tpu.vector_store %arg5[%c0_97, %c0_98, %c0_99, %c0_100], %105 {strides = array<i32>} : memref<1x16x16x128xf32, #tpu.memory_space<vmem>>, vector<1x16x16x128xf32>,
    return
  }
  func.func @transform_0(%arg0: i32, %arg1: i32) -> (i32, i32, i32, i32) {
    %c0_i32 = arith.constant 0 : i32
    %c0_i32_0 = arith.constant 0 : i32
    %c0_i32_1 = arith.constant 0 : i32
    %c0_i32_2 = arith.constant 0 : i32
    return %arg0, %c0_i32, %c0_i32_0, %c0_i32_1 : i32, i32, i32, i32
  }
  func.func @transform_1(%arg0: i32, %arg1: i32) -> (i32, i32, i32) {
    %c0_i32 = arith.constant 0 : i32
    %c0_i32_0 = arith.constant 0 : i32
    %c0_i32_1 = arith.constant 0 : i32
    %c0_i32_2 = arith.constant 0 : i32
    return %c0_i32, %c0_i32_0, %c0_i32_1 : i32, i32, i32
  }
  func.func @transform_2(%arg0: i32, %arg1: i32) -> (i32, i32) {
    %c0_i32 = arith.constant 0 : i32
    %c0_i32_0 = arith.constant 0 : i32
    %c0_i32_1 = arith.constant 0 : i32
    return %c0_i32, %c0_i32_0 : i32, i32
  }
  func.func @transform_3(%arg0: i32, %arg1: i32) -> (i32, i32, i32, i32) {
    %c0_i32 = arith.constant 0 : i32
    %c0_i32_0 = arith.constant 0 : i32
    %c0_i32_1 = arith.constant 0 : i32
    return %arg0, %arg1, %c0_i32, %c0_i32_0 : i32, i32, i32, i32
  }
}

</mosaic_0001>

<llo_original>
// kernel: normalized_conv2d.1
$region0: #{normalized_conv2d.1}
  #allocation0 [shape = 'u32[]', space=smem, size = 0x4, offset = 0x4, fixed_abs, tag = 'smem constant byte address 0x4 - core index']
  #allocation1 [shape = 'u32[72,128]{1,0:T(1,128)}', space=vmem, size = 0x9000, scoped, tag = 'internal scratch']
  #allocation2 [shape = 'f32[256,128]{1,0:T(8,128)}', space=vmem, size = 0x20000, scoped, tag = 'scratch operand']
  %s0 = inlined_call_operand.vmem [shape: f32[2,18,18,4], index: 0, kind: input, shape index: {}]
  %s1 = inlined_call_operand.vmem [shape: f32[9,4,128], index: 1, kind: input, shape index: {}]
  %s2 = inlined_call_operand.vmem [shape: f32[1,128], index: 2, kind: input, shape index: {}]
  %s3 = inlined_call_operand.vmem [shape: f32[2,16,16,128], index: 3, kind: output, shape index: {}]
  %s4 = sld [smem:[#allocation0]]
  $region45: #{normalized_conv2d.1} parent=0
    _
  %s6 = ssub.s32 1, %s4
  %s7 = scalar_select 0, %s6, %s4
  loop: start=0, step=1, limit=4
  $region2: #{normalized_conv2d.1} parent=0 // loop_pre_header
    _
  $region3: #{normalized_conv2d.1} parent=0 // loop_header
    %s9 = sphi 0, %s13
    %p10 = scmp.ge.s32.totalorder %s9, 4
    %s16 = sphi 0, %s28
    %s17 = sphi 0, %s24
    %s18 = sphi 0, %s16
    %s19 = sphi 0, %s17
    %s20 = sphi 0, %s18
    %s21 = sphi 0, %s19
    %s31 = sphi 0, %s33
    %s34 = sphi 0, %s31
    %s35 = sphi 0, %s34
    %s51 = sphi 0, %s35
    %s55 = sphi 0, %s55
    %s57 = sphi 0, %s55
    %s58 = sphi 0, %s57
    %s72 = sphi 0, %s58
    %s76 = sphi 0, %s76
    %s78 = sphi 0, %s76
    %s79 = sphi 0, %s78
    %s93 = sphi 0, %s79
    %s101 = sphi 0, %s103
    %s104 = sphi 0, %s101
    %s105 = sphi 0, %s104
    %s121 = sphi 0, %s105
  $region4: #{normalized_conv2d.1} parent=0 // loop_header_branch
    %12 = sbr.rel (%p10) target = $region8
  $region5: #{normalized_conv2d.1} parent=0 // loop_body
    %s14 = ssub.s32 %s9, 1
    %s15 = ssub.s32 %s9, 2
    %s22 = sadd.s32 1, %s17
    %p23 = scmp.ge.s32.totalorder %s22, 1
    %s24 = scalar_select %p23, 0, %s22
    %s25 = sadd.s32 1, %s16
    %s26 = scalar_select %p23, %s25, %s16
    %p27 = scmp.ge.s32.totalorder %s26, 2
    %s28 = scalar_select %p27, 0, %s26
    %s29 = ssub.s32 %s16, %s28
    %p30 = scmp.eq.s32.totalorder %s29, 0
    %s32 = sadd.s32 %s31, 1
    %s33 = scalar_select %p30, %s31, %s32
    %p36 = pneg %p30
    %p37 = scmp.eq.s32.totalorder %s9, 1
    %p38 = por %p36, %p37
    %p39 = scmp.ne.s32.totalorder %s31, %s34
    %p40 = scmp.eq.s32.totalorder %s9, 0
    %p41 = por %p39, %p40
    %p42 = scmp.ne.s32.totalorder %s31, %s34
    %p43 = scmp.eq.s32.totalorder %s14, 1
    %p44 = por %p42, %p43
    %p45 = scmp.ne.s32.totalorder %s34, %s35
    %p46 = scmp.eq.s32.totalorder %s14, 0
    %p47 = por %p45, %p46
    %p48 = scmp.ne.s32.totalorder %s34, %s35
    %p49 = scmp.eq.s32.totalorder %s15, 1
    %p50 = por %p48, %p49
    %p52 = scmp.ne.s32.totalorder %s35, %s51
    %p53 = scmp.eq.s32.totalorder %s15, 0
    %p54 = por %p52, %p53
    %s56 = sadd.s32 %s55, 1
    %p59 = scmp.eq.s32.totalorder %s9, 1
    %p60 = scmp.ne.s32.totalorder %s55, %s57
    %p61 = scmp.eq.s32.totalorder %s9, 0
    %p62 = por %p60, %p61
    %p63 = scmp.ne.s32.totalorder %s55, %s57
    %p64 = scmp.eq.s32.totalorder %s14, 1
    %p65 = por %p63, %p64
    %p66 = scmp.ne.s32.totalorder %s57, %s58
    %p67 = scmp.eq.s32.totalorder %s14, 0
    %p68 = por %p66, %p67
    %p69 = scmp.ne.s32.totalorder %s57, %s58
    %p70 = scmp.eq.s32.totalorder %s15, 1
    %p71 = por %p69, %p70
    %p73 = scmp.ne.s32.totalorder %s58, %s72
    %p74 = scmp.eq.s32.totalorder %s15, 0
    %p75 = por %p73, %p74
    %s77 = sadd.s32 %s76, 1
    %p80 = scmp.eq.s32.totalorder %s9, 1
    %p81 = scmp.ne.s32.totalorder %s76, %s78
    %p82 = scmp.eq.s32.totalorder %s9, 0
    %p83 = por %p81, %p82
    %p84 = scmp.ne.s32.totalorder %s76, %s78
    %p85 = scmp.eq.s32.totalorder %s14, 1
    %p86 = por %p84, %p85
    %p87 = scmp.ne.s32.totalorder %s78, %s79
    %p88 = scmp.eq.s32.totalorder %s14, 0
    %p89 = por %p87, %p88
    %p90 = scmp.ne.s32.totalorder %s78, %s79
    %p91 = scmp.eq.s32.totalorder %s15, 1
    %p92 = por %p90, %p91
    %p94 = scmp.ne.s32.totalorder %s79, %s93
    %p95 = scmp.eq.s32.totalorder %s15, 0
    %p96 = por %p94, %p95
    %s97 = ssub.s32 %s16, %s28
    %s98 = ssub.s32 %s17, %s24
    %s99 = sor.u32 %s97, %s98
    %p100 = scmp.eq.s32.totalorder %s99, 0
    %s102 = sadd.s32 %s101, 1
    %s103 = scalar_select %p100, %s101, %s102
    %p106 = pneg %p100
    %p107 = scmp.eq.s32.totalorder %s9, 1
    %p108 = por %p106, %p107
    %p109 = scmp.ne.s32.totalorder %s101, %s104
    %p110 = scmp.eq.s32.totalorder %s9, 0
    %p111 = por %p109, %p110
    %p112 = scmp.ne.s32.totalorder %s101, %s104
    %p113 = scmp.eq.s32.totalorder %s14, 1
    %p114 = por %p112, %p113
    %p115 = scmp.ne.s32.totalorder %s104, %s105
    %p116 = scmp.eq.s32.totalorder %s14, 0
    %p117 = por %p115, %p116
    %p118 = scmp.ne.s32.totalorder %s104, %s105
    %p119 = scmp.eq.s32.totalorder %s15, 1
    %p120 = por %p118, %p119
    %p122 = scmp.ne.s32.totalorder %s105, %s121
    %p123 = scmp.eq.s32.totalorder %s15, 0
    %p124 = por %p122, %p123
    %p125 = scmp.le.s32.totalorder 1, %s9
    %p126 = scmp.lt.s32.totalorder %s9, 3
    %p127 = pnand %p125, %p126
    %p128 = pneg %p127
    // Predicated region
    $region9: #{normalized_conv2d.1} parent=5 // pred_check
      _
    $region10: #{normalized_conv2d.1} parent=5 // pred_check_branch
      %130 = sbr.rel (%p127) target = $region12
    $region11: #{normalized_conv2d.1} parent=5 // pred_region
      %s131 = ssub.s32 %s9, 1
      // Predicated region
      $region13: #{normalized_conv2d.1} parent=11 // pred_check
        %p132 = pneg %p68
      $region14: #{normalized_conv2d.1} parent=11 // pred_check_branch
        %134 = sbr.rel (%p132) target = $region16
      $region15: #{normalized_conv2d.1} parent=11 // pred_region
        _
      $region16: #{normalized_conv2d.1} parent=11 // pred_fallthru
        _
      // Predicated region
      $region17: #{normalized_conv2d.1} parent=11 // pred_check
        %p135 = pneg %p89
      $region18: #{normalized_conv2d.1} parent=11 // pred_check_branch
        %137 = sbr.rel (%p135) target = $region20
      $region19: #{normalized_conv2d.1} parent=11 // pred_region
        _
      $region20: #{normalized_conv2d.1} parent=11 // pred_fallthru
        _
    $region12: #{normalized_conv2d.1} parent=5 // pred_fallthru
      _
    %p138 = scmp.lt.s32.totalorder %s9, 2
    // Predicated region
    $region21: #{normalized_conv2d.1} parent=5 // pred_check
      %p139 = pneg %p138
    $region22: #{normalized_conv2d.1} parent=5 // pred_check_branch
      %141 = sbr.rel (%p139) target = $region24
    $region23: #{normalized_conv2d.1} parent=5 // pred_region
      // Predicated region
      $region25: #{normalized_conv2d.1} parent=23 // pred_check
        %p142 = pneg %p41
      $region26: #{normalized_conv2d.1} parent=23 // pred_check_branch
        %144 = sbr.rel (%p142) target = $region28
      $region27: #{normalized_conv2d.1} parent=23 // pred_region
        %p145 = scmp.lt.s32.totalorder %s16, 1
        %s146 = scalar_select %p145, %s16, 1
        %s147 = smul.addr %s146, 54
        %s148 = smul.addr %s147, 8
        %s149 = scalar_lea.vmem %s0, %s148
      $region28: #{normalized_conv2d.1} parent=23 // pred_fallthru
        _
    $region24: #{normalized_conv2d.1} parent=5 // pred_fallthru
      _
    %p150 = scmp.le.s32.totalorder 1, %s9
    %p151 = scmp.lt.s32.totalorder %s9, 3
    %p152 = pnand %p150, %p151
    %p153 = pneg %p152
    // Predicated region
    $region29: #{normalized_conv2d.1} parent=5 // pred_check
      _
    $region30: #{normalized_conv2d.1} parent=5 // pred_check_branch
      %155 = sbr.rel (%p152) target = $region32
    $region31: #{normalized_conv2d.1} parent=5 // pred_region
      %s156 = ssub.s32 %s9, 1
      %p157 = scmp.lt.s32.totalorder %s18, 1
      %s158 = scalar_select %p157, %s18, 1
      %s159 = smul.addr %s158, 54
      %s160 = smul.addr %s159, 8
      %s161 = scalar_lea.vmem %s0, %s160
      %p162 = pneg %p47
      %p163 = pneg %p44
      %p164 = pneg %p68
      %p165 = pneg %p65
      %p166 = pneg %p89
      %p167 = pneg %p86
      %p168 = pneg %p117
      %p169 = pneg %p114
      %s170 = smul.u32 16, %s19
      %p171 = scmp.lt.s32.totalorder %s18, 1
      %s172 = scalar_select %p171, %s18, 1
      %p173 = scmp.lt.s32.totalorder %s170, 15
      %s174 = scalar_select %p173, %s170, 15
      %s175 = smul.addr %s174, 2
      %s176 = smul.addr %s172, 32
      %s177 = sadd.s32 %s175, %s176
      %s178 = smul.addr %s177, 8
      %s179 = scalar_lea.vmem %s3, %s178
      %p180 = scmp.lt.s32.totalorder %s18, 1
      %s181 = scalar_select %p180, %s18, 1
      %s182 = smul.addr %s181, 54
      %s183 = smul.addr %s182, 8
      %s184 = scalar_lea.vmem %s0, %s183
      %s185 = smul.u32 16, %s19
      %p186 = scmp.lt.s32.totalorder %s18, 1
      %s187 = scalar_select %p186, %s18, 1
      %p188 = scmp.lt.s32.totalorder %s185, 15
      %s189 = scalar_select %p188, %s185, 15
      %s190 = smul.addr %s189, 2
      %s191 = smul.addr %s187, 32
      %s192 = sadd.s32 %s190, %s191
      %s193 = smul.addr %s192, 8
      %s194 = scalar_lea.vmem %s3, %s193
      %s195 = smul.u32 16, %s19
      %s196 = smul.u32 %s19, 16
      %s197 = smul.u32 %s196, 24
      %s198 = scalar_lea.vmem %s184, %s197
      %v199 = vld [vmem:[%s198] sm:$0xff]
      %v200 = vld [vmem:[%s198 + $0x8] sm:$0xff]
      %v201 = vld [vmem:[%s198 + $0x18] sm:$0xff]
      %v202 = vld [vmem:[%s198 + $0x20] sm:$0xff]
      %v203 = vld [vmem:[%s198 + $0x30] sm:$0xff]
      %v204 = vld [vmem:[%s198 + $0x38] sm:$0xff]
      %v205 = vld [vmem:[%s198 + $0x48] sm:$0xff]
      %v206 = vld [vmem:[%s198 + $0x50] sm:$0xff]
      %v207 = vld [vmem:[%s198 + $0x60] sm:$0xff]
      %v208 = vld [vmem:[%s198 + $0x68] sm:$0xff]
      %v209 = vld [vmem:[%s198 + $0x78] sm:$0xff]
      %v210 = vld [vmem:[%s198 + $0x80] sm:$0xff]
      %v211 = vld [vmem:[%s198 + $0x90] sm:$0xff]
      %v212 = vld [vmem:[%s198 + $0x98] sm:$0xff]
      %v213 = vld [vmem:[%s198 + $0xa8] sm:$0xff]
      %v214 = vld [vmem:[%s198 + $0xb0] sm:$0xff]
      %v215 = vld [vmem:[%s198 + $0xc0] sm:$0xff]
      %v216 = vld [vmem:[%s198 + $0xc8] sm:$0xff]
      %v217 = vld [vmem:[%s198 + $0xd8] sm:$0xff]
      %v218 = vld [vmem:[%s198 + $0xe0] sm:$0xff]
      %v219 = vld [vmem:[%s198 + $0xf0] sm:$0xff]
      %v220 = vld [vmem:[%s198 + $0xf8] sm:$0xff]
      %v221 = vld [vmem:[%s198 + $0x108] sm:$0xff]
      %v222 = vld [vmem:[%s198 + $0x110] sm:$0xff]
      %v223 = vld [vmem:[%s198 + $0x120] sm:$0xff]
      %v224 = vld [vmem:[%s198 + $0x128] sm:$0xff]
      %v225 = vld [vmem:[%s198 + $0x138] sm:$0xff]
      %v226 = vld [vmem:[%s198 + $0x140] sm:$0xff]
      %v227 = vld [vmem:[%s198 + $0x150] sm:$0xff]
      %v228 = vld [vmem:[%s198 + $0x158] sm:$0xff]
      %v229 = vld [vmem:[%s198 + $0x168] sm:$0xff]
      %v230 = vld [vmem:[%s198 + $0x170] sm:$0xff]
      %v231 = vld [vmem:[%s1] sm:$0xf]
      %vm232 = vcmask 31744
      %v234 = vsel %vm232, %v199, 0
      %v237 = vsel %vm232, %v200, 0
      %v240 = vsel %vm232, %v201, 0
      %v243 = vsel %vm232, %v202, 0
      %v246 = vsel %vm232, %v203, 0
      %v249 = vsel %vm232, %v204, 0
      %v252 = vsel %vm232, %v205, 0
      %v255 = vsel %vm232, %v206, 0
      %v258 = vsel %vm232, %v207, 0
      %v261 = vsel %vm232, %v208, 0
      %v264 = vsel %vm232, %v209, 0
      %v267 = vsel %vm232, %v210, 0
      %v270 = vsel %vm232, %v211, 0
      %v273 = vsel %vm232, %v212, 0
      %v276 = vsel %vm232, %v213, 0
      %v279 = vsel %vm232, %v214, 0
      %v282 = vsel %vm232, %v215, 0
      %v285 = vsel %vm232, %v216, 0
      %v288 = vsel %vm232, %v217, 0
      %v291 = vsel %vm232, %v218, 0
      %v294 = vsel %vm232, %v219, 0
      %v297 = vsel %vm232, %v220, 0
      %v300 = vsel %vm232, %v221, 0
      %v303 = vsel %vm232, %v222, 0
      %v306 = vsel %vm232, %v223, 0
      %v309 = vsel %vm232, %v224, 0
      %v312 = vsel %vm232, %v225, 0
      %v315 = vsel %vm232, %v226, 0
      %v318 = vsel %vm232, %v227, 0
      %v321 = vsel %vm232, %v228, 0
      %v324 = vsel %vm232, %v229, 0
      %v327 = vsel %vm232, %v230, 0
      %vm329 = vcmask 1043456
      %v331 = vsel %vm329, %v231, 0
      %333 = vmatpush.msra.mxu0 0.0
      %334 = vmatpush.msra.mxu0 0.0
      %335 = vmatpush.msra.mxu0 0.0
      %336 = vmatpush.msra.mxu0 0.0
      %337 = vmatpush.msra.mxu0 0.0
      %338 = vmatpush.msra.mxu0 0.0
      %339 = vmatpush.msra.mxu0 0.0
      %340 = vmatpush.msra.mxu0 0.0
      %341 = vmatpush.msra.mxu0 0.0
      %342 = vmatpush.msra.mxu0 0.0
      %343 = vmatpush.msra.mxu0 0.0
      %344 = vmatpush.msra.mxu0 0.0
      %345 = vmatpush.msra.mxu0 0.0
      %346 = vmatpush.msra.mxu0 0.0
      %347 = vmatpush.msra.mxu0 0.0
      %348 = vmatpush.msra.mxu0 %v331
      %349 = vmatmul.f32.gmra.mxu0 %v234
      %v350 = vpop.f32.mrf.mxu0
      %v351 = vadd.f32 0.0, %v350
      %352 = vmatmul.f32.gmra.mxu0 %v237
      %v353 = vpop.f32.mrf.mxu0
      %v354 = vadd.f32 0.0, %v353
      %355 = vmatmul.f32.gmra.mxu0 %v240
      %v356 = vpop.f32.mrf.mxu0
      %v357 = vadd.f32 0.0, %v356
      %358 = vmatmul.f32.gmra.mxu0 %v243
      %v359 = vpop.f32.mrf.mxu0
      %v360 = vadd.f32 0.0, %v359
      %361 = vmatmul.f32.gmra.mxu0 %v246
      %v362 = vpop.f32.mrf.mxu0
      %v363 = vadd.f32 0.0, %v362
      %364 = vmatmul.f32.gmra.mxu0 %v249
      %v365 = vpop.f32.mrf.mxu0
      %v366 = vadd.f32 0.0, %v365
      %367 = vmatmul.f32.gmra.mxu0 %v252
      %v368 = vpop.f32.mrf.mxu0
      %v369 = vadd.f32 0.0, %v368
      %370 = vmatmul.f32.gmra.mxu0 %v255
      %v371 = vpop.f32.mrf.mxu0
      %v372 = vadd.f32 0.0, %v371
      %373 = vmatmul.f32.gmra.mxu0 %v258
      %v374 = vpop.f32.mrf.mxu0
      %v375 = vadd.f32 0.0, %v374
      %376 = vmatmul.f32.gmra.mxu0 %v261
      %v377 = vpop.f32.mrf.mxu0
      %v378 = vadd.f32 0.0, %v377
      %379 = vmatmul.f32.gmra.mxu0 %v264
      %v380 = vpop.f32.mrf.mxu0
      %v381 = vadd.f32 0.0, %v380
      %382 = vmatmul.f32.gmra.mxu0 %v267
      %v383 = vpop.f32.mrf.mxu0
      %v384 = vadd.f32 0.0, %v383
      %385 = vmatmul.f32.gmra.mxu0 %v270
      %v386 = vpop.f32.mrf.mxu0
      %v387 = vadd.f32 0.0, %v386
      %388 = vmatmul.f32.gmra.mxu0 %v273
      %v389 = vpop.f32.mrf.mxu0
      %v390 = vadd.f32 0.0, %v389
      %391 = vmatmul.f32.gmra.mxu0 %v276
      %v392 = vpop.f32.mrf.mxu0
      %v393 = vadd.f32 0.0, %v392
      %394 = vmatmul.f32.gmra.mxu0 %v279
      %v395 = vpop.f32.mrf.mxu0
      %v396 = vadd.f32 0.0, %v395
      %397 = vmatmul.f32.gmra.mxu0 %v282
      %v398 = vpop.f32.mrf.mxu0
      %v399 = vadd.f32 0.0, %v398
      %400 = vmatmul.f32.gmra.mxu0 %v285
      %v401 = vpop.f32.mrf.mxu0
      %v402 = vadd.f32 0.0, %v401
      %403 = vmatmul.f32.gmra.mxu0 %v288
      %v404 = vpop.f32.mrf.mxu0
      %v405 = vadd.f32 0.0, %v404
      %406 = vmatmul.f32.gmra.mxu0 %v291
      %v407 = vpop.f32.mrf.mxu0
      %v408 = vadd.f32 0.0, %v407
      %409 = vmatmul.f32.gmra.mxu0 %v294
      %v410 = vpop.f32.mrf.mxu0
      %v411 = vadd.f32 0.0, %v410
      %412 = vmatmul.f32.gmra.mxu0 %v297
      %v413 = vpop.f32.mrf.mxu0
      %v414 = vadd.f32 0.0, %v413
      %415 = vmatmul.f32.gmra.mxu0 %v300
      %v416 = vpop.f32.mrf.mxu0
      %v417 = vadd.f32 0.0, %v416
      %418 = vmatmul.f32.gmra.mxu0 %v303
      %v419 = vpop.f32.mrf.mxu0
      %v420 = vadd.f32 0.0, %v419
      %421 = vmatmul.f32.gmra.mxu0 %v306
      %v422 = vpop.f32.mrf.mxu0
      %v423 = vadd.f32 0.0, %v422
      %424 = vmatmul.f32.gmra.mxu0 %v309
      %v425 = vpop.f32.mrf.mxu0
      %v426 = vadd.f32 0.0, %v425
      %427 = vmatmul.f32.gmra.mxu0 %v312
      %v428 = vpop.f32.mrf.mxu0
      %v429 = vadd.f32 0.0, %v428
      %430 = vmatmul.f32.gmra.mxu0 %v315
      %v431 = vpop.f32.mrf.mxu0
      %v432 = vadd.f32 0.0, %v431
      %433 = vmatmul.f32.gmra.mxu0 %v318
      %v434 = vpop.f32.mrf.mxu0
      %v435 = vadd.f32 0.0, %v434
      %436 = vmatmul.f32.gmra.mxu0 %v321
      %v437 = vpop.f32.mrf.mxu0
      %v438 = vadd.f32 0.0, %v437
      %439 = vmatmul.f32.gmra.mxu0 %v324
      %v440 = vpop.f32.mrf.mxu0
      %v441 = vadd.f32 0.0, %v440
      %442 = vmatmul.f32.gmra.mxu0 %v327
      %v443 = vpop.f32.mrf.mxu0
      %v444 = vadd.f32 0.0, %v443
      %445 = vdwg.mxu0
      %446 = vst [vmem:[#allocation2] sm:$0xff] %v351
      %447 = vst [vmem:[#allocation2 + $0x8] sm:$0xff] %v354
      %448 = vst [vmem:[#allocation2 + $0x10] sm:$0xff] %v357
      %449 = vst [vmem:[#allocation2 + $0x18] sm:$0xff] %v360
      %450 = vst [vmem:[#allocation2 + $0x20] sm:$0xff] %v363
      %451 = vst [vmem:[#allocation2 + $0x28] sm:$0xff] %v366
      %452 = vst [vmem:[#allocation2 + $0x30] sm:$0xff] %v369
      %453 = vst [vmem:[#allocation2 + $0x38] sm:$0xff] %v372
      %454 = vst [vmem:[#allocation2 + $0x40] sm:$0xff] %v375
      %455 = vst [vmem:[#allocation2 + $0x48] sm:$0xff] %v378
      %456 = vst [vmem:[#allocation2 + $0x50] sm:$0xff] %v381
      %457 = vst [vmem:[#allocation2 + $0x58] sm:$0xff] %v384
      %458 = vst [vmem:[#allocation2 + $0x60] sm:$0xff] %v387
      %459 = vst [vmem:[#allocation2 + $0x68] sm:$0xff] %v390
      %460 = vst [vmem:[#allocation2 + $0x70] sm:$0xff] %v393
      %461 = vst [vmem:[#allocation2 + $0x78] sm:$0xff] %v396
      %462 = vst [vmem:[#allocation2 + $0x80] sm:$0xff] %v399
      %463 = vst [vmem:[#allocation2 + $0x88] sm:$0xff] %v402
      %464 = vst [vmem:[#allocation2 + $0x90] sm:$0xff] %v405
      %465 = vst [vmem:[#allocation2 + $0x98] sm:$0xff] %v408
      %466 = vst [vmem:[#allocation2 + $0xa0] sm:$0xff] %v411
      %467 = vst [vmem:[#allocation2 + $0xa8] sm:$0xff] %v414
      %468 = vst [vmem:[#allocation2 + $0xb0] sm:$0xff] %v417
      %469 = vst [vmem:[#allocation2 + $0xb8] sm:$0xff] %v420
      %470 = vst [vmem:[#allocation2 + $0xc0] sm:$0xff] %v423
      %471 = vst [vmem:[#allocation2 + $0xc8] sm:$0xff] %v426
      %472 = vst [vmem:[#allocation2 + $0xd0] sm:$0xff] %v429
      %473 = vst [vmem:[#allocation2 + $0xd8] sm:$0xff] %v432
      %474 = vst [vmem:[#allocation2 + $0xe0] sm:$0xff] %v435
      %475 = vst [vmem:[#allocation2 + $0xe8] sm:$0xff] %v438
      %476 = vst [vmem:[#allocation2 + $0xf0] sm:$0xff] %v441
      %477 = vst [vmem:[#allocation2 + $0xf8] sm:$0xff] %v444
      %v478 = vld [vmem:[%s198 + $0x1] sm:$0xff]
      %v479 = vld [vmem:[%s198 + $0x9] sm:$0xff]
      %v480 = vld [vmem:[%s198 + $0x19] sm:$0xff]
      %v481 = vld [vmem:[%s198 + $0x21] sm:$0xff]
      %v482 = vld [vmem:[%s198 + $0x31] sm:$0xff]
      %v483 = vld [vmem:[%s198 + $0x39] sm:$0xff]
      %v484 = vld [vmem:[%s198 + $0x49] sm:$0xff]
      %v485 = vld [vmem:[%s198 + $0x51] sm:$0xff]
      %v486 = vld [vmem:[%s198 + $0x61] sm:$0xff]
      %v487 = vld [vmem:[%s198 + $0x69] sm:$0xff]
      %v488 = vld [vmem:[%s198 + $0x79] sm:$0xff]
      %v489 = vld [vmem:[%s198 + $0x81] sm:$0xff]
      %v490 = vld [vmem:[%s198 + $0x91] sm:$0xff]
      %v491 = vld [vmem:[%s198 + $0x99] sm:$0xff]
      %v492 = vld [vmem:[%s198 + $0xa9] sm:$0xff]
      %v493 = vld [vmem:[%s198 + $0xb1] sm:$0xff]
      %v494 = vld [vmem:[%s198 + $0xc1] sm:$0xff]
      %v495 = vld [vmem:[%s198 + $0xc9] sm:$0xff]
      %v496 = vld [vmem:[%s198 + $0xd9] sm:$0xff]
      %v497 = vld [vmem:[%s198 + $0xe1] sm:$0xff]
      %v498 = vld [vmem:[%s198 + $0xf1] sm:$0xff]
      %v499 = vld [vmem:[%s198 + $0xf9] sm:$0xff]
      %v500 = vld [vmem:[%s198 + $0x109] sm:$0xff]
      %v501 = vld [vmem:[%s198 + $0x111] sm:$0xff]
      %v502 = vld [vmem:[%s198 + $0x121] sm:$0xff]
      %v503 = vld [vmem:[%s198 + $0x129] sm:$0xff]
      %v504 = vld [vmem:[%s198 + $0x139] sm:$0xff]
      %v505 = vld [vmem:[%s198 + $0x141] sm:$0xff]
      %v506 = vld [vmem:[%s198 + $0x151] sm:$0xff]
      %v507 = vld [vmem:[%s198 + $0x159] sm:$0xff]
      %v508 = vld [vmem:[%s198 + $0x169] sm:$0xff]
      %v509 = vld [vmem:[%s198 + $0x171] sm:$0xff]
      %s510 = scalar_lea.vmem %s1, 4
      %v511 = vld [vmem:[%s510] sm:$0xf]
      %v513 = vsel %vm232, %v478, 0
      %v516 = vsel %vm232, %v479, 0
      %v519 = vsel %vm232, %v480, 0
      %v522 = vsel %vm232, %v481, 0
      %v525 = vsel %vm232, %v482, 0
      %v528 = vsel %vm232, %v483, 0
      %v531 = vsel %vm232, %v484, 0
      %v534 = vsel %vm232, %v485, 0
      %v537 = vsel %vm232, %v486, 0
      %v540 = vsel %vm232, %v487, 0
      %v543 = vsel %vm232, %v488, 0
      %v546 = vsel %vm232, %v489, 0
      %v549 = vsel %vm232, %v490, 0
      %v552 = vsel %vm232, %v491, 0
      %v555 = vsel %vm232, %v492, 0
      %v558 = vsel %vm232, %v493, 0
      %v561 = vsel %vm232, %v494, 0
      %v564 = vsel %vm232, %v495, 0
      %v567 = vsel %vm232, %v496, 0
      %v570 = vsel %vm232, %v497, 0
      %v573 = vsel %vm232, %v498, 0
      %v576 = vsel %vm232, %v499, 0
      %v579 = vsel %vm232, %v500, 0
      %v582 = vsel %vm232, %v501, 0
      %v585 = vsel %vm232, %v502, 0
      %v588 = vsel %vm232, %v503, 0
      %v591 = vsel %vm232, %v504, 0
      %v594 = vsel %vm232, %v505, 0
      %v597 = vsel %vm232, %v506, 0
      %v600 = vsel %vm232, %v507, 0
      %v603 = vsel %vm232, %v508, 0
      %v606 = vsel %vm232, %v509, 0
      %v609 = vsel %vm329, %v511, 0
      %611 = vmatpush.msra.mxu0 0.0
      %612 = vmatpush.msra.mxu0 0.0
      %613 = vmatpush.msra.mxu0 0.0
      %614 = vmatpush.msra.mxu0 0.0
      %615 = vmatpush.msra.mxu0 0.0
      %616 = vmatpush.msra.mxu0 0.0
      %617 = vmatpush.msra.mxu0 0.0
      %618 = vmatpush.msra.mxu0 0.0
      %619 = vmatpush.msra.mxu0 0.0
      %620 = vmatpush.msra.mxu0 0.0
      %621 = vmatpush.msra.mxu0 0.0
      %622 = vmatpush.msra.mxu0 0.0
      %623 = vmatpush.msra.mxu0 0.0
      %624 = vmatpush.msra.mxu0 0.0
      %625 = vmatpush.msra.mxu0 0.0
      %626 = vmatpush.msra.mxu0 %v609
      %627 = vmatmul.f32.gmra.mxu0 %v513
      %v628 = vpop.f32.mrf.mxu0
      %v629 = vadd.f32 0.0, %v628
      %630 = vmatmul.f32.gmra.mxu0 %v516
      %v631 = vpop.f32.mrf.mxu0
      %v632 = vadd.f32 0.0, %v631
      %633 = vmatmul.f32.gmra.mxu0 %v519
      %v634 = vpop.f32.mrf.mxu0
      %v635 = vadd.f32 0.0, %v634
      %636 = vmatmul.f32.gmra.mxu0 %v522
      %v637 = vpop.f32.mrf.mxu0
      %v638 = vadd.f32 0.0, %v637
      %639 = vmatmul.f32.gmra.mxu0 %v525
      %v640 = vpop.f32.mrf.mxu0
      %v641 = vadd.f32 0.0, %v640
      %642 = vmatmul.f32.gmra.mxu0 %v528
      %v643 = vpop.f32.mrf.mxu0
      %v644 = vadd.f32 0.0, %v643
      %645 = vmatmul.f32.gmra.mxu0 %v531
      %v646 = vpop.f32.mrf.mxu0
      %v647 = vadd.f32 0.0, %v646
      %648 = vmatmul.f32.gmra.mxu0 %v534
      %v649 = vpop.f32.mrf.mxu0
      %v650 = vadd.f32 0.0, %v649
      %651 = vmatmul.f32.gmra.mxu0 %v537
      %v652 = vpop.f32.mrf.mxu0
      %v653 = vadd.f32 0.0, %v652
      %654 = vmatmul.f32.gmra.mxu0 %v540
      %v655 = vpop.f32.mrf.mxu0
      %v656 = vadd.f32 0.0, %v655
      %657 = vmatmul.f32.gmra.mxu0 %v543
      %v658 = vpop.f32.mrf.mxu0
      %v659 = vadd.f32 0.0, %v658
      %660 = vmatmul.f32.gmra.mxu0 %v546
      %v661 = vpop.f32.mrf.mxu0
      %v662 = vadd.f32 0.0, %v661
      %663 = vmatmul.f32.gmra.mxu0 %v549
      %v664 = vpop.f32.mrf.mxu0
      %v665 = vadd.f32 0.0, %v664
      %666 = vmatmul.f32.gmra.mxu0 %v552
      %v667 = vpop.f32.mrf.mxu0
      %v668 = vadd.f32 0.0, %v667
      %669 = vmatmul.f32.gmra.mxu0 %v555
      %v670 = vpop.f32.mrf.mxu0
      %v671 = vadd.f32 0.0, %v670
      %672 = vmatmul.f32.gmra.mxu0 %v558
      %v673 = vpop.f32.mrf.mxu0
      %v674 = vadd.f32 0.0, %v673
      %675 = vmatmul.f32.gmra.mxu0 %v561
      %v676 = vpop.f32.mrf.mxu0
      %v677 = vadd.f32 0.0, %v676
      %678 = vmatmul.f32.gmra.mxu0 %v564
      %v679 = vpop.f32.mrf.mxu0
      %v680 = vadd.f32 0.0, %v679
      %681 = vmatmul.f32.gmra.mxu0 %v567
      %v682 = vpop.f32.mrf.mxu0
      %v683 = vadd.f32 0.0, %v682
      %684 = vmatmul.f32.gmra.mxu0 %v570
      %v685 = vpop.f32.mrf.mxu0
      %v686 = vadd.f32 0.0, %v685
      %687 = vmatmul.f32.gmra.mxu0 %v573
      %v688 = vpop.f32.mrf.mxu0
      %v689 = vadd.f32 0.0, %v688
      %690 = vmatmul.f32.gmra.mxu0 %v576
      %v691 = vpop.f32.mrf.mxu0
      %v692 = vadd.f32 0.0, %v691
      %693 = vmatmul.f32.gmra.mxu0 %v579
      %v694 = vpop.f32.mrf.mxu0
      %v695 = vadd.f32 0.0, %v694
      %696 = vmatmul.f32.gmra.mxu0 %v582
      %v697 = vpop.f32.mrf.mxu0
      %v698 = vadd.f32 0.0, %v697
      %699 = vmatmul.f32.gmra.mxu0 %v585
      %v700 = vpop.f32.mrf.mxu0
      %v701 = vadd.f32 0.0, %v700
      %702 = vmatmul.f32.gmra.mxu0 %v588
      %v703 = vpop.f32.mrf.mxu0
      %v704 = vadd.f32 0.0, %v703
      %705 = vmatmul.f32.gmra.mxu0 %v591
      %v706 = vpop.f32.mrf.mxu0
      %v707 = vadd.f32 0.0, %v706
      %708 = vmatmul.f32.gmra.mxu0 %v594
      %v709 = vpop.f32.mrf.mxu0
      %v710 = vadd.f32 0.0, %v709
      %711 = vmatmul.f32.gmra.mxu0 %v597
      %v712 = vpop.f32.mrf.mxu0
      %v713 = vadd.f32 0.0, %v712
      %714 = vmatmul.f32.gmra.mxu0 %v600
      %v715 = vpop.f32.mrf.mxu0
      %v716 = vadd.f32 0.0, %v715
      %717 = vmatmul.f32.gmra.mxu0 %v603
      %v718 = vpop.f32.mrf.mxu0
      %v719 = vadd.f32 0.0, %v718
      %720 = vmatmul.f32.gmra.mxu0 %v606
      %v721 = vpop.f32.mrf.mxu0
      %v722 = vadd.f32 0.0, %v721
      %723 = vdwg.mxu0
      %v724 = vld [vmem:[#allocation2] sm:$0xff]
      %v725 = vld [vmem:[#allocation2 + $0x8] sm:$0xff]
      %v726 = vld [vmem:[#allocation2 + $0x10] sm:$0xff]
      %v727 = vld [vmem:[#allocation2 + $0x18] sm:$0xff]
      %v728 = vld [vmem:[#allocation2 + $0x20] sm:$0xff]
      %v729 = vld [vmem:[#allocation2 + $0x28] sm:$0xff]
      %v730 = vld [vmem:[#allocation2 + $0x30] sm:$0xff]
      %v731 = vld [vmem:[#allocation2 + $0x38] sm:$0xff]
      %v732 = vld [vmem:[#allocation2 + $0x40] sm:$0xff]
      %v733 = vld [vmem:[#allocation2 + $0x48] sm:$0xff]
      %v734 = vld [vmem:[#allocation2 + $0x50] sm:$0xff]
      %v735 = vld [vmem:[#allocation2 + $0x58] sm:$0xff]
      %v736 = vld [vmem:[#allocation2 + $0x60] sm:$0xff]
      %v737 = vld [vmem:[#allocation2 + $0x68] sm:$0xff]
      %v738 = vld [vmem:[#allocation2 + $0x70] sm:$0xff]
      %v739 = vld [vmem:[#allocation2 + $0x78] sm:$0xff]
      %v740 = vld [vmem:[#allocation2 + $0x80] sm:$0xff]
      %v741 = vld [vmem:[#allocation2 + $0x88] sm:$0xff]
      %v742 = vld [vmem:[#allocation2 + $0x90] sm:$0xff]
      %v743 = vld [vmem:[#allocation2 + $0x98] sm:$0xff]
      %v744 = vld [vmem:[#allocation2 + $0xa0] sm:$0xff]
      %v745 = vld [vmem:[#allocation2 + $0xa8] sm:$0xff]
      %v746 = vld [vmem:[#allocation2 + $0xb0] sm:$0xff]
      %v747 = vld [vmem:[#allocation2 + $0xb8] sm:$0xff]
      %v748 = vld [vmem:[#allocation2 + $0xc0] sm:$0xff]
      %v749 = vld [vmem:[#allocation2 + $0xc8] sm:$0xff]
      %v750 = vld [vmem:[#allocation2 + $0xd0] sm:$0xff]
      %v751 = vld [vmem:[#allocation2 + $0xd8] sm:$0xff]
      %v752 = vld [vmem:[#allocation2 + $0xe0] sm:$0xff]
      %v753 = vld [vmem:[#allocation2 + $0xe8] sm:$0xff]
      %v754 = vld [vmem:[#allocation2 + $0xf0] sm:$0xff]
      %v755 = vld [vmem:[#allocation2 + $0xf8] sm:$0xff]
      %v756 = vadd.f32 %v724, %v629
      %v757 = vadd.f32 %v725, %v632
      %v758 = vadd.f32 %v726, %v635
      %v759 = vadd.f32 %v727, %v638
      %v760 = vadd.f32 %v728, %v641
      %v761 = vadd.f32 %v729, %v644
      %v762 = vadd.f32 %v730, %v647
      %v763 = vadd.f32 %v731, %v650
      %v764 = vadd.f32 %v732, %v653
      %v765 = vadd.f32 %v733, %v656
      %v766 = vadd.f32 %v734, %v659
      %v767 = vadd.f32 %v735, %v662
      %v768 = vadd.f32 %v736, %v665
      %v769 = vadd.f32 %v737, %v668
      %v770 = vadd.f32 %v738, %v671
      %v771 = vadd.f32 %v739, %v674
      %v772 = vadd.f32 %v740, %v677
      %v773 = vadd.f32 %v741, %v680
      %v774 = vadd.f32 %v742, %v683
      %v775 = vadd.f32 %v743, %v686
      %v776 = vadd.f32 %v744, %v689
      %v777 = vadd.f32 %v745, %v692
      %v778 = vadd.f32 %v746, %v695
      %v779 = vadd.f32 %v747, %v698
      %v780 = vadd.f32 %v748, %v701
      %v781 = vadd.f32 %v749, %v704
      %v782 = vadd.f32 %v750, %v707
      %v783 = vadd.f32 %v751, %v710
      %v784 = vadd.f32 %v752, %v713
      %v785 = vadd.f32 %v753, %v716
      %v786 = vadd.f32 %v754, %v719
      %v787 = vadd.f32 %v755, %v722
      %788 = vst [vmem:[#allocation2] sm:$0xff] %v756
      %789 = vst [vmem:[#allocation2 + $0x8] sm:$0xff] %v757
      %790 = vst [vmem:[#allocation2 + $0x10] sm:$0xff] %v758
      %791 = vst [vmem:[#allocation2 + $0x18] sm:$0xff] %v759
      %792 = vst [vmem:[#allocation2 + $0x20] sm:$0xff] %v760
      %793 = vst [vmem:[#allocation2 + $0x28] sm:$0xff] %v761
      %794 = vst [vmem:[#allocation2 + $0x30] sm:$0xff] %v762
      %795 = vst [vmem:[#allocation2 + $0x38] sm:$0xff] %v763
      %796 = vst [vmem:[#allocation2 + $0x40] sm:$0xff] %v764
      %797 = vst [vmem:[#allocation2 + $0x48] sm:$0xff] %v765
      %798 = vst [vmem:[#allocation2 + $0x50] sm:$0xff] %v766
      %799 = vst [vmem:[#allocation2 + $0x58] sm:$0xff] %v767
      %800 = vst [vmem:[#allocation2 + $0x60] sm:$0xff] %v768
      %801 = vst [vmem:[#allocation2 + $0x68] sm:$0xff] %v769
      %802 = vst [vmem:[#allocation2 + $0x70] sm:$0xff] %v770
      %803 = vst [vmem:[#allocation2 + $0x78] sm:$0xff] %v771
      %804 = vst [vmem:[#allocation2 + $0x80] sm:$0xff] %v772
      %805 = vst [vmem:[#allocation2 + $0x88] sm:$0xff] %v773
      %806 = vst [vmem:[#allocation2 + $0x90] sm:$0xff] %v774
      %807 = vst [vmem:[#allocation2 + $0x98] sm:$0xff] %v775
      %808 = vst [vmem:[#allocation2 + $0xa0] sm:$0xff] %v776
      %809 = vst [vmem:[#allocation2 + $0xa8] sm:$0xff] %v777
      %810 = vst [vmem:[#allocation2 + $0xb0] sm:$0xff] %v778
      %811 = vst [vmem:[#allocation2 + $0xb8] sm:$0xff] %v779
      %812 = vst [vmem:[#allocation2 + $0xc0] sm:$0xff] %v780
      %813 = vst [vmem:[#allocation2 + $0xc8] sm:$0xff] %v781
      %814 = vst [vmem:[#allocation2 + $0xd0] sm:$0xff] %v782
      %815 = vst [vmem:[#allocation2 + $0xd8] sm:$0xff] %v783
      %816 = vst [vmem:[#allocation2 + $0xe0] sm:$0xff] %v784
      %817 = vst [vmem:[#allocation2 + $0xe8] sm:$0xff] %v785
      %818 = vst [vmem:[#allocation2 + $0xf0] sm:$0xff] %v786
      %819 = vst [vmem:[#allocation2 + $0xf8] sm:$0xff] %v787
      %v820 = vld [vmem:[%s198 + $0x2] sm:$0xff]
      %v821 = vld [vmem:[%s198 + $0xa] sm:$0xff]
      %v822 = vld [vmem:[%s198 + $0x1a] sm:$0xff]
      %v823 = vld [vmem:[%s198 + $0x22] sm:$0xff]
      %v824 = vld [vmem:[%s198 + $0x32] sm:$0xff]
      %v825 = vld [vmem:[%s198 + $0x3a] sm:$0xff]
      %v826 = vld [vmem:[%s198 + $0x4a] sm:$0xff]
      %v827 = vld [vmem:[%s198 + $0x52] sm:$0xff]
      %v828 = vld [vmem:[%s198 + $0x62] sm:$0xff]
      %v829 = vld [vmem:[%s198 + $0x6a] sm:$0xff]
      %v830 = vld [vmem:[%s198 + $0x7a] sm:$0xff]
      %v831 = vld [vmem:[%s198 + $0x82] sm:$0xff]
      %v832 = vld [vmem:[%s198 + $0x92] sm:$0xff]
      %v833 = vld [vmem:[%s198 + $0x9a] sm:$0xff]
      %v834 = vld [vmem:[%s198 + $0xaa] sm:$0xff]
      %v835 = vld [vmem:[%s198 + $0xb2] sm:$0xff]
      %v836 = vld [vmem:[%s198 + $0xc2] sm:$0xff]
      %v837 = vld [vmem:[%s198 + $0xca] sm:$0xff]
      %v838 = vld [vmem:[%s198 + $0xda] sm:$0xff]
      %v839 = vld [vmem:[%s198 + $0xe2] sm:$0xff]
      %v840 = vld [vmem:[%s198 + $0xf2] sm:$0xff]
      %v841 = vld [vmem:[%s198 + $0xfa] sm:$0xff]
      %v842 = vld [vmem:[%s198 + $0x10a] sm:$0xff]
      %v843 = vld [vmem:[%s198 + $0x112] sm:$0xff]
      %v844 = vld [vmem:[%s198 + $0x122] sm:$0xff]
      %v845 = vld [vmem:[%s198 + $0x12a] sm:$0xff]
      %v846 = vld [vmem:[%s198 + $0x13a] sm:$0xff]
      %v847 = vld [vmem:[%s198 + $0x142] sm:$0xff]
      %v848 = vld [vmem:[%s198 + $0x152] sm:$0xff]
      %v849 = vld [vmem:[%s198 + $0x15a] sm:$0xff]
      %v850 = vld [vmem:[%s198 + $0x16a] sm:$0xff]
      %v851 = vld [vmem:[%s198 + $0x172] sm:$0xff]
      %s852 = scalar_lea.vmem %s1, 8
      %v853 = vld [vmem:[%s852] sm:$0xf]
      %v855 = vsel %vm232, %v820, 0
      %v858 = vsel %vm232, %v821, 0
      %v861 = vsel %vm232, %v822, 0
      %v864 = vsel %vm232, %v823, 0
      %v867 = vsel %vm232, %v824, 0
      %v870 = vsel %vm232, %v825, 0
      %v873 = vsel %vm232, %v826, 0
      %v876 = vsel %vm232, %v827, 0
      %v879 = vsel %vm232, %v828, 0
      %v882 = vsel %vm232, %v829, 0
      %v885 = vsel %vm232, %v830, 0
      %v888 = vsel %vm232, %v831, 0
      %v891 = vsel %vm232, %v832, 0
      %v894 = vsel %vm232, %v833, 0
      %v897 = vsel %vm232, %v834, 0
      %v900 = vsel %vm232, %v835, 0
      %v903 = vsel %vm232, %v836, 0
      %v906 = vsel %vm232, %v837, 0
      %v909 = vsel %vm232, %v838, 0
      %v912 = vsel %vm232, %v839, 0
      %v915 = vsel %vm232, %v840, 0
      %v918 = vsel %vm232, %v841, 0
      %v921 = vsel %vm232, %v842, 0
      %v924 = vsel %vm232, %v843, 0
      %v927 = vsel %vm232, %v844, 0
      %v930 = vsel %vm232, %v845, 0
      %v933 = vsel %vm232, %v846, 0
      %v936 = vsel %vm232, %v847, 0
      %v939 = vsel %vm232, %v848, 0
      %v942 = vsel %vm232, %v849, 0
      %v945 = vsel %vm232, %v850, 0
      %v948 = vsel %vm232, %v851, 0
      %v951 = vsel %vm329, %v853, 0
      %953 = vmatpush.msra.mxu0 0.0
      %954 = vmatpush.msra.mxu0 0.0
      %955 = vmatpush.msra.mxu0 0.0
      %956 = vmatpush.msra.mxu0 0.0
      %957 = vmatpush.msra.mxu0 0.0
      %958 = vmatpush.msra.mxu0 0.0
      %959 = vmatpush.msra.mxu0 0.0
      %960 = vmatpush.msra.mxu0 0.0
      %961 = vmatpush.msra.mxu0 0.0
      %962 = vmatpush.msra.mxu0 0.0
      %963 = vmatpush.msra.mxu0 0.0
      %964 = vmatpush.msra.mxu0 0.0
      %965 = vmatpush.msra.mxu0 0.0
      %966 = vmatpush.msra.mxu0 0.0
      %967 = vmatpush.msra.mxu0 0.0
      %968 = vmatpush.msra.mxu0 %v951
      %969 = vmatmul.f32.gmra.mxu0 %v855
      %v970 = vpop.f32.mrf.mxu0
      %v971 = vadd.f32 0.0, %v970
      %972 = vmatmul.f32.gmra.mxu0 %v858
      %v973 = vpop.f32.mrf.mxu0
      %v974 = vadd.f32 0.0, %v973
      %975 = vmatmul.f32.gmra.mxu0 %v861
      %v976 = vpop.f32.mrf.mxu0
      %v977 = vadd.f32 0.0, %v976
      %978 = vmatmul.f32.gmra.mxu0 %v864
      %v979 = vpop.f32.mrf.mxu0
      %v980 = vadd.f32 0.0, %v979
      %981 = vmatmul.f32.gmra.mxu0 %v867
      %v982 = vpop.f32.mrf.mxu0
      %v983 = vadd.f32 0.0, %v982
      %984 = vmatmul.f32.gmra.mxu0 %v870
      %v985 = vpop.f32.mrf.mxu0
      %v986 = vadd.f32 0.0, %v985
      %987 = vmatmul.f32.gmra.mxu0 %v873
      %v988 = vpop.f32.mrf.mxu0
      %v989 = vadd.f32 0.0, %v988
      %990 = vmatmul.f32.gmra.mxu0 %v876
      %v991 = vpop.f32.mrf.mxu0
      %v992 = vadd.f32 0.0, %v991
      %993 = vmatmul.f32.gmra.mxu0 %v879
      %v994 = vpop.f32.mrf.mxu0
      %v995 = vadd.f32 0.0, %v994
      %996 = vmatmul.f32.gmra.mxu0 %v882
      %v997 = vpop.f32.mrf.mxu0
      %v998 = vadd.f32 0.0, %v997
      %999 = vmatmul.f32.gmra.mxu0 %v885
      %v1000 = vpop.f32.mrf.mxu0
      %v1001 = vadd.f32 0.0, %v1000
      %1002 = vmatmul.f32.gmra.mxu0 %v888
      %v1003 = vpop.f32.mrf.mxu0
      %v1004 = vadd.f32 0.0, %v1003
      %1005 = vmatmul.f32.gmra.mxu0 %v891
      %v1006 = vpop.f32.mrf.mxu0
      %v1007 = vadd.f32 0.0, %v1006
      %1008 = vmatmul.f32.gmra.mxu0 %v894
      %v1009 = vpop.f32.mrf.mxu0
      %v1010 = vadd.f32 0.0, %v1009
      %1011 = vmatmul.f32.gmra.mxu0 %v897
      %v1012 = vpop.f32.mrf.mxu0
      %v1013 = vadd.f32 0.0, %v1012
      %1014 = vmatmul.f32.gmra.mxu0 %v900
      %v1015 = vpop.f32.mrf.mxu0
      %v1016 = vadd.f32 0.0, %v1015
      %1017 = vmatmul.f32.gmra.mxu0 %v903
      %v1018 = vpop.f32.mrf.mxu0
      %v1019 = vadd.f32 0.0, %v1018
      %1020 = vmatmul.f32.gmra.mxu0 %v906
      %v1021 = vpop.f32.mrf.mxu0
      %v1022 = vadd.f32 0.0, %v1021
      %1023 = vmatmul.f32.gmra.mxu0 %v909
      %v1024 = vpop.f32.mrf.mxu0
      %v1025 = vadd.f32 0.0, %v1024
      %1026 = vmatmul.f32.gmra.mxu0 %v912
      %v1027 = vpop.f32.mrf.mxu0
      %v1028 = vadd.f32 0.0, %v1027
      %1029 = vmatmul.f32.gmra.mxu0 %v915
      %v1030 = vpop.f32.mrf.mxu0
      %v1031 = vadd.f32 0.0, %v1030
      %1032 = vmatmul.f32.gmra.mxu0 %v918
      %v1033 = vpop.f32.mrf.mxu0
      %v1034 = vadd.f32 0.0, %v1033
      %1035 = vmatmul.f32.gmra.mxu0 %v921
      %v1036 = vpop.f32.mrf.mxu0
      %v1037 = vadd.f32 0.0, %v1036
      %1038 = vmatmul.f32.gmra.mxu0 %v924
      %v1039 = vpop.f32.mrf.mxu0
      %v1040 = vadd.f32 0.0, %v1039
      %1041 = vmatmul.f32.gmra.mxu0 %v927
      %v1042 = vpop.f32.mrf.mxu0
      %v1043 = vadd.f32 0.0, %v1042
      %1044 = vmatmul.f32.gmra.mxu0 %v930
      %v1045 = vpop.f32.mrf.mxu0
      %v1046 = vadd.f32 0.0, %v1045
      %1047 = vmatmul.f32.gmra.mxu0 %v933
      %v1048 = vpop.f32.mrf.mxu0
      %v1049 = vadd.f32 0.0, %v1048
      %1050 = vmatmul.f32.gmra.mxu0 %v936
      %v1051 = vpop.f32.mrf.mxu0
      %v1052 = vadd.f32 0.0, %v1051
      %1053 = vmatmul.f32.gmra.mxu0 %v939
      %v1054 = vpop.f32.mrf.mxu0
      %v1055 = vadd.f32 0.0, %v1054
      %1056 = vmatmul.f32.gmra.mxu0 %v942
      %v1057 = vpop.f32.mrf.mxu0
      %v1058 = vadd.f32 0.0, %v1057
      %1059 = vmatmul.f32.gmra.mxu0 %v945
      %v1060 = vpop.f32.mrf.mxu0
      %v1061 = vadd.f32 0.0, %v1060
      %1062 = vmatmul.f32.gmra.mxu0 %v948
      %v1063 = vpop.f32.mrf.mxu0
      %v1064 = vadd.f32 0.0, %v1063
      %1065 = vdwg.mxu0
      %v1066 = vld [vmem:[#allocation2] sm:$0xff]
      %v1067 = vld [vmem:[#allocation2 + $0x8] sm:$0xff]
      %v1068 = vld [vmem:[#allocation2 + $0x10] sm:$0xff]
      %v1069 = vld [vmem:[#allocation2 + $0x18] sm:$0xff]
      %v1070 = vld [vmem:[#allocation2 + $0x20] sm:$0xff]
      %v1071 = vld [vmem:[#allocation2 + $0x28] sm:$0xff]
      %v1072 = vld [vmem:[#allocation2 + $0x30] sm:$0xff]
      %v1073 = vld [vmem:[#allocation2 + $0x38] sm:$0xff]
      %v1074 = vld [vmem:[#allocation2 + $0x40] sm:$0xff]
      %v1075 = vld [vmem:[#allocation2 + $0x48] sm:$0xff]
      %v1076 = vld [vmem:[#allocation2 + $0x50] sm:$0xff]
      %v1077 = vld [vmem:[#allocation2 + $0x58] sm:$0xff]
      %v1078 = vld [vmem:[#allocation2 + $0x60] sm:$0xff]
      %v1079 = vld [vmem:[#allocation2 + $0x68] sm:$0xff]
      %v1080 = vld [vmem:[#allocation2 + $0x70] sm:$0xff]
      %v1081 = vld [vmem:[#allocation2 + $0x78] sm:$0xff]
      %v1082 = vld [vmem:[#allocation2 + $0x80] sm:$0xff]
      %v1083 = vld [vmem:[#allocation2 + $0x88] sm:$0xff]
      %v1084 = vld [vmem:[#allocation2 + $0x90] sm:$0xff]
      %v1085 = vld [vmem:[#allocation2 + $0x98] sm:$0xff]
      %v1086 = vld [vmem:[#allocation2 + $0xa0] sm:$0xff]
      %v1087 = vld [vmem:[#allocation2 + $0xa8] sm:$0xff]
      %v1088 = vld [vmem:[#allocation2 + $0xb0] sm:$0xff]
      %v1089 = vld [vmem:[#allocation2 + $0xb8] sm:$0xff]
      %v1090 = vld [vmem:[#allocation2 + $0xc0] sm:$0xff]
      %v1091 = vld [vmem:[#allocation2 + $0xc8] sm:$0xff]
      %v1092 = vld [vmem:[#allocation2 + $0xd0] sm:$0xff]
      %v1093 = vld [vmem:[#allocation2 + $0xd8] sm:$0xff]
      %v1094 = vld [vmem:[#allocation2 + $0xe0] sm:$0xff]
      %v1095 = vld [vmem:[#allocation2 + $0xe8] sm:$0xff]
      %v1096 = vld [vmem:[#allocation2 + $0xf0] sm:$0xff]
      %v1097 = vld [vmem:[#allocation2 + $0xf8] sm:$0xff]
      %v1098 = vadd.f32 %v1066, %v971
      %v1099 = vadd.f32 %v1067, %v974
      %v1100 = vadd.f32 %v1068, %v977
      %v1101 = vadd.f32 %v1069, %v980
      %v1102 = vadd.f32 %v1070, %v983
      %v1103 = vadd.f32 %v1071, %v986
      %v1104 = vadd.f32 %v1072, %v989
      %v1105 = vadd.f32 %v1073, %v992
      %v1106 = vadd.f32 %v1074, %v995
      %v1107 = vadd.f32 %v1075, %v998
      %v1108 = vadd.f32 %v1076, %v1001
      %v1109 = vadd.f32 %v1077, %v1004
      %v1110 = vadd.f32 %v1078, %v1007
      %v1111 = vadd.f32 %v1079, %v1010
      %v1112 = vadd.f32 %v1080, %v1013
      %v1113 = vadd.f32 %v1081, %v1016
      %v1114 = vadd.f32 %v1082, %v1019
      %v1115 = vadd.f32 %v1083, %v1022
      %v1116 = vadd.f32 %v1084, %v1025
      %v1117 = vadd.f32 %v1085, %v1028
      %v1118 = vadd.f32 %v1086, %v1031
      %v1119 = vadd.f32 %v1087, %v1034
      %v1120 = vadd.f32 %v1088, %v1037
      %v1121 = vadd.f32 %v1089, %v1040
      %v1122 = vadd.f32 %v1090, %v1043
      %v1123 = vadd.f32 %v1091, %v1046
      %v1124 = vadd.f32 %v1092, %v1049
      %v1125 = vadd.f32 %v1093, %v1052
      %v1126 = vadd.f32 %v1094, %v1055
      %v1127 = vadd.f32 %v1095, %v1058
      %v1128 = vadd.f32 %v1096, %v1061
      %v1129 = vadd.f32 %v1097, %v1064
      %1130 = vst [vmem:[#allocation2] sm:$0xff] %v1098
      %1131 = vst [vmem:[#allocation2 + $0x8] sm:$0xff] %v1099
      %1132 = vst [vmem:[#allocation2 + $0x10] sm:$0xff] %v1100
      %1133 = vst [vmem:[#allocation2 + $0x18] sm:$0xff] %v1101
      %1134 = vst [vmem:[#allocation2 + $0x20] sm:$0xff] %v1102
      %1135 = vst [vmem:[#allocation2 + $0x28] sm:$0xff] %v1103
      %1136 = vst [vmem:[#allocation2 + $0x30] sm:$0xff] %v1104
      %1137 = vst [vmem:[#allocation2 + $0x38] sm:$0xff] %v1105
      %1138 = vst [vmem:[#allocation2 + $0x40] sm:$0xff] %v1106
      %1139 = vst [vmem:[#allocation2 + $0x48] sm:$0xff] %v1107
      %1140 = vst [vmem:[#allocation2 + $0x50] sm:$0xff] %v1108
      %1141 = vst [vmem:[#allocation2 + $0x58] sm:$0xff] %v1109
      %1142 = vst [vmem:[#allocation2 + $0x60] sm:$0xff] %v1110
      %1143 = vst [vmem:[#allocation2 + $0x68] sm:$0xff] %v1111
      %1144 = vst [vmem:[#allocation2 + $0x70] sm:$0xff] %v1112
      %1145 = vst [vmem:[#allocation2 + $0x78] sm:$0xff] %v1113
      %1146 = vst [vmem:[#allocation2 + $0x80] sm:$0xff] %v1114
      %1147 = vst [vmem:[#allocation2 + $0x88] sm:$0xff] %v1115
      %1148 = vst [vmem:[#allocation2 + $0x90] sm:$0xff] %v1116
      %1149 = vst [vmem:[#allocation2 + $0x98] sm:$0xff] %v1117
      %1150 = vst [vmem:[#allocation2 + $0xa0] sm:$0xff] %v1118
      %1151 = vst [vmem:[#allocation2 + $0xa8] sm:$0xff] %v1119
      %1152 = vst [vmem:[#allocation2 + $0xb0] sm:$0xff] %v1120
      %1153 = vst [vmem:[#allocation2 + $0xb8] sm:$0xff] %v1121
      %1154 = vst [vmem:[#allocation2 + $0xc0] sm:$0xff] %v1122
      %1155 = vst [vmem:[#allocation2 + $0xc8] sm:$0xff] %v1123
      %1156 = vst [vmem:[#allocation2 + $0xd0] sm:$0xff] %v1124
      %1157 = vst [vmem:[#allocation2 + $0xd8] sm:$0xff] %v1125
      %1158 = vst [vmem:[#allocation2 + $0xe0] sm:$0xff] %v1126
      %1159 = vst [vmem:[#allocation2 + $0xe8] sm:$0xff] %v1127
      %1160 = vst [vmem:[#allocation2 + $0xf0] sm:$0xff] %v1128
      %1161 = vst [vmem:[#allocation2 + $0xf8] sm:$0xff] %v1129
      %s1162 = sadd.s32 %s196, 1
      %s1163 = smul.u32 %s1162, 24
      %s1164 = scalar_lea.vmem %s184, %s1163
      %v1165 = vld [vmem:[%s1164] sm:$0xff]
      %v1166 = vld [vmem:[%s1164 + $0x8] sm:$0xff]
      %v1167 = vld [vmem:[%s1164 + $0x18] sm:$0xff]
      %v1168 = vld [vmem:[%s1164 + $0x20] sm:$0xff]
      %v1169 = vld [vmem:[%s1164 + $0x30] sm:$0xff]
      %v1170 = vld [vmem:[%s1164 + $0x38] sm:$0xff]
      %v1171 = vld [vmem:[%s1164 + $0x48] sm:$0xff]
      %v1172 = vld [vmem:[%s1164 + $0x50] sm:$0xff]
      %v1173 = vld [vmem:[%s1164 + $0x60] sm:$0xff]
      %v1174 = vld [vmem:[%s1164 + $0x68] sm:$0xff]
      %v1175 = vld [vmem:[%s1164 + $0x78] sm:$0xff]
      %v1176 = vld [vmem:[%s1164 + $0x80] sm:$0xff]
      %v1177 = vld [vmem:[%s1164 + $0x90] sm:$0xff]
      %v1178 = vld [vmem:[%s1164 + $0x98] sm:$0xff]
      %v1179 = vld [vmem:[%s1164 + $0xa8] sm:$0xff]
      %v1180 = vld [vmem:[%s1164 + $0xb0] sm:$0xff]
      %v1181 = vld [vmem:[%s1164 + $0xc0] sm:$0xff]
      %v1182 = vld [vmem:[%s1164 + $0xc8] sm:$0xff]
      %v1183 = vld [vmem:[%s1164 + $0xd8] sm:$0xff]
      %v1184 = vld [vmem:[%s1164 + $0xe0] sm:$0xff]
      %v1185 = vld [vmem:[%s1164 + $0xf0] sm:$0xff]
      %v1186 = vld [vmem:[%s1164 + $0xf8] sm:$0xff]
      %v1187 = vld [vmem:[%s1164 + $0x108] sm:$0xff]
      %v1188 = vld [vmem:[%s1164 + $0x110] sm:$0xff]
      %v1189 = vld [vmem:[%s1164 + $0x120] sm:$0xff]
      %v1190 = vld [vmem:[%s1164 + $0x128] sm:$0xff]
      %v1191 = vld [vmem:[%s1164 + $0x138] sm:$0xff]
      %v1192 = vld [vmem:[%s1164 + $0x140] sm:$0xff]
      %v1193 = vld [vmem:[%s1164 + $0x150] sm:$0xff]
      %v1194 = vld [vmem:[%s1164 + $0x158] sm:$0xff]
      %v1195 = vld [vmem:[%s1164 + $0x168] sm:$0xff]
      %v1196 = vld [vmem:[%s1164 + $0x170] sm:$0xff]
      %s1197 = scalar_lea.vmem %s1, 12
      %v1198 = vld [vmem:[%s1197] sm:$0xf]
      %v1200 = vsel %vm232, %v1165, 0
      %v1203 = vsel %vm232, %v1166, 0
      %v1206 = vsel %vm232, %v1167, 0
      %v1209 = vsel %vm232, %v1168, 0
      %v1212 = vsel %vm232, %v1169, 0
      %v1215 = vsel %vm232, %v1170, 0
      %v1218 = vsel %vm232, %v1171, 0
      %v1221 = vsel %vm232, %v1172, 0
      %v1224 = vsel %vm232, %v1173, 0
      %v1227 = vsel %vm232, %v1174, 0
      %v1230 = vsel %vm232, %v1175, 0
      %v1233 = vsel %vm232, %v1176, 0
      %v1236 = vsel %vm232, %v1177, 0
      %v1239 = vsel %vm232, %v1178, 0
      %v1242 = vsel %vm232, %v1179, 0
      %v1245 = vsel %vm232, %v1180, 0
      %v1248 = vsel %vm232, %v1181, 0
      %v1251 = vsel %vm232, %v1182, 0
      %v1254 = vsel %vm232, %v1183, 0
      %v1257 = vsel %vm232, %v1184, 0
      %v1260 = vsel %vm232, %v1185, 0
      %v1263 = vsel %vm232, %v1186, 0
      %v1266 = vsel %vm232, %v1187, 0
      %v1269 = vsel %vm232, %v1188, 0
      %v1272 = vsel %vm232, %v1189, 0
      %v1275 = vsel %vm232, %v1190, 0
      %v1278 = vsel %vm232, %v1191, 0
      %v1281 = vsel %vm232, %v1192, 0
      %v1284 = vsel %vm232, %v1193, 0
      %v1287 = vsel %vm232, %v1194, 0
      %v1290 = vsel %vm232, %v1195, 0
      %v1293 = vsel %vm232, %v1196, 0
      %v1296 = vsel %vm329, %v1198, 0
      %1298 = vmatpush.msra.mxu0 0.0
      %1299 = vmatpush.msra.mxu0 0.0
      %1300 = vmatpush.msra.mxu0 0.0
      %1301 = vmatpush.msra.mxu0 0.0
      %1302 = vmatpush.msra.mxu0 0.0
      %1303 = vmatpush.msra.mxu0 0.0
      %1304 = vmatpush.msra.mxu0 0.0
      %1305 = vmatpush.msra.mxu0 0.0
      %1306 = vmatpush.msra.mxu0 0.0
      %1307 = vmatpush.msra.mxu0 0.0
      %1308 = vmatpush.msra.mxu0 0.0
      %1309 = vmatpush.msra.mxu0 0.0
      %1310 = vmatpush.msra.mxu0 0.0
      %1311 = vmatpush.msra.mxu0 0.0
      %1312 = vmatpush.msra.mxu0 0.0
      %1313 = vmatpush.msra.mxu0 %v1296
      %1314 = vmatmul.f32.gmra.mxu0 %v1200
      %v1315 = vpop.f32.mrf.mxu0
      %v1316 = vadd.f32 0.0, %v1315
      %1317 = vmatmul.f32.gmra.mxu0 %v1203
      %v1318 = vpop.f32.mrf.mxu0
      %v1319 = vadd.f32 0.0, %v1318
      %1320 = vmatmul.f32.gmra.mxu0 %v1206
      %v1321 = vpop.f32.mrf.mxu0
      %v1322 = vadd.f32 0.0, %v1321
      %1323 = vmatmul.f32.gmra.mxu0 %v1209
      %v1324 = vpop.f32.mrf.mxu0
      %v1325 = vadd.f32 0.0, %v1324
      %1326 = vmatmul.f32.gmra.mxu0 %v1212
      %v1327 = vpop.f32.mrf.mxu0
      %v1328 = vadd.f32 0.0, %v1327
      %1329 = vmatmul.f32.gmra.mxu0 %v1215
      %v1330 = vpop.f32.mrf.mxu0
      %v1331 = vadd.f32 0.0, %v1330
      %1332 = vmatmul.f32.gmra.mxu0 %v1218
      %v1333 = vpop.f32.mrf.mxu0
      %v1334 = vadd.f32 0.0, %v1333
      %1335 = vmatmul.f32.gmra.mxu0 %v1221
      %v1336 = vpop.f32.mrf.mxu0
      %v1337 = vadd.f32 0.0, %v1336
      %1338 = vmatmul.f32.gmra.mxu0 %v1224
      %v1339 = vpop.f32.mrf.mxu0
      %v1340 = vadd.f32 0.0, %v1339
      %1341 = vmatmul.f32.gmra.mxu0 %v1227
      %v1342 = vpop.f32.mrf.mxu0
      %v1343 = vadd.f32 0.0, %v1342
      %1344 = vmatmul.f32.gmra.mxu0 %v1230
      %v1345 = vpop.f32.mrf.mxu0
      %v1346 = vadd.f32 0.0, %v1345
      %1347 = vmatmul.f32.gmra.mxu0 %v1233
      %v1348 = vpop.f32.mrf.mxu0
      %v1349 = vadd.f32 0.0, %v1348
      %1350 = vmatmul.f32.gmra.mxu0 %v1236
      %v1351 = vpop.f32.mrf.mxu0
      %v1352 = vadd.f32 0.0, %v1351
      %1353 = vmatmul.f32.gmra.mxu0 %v1239
      %v1354 = vpop.f32.mrf.mxu0
      %v1355 = vadd.f32 0.0, %v1354
      %1356 = vmatmul.f32.gmra.mxu0 %v1242
      %v1357 = vpop.f32.mrf.mxu0
      %v1358 = vadd.f32 0.0, %v1357
      %1359 = vmatmul.f32.gmra.mxu0 %v1245
      %v1360 = vpop.f32.mrf.mxu0
      %v1361 = vadd.f32 0.0, %v1360
      %1362 = vmatmul.f32.gmra.mxu0 %v1248
      %v1363 = vpop.f32.mrf.mxu0
      %v1364 = vadd.f32 0.0, %v1363
      %1365 = vmatmul.f32.gmra.mxu0 %v1251
      %v1366 = vpop.f32.mrf.mxu0
      %v1367 = vadd.f32 0.0, %v1366
      %1368 = vmatmul.f32.gmra.mxu0 %v1254
      %v1369 = vpop.f32.mrf.mxu0
      %v1370 = vadd.f32 0.0, %v1369
      %1371 = vmatmul.f32.gmra.mxu0 %v1257
      %v1372 = vpop.f32.mrf.mxu0
      %v1373 = vadd.f32 0.0, %v1372
      %1374 = vmatmul.f32.gmra.mxu0 %v1260
      %v1375 = vpop.f32.mrf.mxu0
      %v1376 = vadd.f32 0.0, %v1375
      %1377 = vmatmul.f32.gmra.mxu0 %v1263
      %v1378 = vpop.f32.mrf.mxu0
      %v1379 = vadd.f32 0.0, %v1378
      %1380 = vmatmul.f32.gmra.mxu0 %v1266
      %v1381 = vpop.f32.mrf.mxu0
      %v1382 = vadd.f32 0.0, %v1381
      %1383 = vmatmul.f32.gmra.mxu0 %v1269
      %v1384 = vpop.f32.mrf.mxu0
      %v1385 = vadd.f32 0.0, %v1384
      %1386 = vmatmul.f32.gmra.mxu0 %v1272
      %v1387 = vpop.f32.mrf.mxu0
      %v1388 = vadd.f32 0.0, %v1387
      %1389 = vmatmul.f32.gmra.mxu0 %v1275
      %v1390 = vpop.f32.mrf.mxu0
      %v1391 = vadd.f32 0.0, %v1390
      %1392 = vmatmul.f32.gmra.mxu0 %v1278
      %v1393 = vpop.f32.mrf.mxu0
      %v1394 = vadd.f32 0.0, %v1393
      %1395 = vmatmul.f32.gmra.mxu0 %v1281
      %v1396 = vpop.f32.mrf.mxu0
      %v1397 = vadd.f32 0.0, %v1396
      %1398 = vmatmul.f32.gmra.mxu0 %v1284
      %v1399 = vpop.f32.mrf.mxu0
      %v1400 = vadd.f32 0.0, %v1399
      %1401 = vmatmul.f32.gmra.mxu0 %v1287
      %v1402 = vpop.f32.mrf.mxu0
      %v1403 = vadd.f32 0.0, %v1402
      %1404 = vmatmul.f32.gmra.mxu0 %v1290
      %v1405 = vpop.f32.mrf.mxu0
      %v1406 = vadd.f32 0.0, %v1405
      %1407 = vmatmul.f32.gmra.mxu0 %v1293
      %v1408 = vpop.f32.mrf.mxu0
      %v1409 = vadd.f32 0.0, %v1408
      %1410 = vdwg.mxu0
      %v1411 = vld [vmem:[#allocation2] sm:$0xff]
      %v1412 = vld [vmem:[#allocation2 + $0x8] sm:$0xff]
      %v1413 = vld [vmem:[#allocation2 + $0x10] sm:$0xff]
      %v1414 = vld [vmem:[#allocation2 + $0x18] sm:$0xff]
      %v1415 = vld [vmem:[#allocation2 + $0x20] sm:$0xff]
      %v1416 = vld [vmem:[#allocation2 + $0x28] sm:$0xff]
      %v1417 = vld [vmem:[#allocation2 + $0x30] sm:$0xff]
      %v1418 = vld [vmem:[#allocation2 + $0x38] sm:$0xff]
      %v1419 = vld [vmem:[#allocation2 + $0x40] sm:$0xff]
      %v1420 = vld [vmem:[#allocation2 + $0x48] sm:$0xff]
      %v1421 = vld [vmem:[#allocation2 + $0x50] sm:$0xff]
      %v1422 = vld [vmem:[#allocation2 + $0x58] sm:$0xff]
      %v1423 = vld [vmem:[#allocation2 + $0x60] sm:$0xff]
      %v1424 = vld [vmem:[#allocation2 + $0x68] sm:$0xff]
      %v1425 = vld [vmem:[#allocation2 + $0x70] sm:$0xff]
      %v1426 = vld [vmem:[#allocation2 + $0x78] sm:$0xff]
      %v1427 = vld [vmem:[#allocation2 + $0x80] sm:$0xff]
      %v1428 = vld [vmem:[#allocation2 + $0x88] sm:$0xff]
      %v1429 = vld [vmem:[#allocation2 + $0x90] sm:$0xff]
      %v1430 = vld [vmem:[#allocation2 + $0x98] sm:$0xff]
      %v1431 = vld [vmem:[#allocation2 + $0xa0] sm:$0xff]
      %v1432 = vld [vmem:[#allocation2 + $0xa8] sm:$0xff]
      %v1433 = vld [vmem:[#allocation2 + $0xb0] sm:$0xff]
      %v1434 = vld [vmem:[#allocation2 + $0xb8] sm:$0xff]
      %v1435 = vld [vmem:[#allocation2 + $0xc0] sm:$0xff]
      %v1436 = vld [vmem:[#allocation2 + $0xc8] sm:$0xff]
      %v1437 = vld [vmem:[#allocation2 + $0xd0] sm:$0xff]
      %v1438 = vld [vmem:[#allocation2 + $0xd8] sm:$0xff]
      %v1439 = vld [vmem:[#allocation2 + $0xe0] sm:$0xff]
      %v1440 = vld [vmem:[#allocation2 + $0xe8] sm:$0xff]
      %v1441 = vld [vmem:[#allocation2 + $0xf0] sm:$0xff]
      %v1442 = vld [vmem:[#allocation2 + $0xf8] sm:$0xff]
      %v1443 = vadd.f32 %v1411, %v1316
      %v1444 = vadd.f32 %v1412, %v1319
      %v1445 = vadd.f32 %v1413, %v1322
      %v1446 = vadd.f32 %v1414, %v1325
      %v1447 = vadd.f32 %v1415, %v1328
      %v1448 = vadd.f32 %v1416, %v1331
      %v1449 = vadd.f32 %v1417, %v1334
      %v1450 = vadd.f32 %v1418, %v1337
      %v1451 = vadd.f32 %v1419, %v1340
      %v1452 = vadd.f32 %v1420, %v1343
      %v1453 = vadd.f32 %v1421, %v1346
      %v1454 = vadd.f32 %v1422, %v1349
      %v1455 = vadd.f32 %v1423, %v1352
      %v1456 = vadd.f32 %v1424, %v1355
      %v1457 = vadd.f32 %v1425, %v1358
      %v1458 = vadd.f32 %v1426, %v1361
      %v1459 = vadd.f32 %v1427, %v1364
      %v1460 = vadd.f32 %v1428, %v1367
      %v1461 = vadd.f32 %v1429, %v1370
      %v1462 = vadd.f32 %v1430, %v1373
      %v1463 = vadd.f32 %v1431, %v1376
      %v1464 = vadd.f32 %v1432, %v1379
      %v1465 = vadd.f32 %v1433, %v1382
      %v1466 = vadd.f32 %v1434, %v1385
      %v1467 = vadd.f32 %v1435, %v1388
      %v1468 = vadd.f32 %v1436, %v1391
      %v1469 = vadd.f32 %v1437, %v1394
      %v1470 = vadd.f32 %v1438, %v1397
      %v1471 = vadd.f32 %v1439, %v1400
      %v1472 = vadd.f32 %v1440, %v1403
      %v1473 = vadd.f32 %v1441, %v1406
      %v1474 = vadd.f32 %v1442, %v1409
      %1475 = vst [vmem:[#allocation2] sm:$0xff] %v1443
      %1476 = vst [vmem:[#allocation2 + $0x8] sm:$0xff] %v1444
      %1477 = vst [vmem:[#allocation2 + $0x10] sm:$0xff] %v1445
      %1478 = vst [vmem:[#allocation2 + $0x18] sm:$0xff] %v1446
      %1479 = vst [vmem:[#allocation2 + $0x20] sm:$0xff] %v1447
      %1480 = vst [vmem:[#allocation2 + $0x28] sm:$0xff] %v1448
      %1481 = vst [vmem:[#allocation2 + $0x30] sm:$0xff] %v1449
      %1482 = vst [vmem:[#allocation2 + $0x38] sm:$0xff] %v1450
      %1483 = vst [vmem:[#allocation2 + $0x40] sm:$0xff] %v1451
      %1484 = vst [vmem:[#allocation2 + $0x48] sm:$0xff] %v1452
      %1485 = vst [vmem:[#allocation2 + $0x50] sm:$0xff] %v1453
      %1486 = vst [vmem:[#allocation2 + $0x58] sm:$0xff] %v1454
      %1487 = vst [vmem:[#allocation2 + $0x60] sm:$0xff] %v1455
      %1488 = vst [vmem:[#allocation2 + $0x68] sm:$0xff] %v1456
      %1489 = vst [vmem:[#allocation2 + $0x70] sm:$0xff] %v1457
      %1490 = vst [vmem:[#allocation2 + $0x78] sm:$0xff] %v1458
      %1491 = vst [vmem:[#allocation2 + $0x80] sm:$0xff] %v1459
      %1492 = vst [vmem:[#allocation2 + $0x88] sm:$0xff] %v1460
      %1493 = vst [vmem:[#allocation2 + $0x90] sm:$0xff] %v1461
      %1494 = vst [vmem:[#allocation2 + $0x98] sm:$0xff] %v1462
      %1495 = vst [vmem:[#allocation2 + $0xa0] sm:$0xff] %v1463
      %1496 = vst [vmem:[#allocation2 + $0xa8] sm:$0xff] %v1464
      %1497 = vst [vmem:[#allocation2 + $0xb0] sm:$0xff] %v1465
      %1498 = vst [vmem:[#allocation2 + $0xb8] sm:$0xff] %v1466
      %1499 = vst [vmem:[#allocation2 + $0xc0] sm:$0xff] %v1467
      %1500 = vst [vmem:[#allocation2 + $0xc8] sm:$0xff] %v1468
      %1501 = vst [vmem:[#allocation2 + $0xd0] sm:$0xff] %v1469
      %1502 = vst [vmem:[#allocation2 + $0xd8] sm:$0xff] %v1470
      %1503 = vst [vmem:[#allocation2 + $0xe0] sm:$0xff] %v1471
      %1504 = vst [vmem:[#allocation2 + $0xe8] sm:$0xff] %v1472
      %1505 = vst [vmem:[#allocation2 + $0xf0] sm:$0xff] %v1473
      %1506 = vst [vmem:[#allocation2 + $0xf8] sm:$0xff] %v1474
      %v1507 = vld [vmem:[%s1164 + $0x1] sm:$0xff]
      %v1508 = vld [vmem:[%s1164 + $0x9] sm:$0xff]
      %v1509 = vld [vmem:[%s1164 + $0x19] sm:$0xff]
      %v1510 = vld [vmem:[%s1164 + $0x21] sm:$0xff]
      %v1511 = vld [vmem:[%s1164 + $0x31] sm:$0xff]
      %v1512 = vld [vmem:[%s1164 + $0x39] sm:$0xff]
      %v1513 = vld [vmem:[%s1164 + $0x49] sm:$0xff]
      %v1514 = vld [vmem:[%s1164 + $0x51] sm:$0xff]
      %v1515 = vld [vmem:[%s1164 + $0x61] sm:$0xff]
      %v1516 = vld [vmem:[%s1164 + $0x69] sm:$0xff]
      %v1517 = vld [vmem:[%s1164 + $0x79] sm:$0xff]
      %v1518 = vld [vmem:[%s1164 + $0x81] sm:$0xff]
      %v1519 = vld [vmem:[%s1164 + $0x91] sm:$0xff]
      %v1520 = vld [vmem:[%s1164 + $0x99] sm:$0xff]
      %v1521 = vld [vmem:[%s1164 + $0xa9] sm:$0xff]
      %v1522 = vld [vmem:[%s1164 + $0xb1] sm:$0xff]
      %v1523 = vld [vmem:[%s1164 + $0xc1] sm:$0xff]
      %v1524 = vld [vmem:[%s1164 + $0xc9] sm:$0xff]
      %v1525 = vld [vmem:[%s1164 + $0xd9] sm:$0xff]
      %v1526 = vld [vmem:[%s1164 + $0xe1] sm:$0xff]
      %v1527 = vld [vmem:[%s1164 + $0xf1] sm:$0xff]
      %v1528 = vld [vmem:[%s1164 + $0xf9] sm:$0xff]
      %v1529 = vld [vmem:[%s1164 + $0x109] sm:$0xff]
      %v1530 = vld [vmem:[%s1164 + $0x111] sm:$0xff]
      %v1531 = vld [vmem:[%s1164 + $0x121] sm:$0xff]
      %v1532 = vld [vmem:[%s1164 + $0x129] sm:$0xff]
      %v1533 = vld [vmem:[%s1164 + $0x139] sm:$0xff]
      %v1534 = vld [vmem:[%s1164 + $0x141] sm:$0xff]
      %v1535 = vld [vmem:[%s1164 + $0x151] sm:$0xff]
      %v1536 = vld [vmem:[%s1164 + $0x159] sm:$0xff]
      %v1537 = vld [vmem:[%s1164 + $0x169] sm:$0xff]
      %v1538 = vld [vmem:[%s1164 + $0x171] sm:$0xff]
      %s1539 = scalar_lea.vmem %s1, 16
      %v1540 = vld [vmem:[%s1539] sm:$0xf]
      %v1542 = vsel %vm232, %v1507, 0
      %v1545 = vsel %vm232, %v1508, 0
      %v1548 = vsel %vm232, %v1509, 0
      %v1551 = vsel %vm232, %v1510, 0
      %v1554 = vsel %vm232, %v1511, 0
      %v1557 = vsel %vm232, %v1512, 0
      %v1560 = vsel %vm232, %v1513, 0
      %v1563 = vsel %vm232, %v1514, 0
      %v1566 = vsel %vm232, %v1515, 0
      %v1569 = vsel %vm232, %v1516, 0
      %v1572 = vsel %vm232, %v1517, 0
      %v1575 = vsel %vm232, %v1518, 0
      %v1578 = vsel %vm232, %v1519, 0
      %v1581 = vsel %vm232, %v1520, 0
      %v1584 = vsel %vm232, %v1521, 0
      %v1587 = vsel %vm232, %v1522, 0
      %v1590 = vsel %vm232, %v1523, 0
      %v1593 = vsel %vm232, %v1524, 0
      %v1596 = vsel %vm232, %v1525, 0
      %v1599 = vsel %vm232, %v1526, 0
      %v1602 = vsel %vm232, %v1527, 0
      %v1605 = vsel %vm232, %v1528, 0
      %v1608 = vsel %vm232, %v1529, 0
      %v1611 = vsel %vm232, %v1530, 0
      %v1614 = vsel %vm232, %v1531, 0
      %v1617 = vsel %vm232, %v1532, 0
      %v1620 = vsel %vm232, %v1533, 0
      %v1623 = vsel %vm232, %v1534, 0
      %v1626 = vsel %vm232, %v1535, 0
      %v1629 = vsel %vm232, %v1536, 0
      %v1632 = vsel %vm232, %v1537, 0
      %v1635 = vsel %vm232, %v1538, 0
      %v1638 = vsel %vm329, %v1540, 0
      %1640 = vmatpush.msra.mxu0 0.0
      %1641 = vmatpush.msra.mxu0 0.0
      %1642 = vmatpush.msra.mxu0 0.0
      %1643 = vmatpush.msra.mxu0 0.0
      %1644 = vmatpush.msra.mxu0 0.0
      %1645 = vmatpush.msra.mxu0 0.0
      %1646 = vmatpush.msra.mxu0 0.0
      %1647 = vmatpush.msra.mxu0 0.0
      %1648 = vmatpush.msra.mxu0 0.0
      %1649 = vmatpush.msra.mxu0 0.0
      %1650 = vmatpush.msra.mxu0 0.0
      %1651 = vmatpush.msra.mxu0 0.0
      %1652 = vmatpush.msra.mxu0 0.0
      %1653 = vmatpush.msra.mxu0 0.0
      %1654 = vmatpush.msra.mxu0 0.0
      %1655 = vmatpush.msra.mxu0 %v1638
      %1656 = vmatmul.f32.gmra.mxu0 %v1542
      %v1657 = vpop.f32.mrf.mxu0
      %v1658 = vadd.f32 0.0, %v1657
      %1659 = vmatmul.f32.gmra.mxu0 %v1545
      %v1660 = vpop.f32.mrf.mxu0
      %v1661 = vadd.f32 0.0, %v1660
      %1662 = vmatmul.f32.gmra.mxu0 %v1548
      %v1663 = vpop.f32.mrf.mxu0
      %v1664 = vadd.f32 0.0, %v1663
      %1665 = vmatmul.f32.gmra.mxu0 %v1551
      %v1666 = vpop.f32.mrf.mxu0
      %v1667 = vadd.f32 0.0, %v1666
      %1668 = vmatmul.f32.gmra.mxu0 %v1554
      %v1669 = vpop.f32.mrf.mxu0
      %v1670 = vadd.f32 0.0, %v1669
      %1671 = vmatmul.f32.gmra.mxu0 %v1557
      %v1672 = vpop.f32.mrf.mxu0
      %v1673 = vadd.f32 0.0, %v1672
      %1674 = vmatmul.f32.gmra.mxu0 %v1560
      %v1675 = vpop.f32.mrf.mxu0
      %v1676 = vadd.f32 0.0, %v1675
      %1677 = vmatmul.f32.gmra.mxu0 %v1563
      %v1678 = vpop.f32.mrf.mxu0
      %v1679 = vadd.f32 0.0, %v1678
      %1680 = vmatmul.f32.gmra.mxu0 %v1566
      %v1681 = vpop.f32.mrf.mxu0
      %v1682 = vadd.f32 0.0, %v1681
      %1683 = vmatmul.f32.gmra.mxu0 %v1569
      %v1684 = vpop.f32.mrf.mxu0
      %v1685 = vadd.f32 0.0, %v1684
      %1686 = vmatmul.f32.gmra.mxu0 %v1572
      %v1687 = vpop.f32.mrf.mxu0
      %v1688 = vadd.f32 0.0, %v1687
      %1689 = vmatmul.f32.gmra.mxu0 %v1575
      %v1690 = vpop.f32.mrf.mxu0
      %v1691 = vadd.f32 0.0, %v1690
      %1692 = vmatmul.f32.gmra.mxu0 %v1578
      %v1693 = vpop.f32.mrf.mxu0
      %v1694 = vadd.f32 0.0, %v1693
      %1695 = vmatmul.f32.gmra.mxu0 %v1581
      %v1696 = vpop.f32.mrf.mxu0
      %v1697 = vadd.f32 0.0, %v1696
      %1698 = vmatmul.f32.gmra.mxu0 %v1584
      %v1699 = vpop.f32.mrf.mxu0
      %v1700 = vadd.f32 0.0, %v1699
      %1701 = vmatmul.f32.gmra.mxu0 %v1587
      %v1702 = vpop.f32.mrf.mxu0
      %v1703 = vadd.f32 0.0, %v1702
      %1704 = vmatmul.f32.gmra.mxu0 %v1590
      %v1705 = vpop.f32.mrf.mxu0
      %v1706 = vadd.f32 0.0, %v1705
      %1707 = vmatmul.f32.gmra.mxu0 %v1593
      %v1708 = vpop.f32.mrf.mxu0
      %v1709 = vadd.f32 0.0, %v1708
      %1710 = vmatmul.f32.gmra.mxu0 %v1596
      %v1711 = vpop.f32.mrf.mxu0
      %v1712 = vadd.f32 0.0, %v1711
      %1713 = vmatmul.f32.gmra.mxu0 %v1599
      %v1714 = vpop.f32.mrf.mxu0
      %v1715 = vadd.f32 0.0, %v1714
      %1716 = vmatmul.f32.gmra.mxu0 %v1602
      %v1717 = vpop.f32.mrf.mxu0
      %v1718 = vadd.f32 0.0, %v1717
      %1719 = vmatmul.f32.gmra.mxu0 %v1605
      %v1720 = vpop.f32.mrf.mxu0
      %v1721 = vadd.f32 0.0, %v1720
      %1722 = vmatmul.f32.gmra.mxu0 %v1608
      %v1723 = vpop.f32.mrf.mxu0
      %v1724 = vadd.f32 0.0, %v1723
      %1725 = vmatmul.f32.gmra.mxu0 %v1611
      %v1726 = vpop.f32.mrf.mxu0
      %v1727 = vadd.f32 0.0, %v1726
      %1728 = vmatmul.f32.gmra.mxu0 %v1614
      %v1729 = vpop.f32.mrf.mxu0
      %v1730 = vadd.f32 0.0, %v1729
      %1731 = vmatmul.f32.gmra.mxu0 %v1617
      %v1732 = vpop.f32.mrf.mxu0
      %v1733 = vadd.f32 0.0, %v1732
      %1734 = vmatmul.f32.gmra.mxu0 %v1620
      %v1735 = vpop.f32.mrf.mxu0
      %v1736 = vadd.f32 0.0, %v1735
      %1737 = vmatmul.f32.gmra.mxu0 %v1623
      %v1738 = vpop.f32.mrf.mxu0
      %v1739 = vadd.f32 0.0, %v1738
      %1740 = vmatmul.f32.gmra.mxu0 %v1626
      %v1741 = vpop.f32.mrf.mxu0
      %v1742 = vadd.f32 0.0, %v1741
      %1743 = vmatmul.f32.gmra.mxu0 %v1629
      %v1744 = vpop.f32.mrf.mxu0
      %v1745 = vadd.f32 0.0, %v1744
      %1746 = vmatmul.f32.gmra.mxu0 %v1632
      %v1747 = vpop.f32.mrf.mxu0
      %v1748 = vadd.f32 0.0, %v1747
      %1749 = vmatmul.f32.gmra.mxu0 %v1635
      %v1750 = vpop.f32.mrf.mxu0
      %v1751 = vadd.f32 0.0, %v1750
      %1752 = vdwg.mxu0
      %v1753 = vld [vmem:[#allocation2] sm:$0xff]
      %v1754 = vld [vmem:[#allocation2 + $0x8] sm:$0xff]
      %v1755 = vld [vmem:[#allocation2 + $0x10] sm:$0xff]
      %v1756 = vld [vmem:[#allocation2 + $0x18] sm:$0xff]
      %v1757 = vld [vmem:[#allocation2 + $0x20] sm:$0xff]
      %v1758 = vld [vmem:[#allocation2 + $0x28] sm:$0xff]
      %v1759 = vld [vmem:[#allocation2 + $0x30] sm:$0xff]
      %v1760 = vld [vmem:[#allocation2 + $0x38] sm:$0xff]
      %v1761 = vld [vmem:[#allocation2 + $0x40] sm:$0xff]
      %v1762 = vld [vmem:[#allocation2 + $0x48] sm:$0xff]
      %v1763 = vld [vmem:[#allocation2 + $0x50] sm:$0xff]
      %v1764 = vld [vmem:[#allocation2 + $0x58] sm:$0xff]
      %v1765 = vld [vmem:[#allocation2 + $0x60] sm:$0xff]
      %v1766 = vld [vmem:[#allocation2 + $0x68] sm:$0xff]
      %v1767 = vld [vmem:[#allocation2 + $0x70] sm:$0xff]
      %v1768 = vld [vmem:[#allocation2 + $0x78] sm:$0xff]
      %v1769 = vld [vmem:[#allocation2 + $0x80] sm:$0xff]
      %v1770 = vld [vmem:[#allocation2 + $0x88] sm:$0xff]
      %v1771 = vld [vmem:[#allocation2 + $0x90] sm:$0xff]
      %v1772 = vld [vmem:[#allocation2 + $0x98] sm:$0xff]
      %v1773 = vld [vmem:[#allocation2 + $0xa0] sm:$0xff]
      %v1774 = vld [vmem:[#allocation2 + $0xa8] sm:$0xff]
      %v1775 = vld [vmem:[#allocation2 + $0xb0] sm:$0xff]
      %v1776 = vld [vmem:[#allocation2 + $0xb8] sm:$0xff]
      %v1777 = vld [vmem:[#allocation2 + $0xc0] sm:$0xff]
      %v1778 = vld [vmem:[#allocation2 + $0xc8] sm:$0xff]
      %v1779 = vld [vmem:[#allocation2 + $0xd0] sm:$0xff]
      %v1780 = vld [vmem:[#allocation2 + $0xd8] sm:$0xff]
      %v1781 = vld [vmem:[#allocation2 + $0xe0] sm:$0xff]
      %v1782 = vld [vmem:[#allocation2 + $0xe8] sm:$0xff]
      %v1783 = vld [vmem:[#allocation2 + $0xf0] sm:$0xff]
      %v1784 = vld [vmem:[#allocation2 + $0xf8] sm:$0xff]
      %v1785 = vadd.f32 %v1753, %v1658
      %v1786 = vadd.f32 %v1754, %v1661
      %v1787 = vadd.f32 %v1755, %v1664
      %v1788 = vadd.f32 %v1756, %v1667
      %v1789 = vadd.f32 %v1757, %v1670
      %v1790 = vadd.f32 %v1758, %v1673
      %v1791 = vadd.f32 %v1759, %v1676
      %v1792 = vadd.f32 %v1760, %v1679
      %v1793 = vadd.f32 %v1761, %v1682
      %v1794 = vadd.f32 %v1762, %v1685
      %v1795 = vadd.f32 %v1763, %v1688
      %v1796 = vadd.f32 %v1764, %v1691
      %v1797 = vadd.f32 %v1765, %v1694
      %v1798 = vadd.f32 %v1766, %v1697
      %v1799 = vadd.f32 %v1767, %v1700
      %v1800 = vadd.f32 %v1768, %v1703
      %v1801 = vadd.f32 %v1769, %v1706
      %v1802 = vadd.f32 %v1770, %v1709
      %v1803 = vadd.f32 %v1771, %v1712
      %v1804 = vadd.f32 %v1772, %v1715
      %v1805 = vadd.f32 %v1773, %v1718
      %v1806 = vadd.f32 %v1774, %v1721
      %v1807 = vadd.f32 %v1775, %v1724
      %v1808 = vadd.f32 %v1776, %v1727
      %v1809 = vadd.f32 %v1777, %v1730
      %v1810 = vadd.f32 %v1778, %v1733
      %v1811 = vadd.f32 %v1779, %v1736
      %v1812 = vadd.f32 %v1780, %v1739
      %v1813 = vadd.f32 %v1781, %v1742
      %v1814 = vadd.f32 %v1782, %v1745
      %v1815 = vadd.f32 %v1783, %v1748
      %v1816 = vadd.f32 %v1784, %v1751
      %1817 = vst [vmem:[#allocation2] sm:$0xff] %v1785
      %1818 = vst [vmem:[#allocation2 + $0x8] sm:$0xff] %v1786
      %1819 = vst [vmem:[#allocation2 + $0x10] sm:$0xff] %v1787
      %1820 = vst [vmem:[#allocation2 + $0x18] sm:$0xff] %v1788
      %1821 = vst [vmem:[#allocation2 + $0x20] sm:$0xff] %v1789
      %1822 = vst [vmem:[#allocation2 + $0x28] sm:$0xff] %v1790
      %1823 = vst [vmem:[#allocation2 + $0x30] sm:$0xff] %v1791
      %1824 = vst [vmem:[#allocation2 + $0x38] sm:$0xff] %v1792
      %1825 = vst [vmem:[#allocation2 + $0x40] sm:$0xff] %v1793
      %1826 = vst [vmem:[#allocation2 + $0x48] sm:$0xff] %v1794
      %1827 = vst [vmem:[#allocation2 + $0x50] sm:$0xff] %v1795
      %1828 = vst [vmem:[#allocation2 + $0x58] sm:$0xff] %v1796
      %1829 = vst [vmem:[#allocation2 + $0x60] sm:$0xff] %v1797
      %1830 = vst [vmem:[#allocation2 + $0x68] sm:$0xff] %v1798
      %1831 = vst [vmem:[#allocation2 + $0x70] sm:$0xff] %v1799
      %1832 = vst [vmem:[#allocation2 + $0x78] sm:$0xff] %v1800
      %1833 = vst [vmem:[#allocation2 + $0x80] sm:$0xff] %v1801
      %1834 = vst [vmem:[#allocation2 + $0x88] sm:$0xff] %v1802
      %1835 = vst [vmem:[#allocation2 + $0x90] sm:$0xff] %v1803
      %1836 = vst [vmem:[#allocation2 + $0x98] sm:$0xff] %v1804
      %1837 = vst [vmem:[#allocation2 + $0xa0] sm:$0xff] %v1805
      %1838 = vst [vmem:[#allocation2 + $0xa8] sm:$0xff] %v1806
      %1839 = vst [vmem:[#allocation2 + $0xb0] sm:$0xff] %v1807
      %1840 = vst [vmem:[#allocation2 + $0xb8] sm:$0xff] %v1808
      %1841 = vst [vmem:[#allocation2 + $0xc0] sm:$0xff] %v1809
      %1842 = vst [vmem:[#allocation2 + $0xc8] sm:$0xff] %v1810
      %1843 = vst [vmem:[#allocation2 + $0xd0] sm:$0xff] %v1811
      %1844 = vst [vmem:[#allocation2 + $0xd8] sm:$0xff] %v1812
      %1845 = vst [vmem:[#allocation2 + $0xe0] sm:$0xff] %v1813
      %1846 = vst [vmem:[#allocation2 + $0xe8] sm:$0xff] %v1814
      %1847 = vst [vmem:[#allocation2 + $0xf0] sm:$0xff] %v1815
      %1848 = vst [vmem:[#allocation2 + $0xf8] sm:$0xff] %v1816
      %v1849 = vld [vmem:[%s1164 + $0x2] sm:$0xff]
      %v1850 = vld [vmem:[%s1164 + $0xa] sm:$0xff]
      %v1851 = vld [vmem:[%s1164 + $0x1a] sm:$0xff]
      %v1852 = vld [vmem:[%s1164 + $0x22] sm:$0xff]
      %v1853 = vld [vmem:[%s1164 + $0x32] sm:$0xff]
      %v1854 = vld [vmem:[%s1164 + $0x3a] sm:$0xff]
      %v1855 = vld [vmem:[%s1164 + $0x4a] sm:$0xff]
      %v1856 = vld [vmem:[%s1164 + $0x52] sm:$0xff]
      %v1857 = vld [vmem:[%s1164 + $0x62] sm:$0xff]
      %v1858 = vld [vmem:[%s1164 + $0x6a] sm:$0xff]
      %v1859 = vld [vmem:[%s1164 + $0x7a] sm:$0xff]
      %v1860 = vld [vmem:[%s1164 + $0x82] sm:$0xff]
      %v1861 = vld [vmem:[%s1164 + $0x92] sm:$0xff]
      %v1862 = vld [vmem:[%s1164 + $0x9a] sm:$0xff]
      %v1863 = vld [vmem:[%s1164 + $0xaa] sm:$0xff]
      %v1864 = vld [vmem:[%s1164 + $0xb2] sm:$0xff]
      %v1865 = vld [vmem:[%s1164 + $0xc2] sm:$0xff]
      %v1866 = vld [vmem:[%s1164 + $0xca] sm:$0xff]
      %v1867 = vld [vmem:[%s1164 + $0xda] sm:$0xff]
      %v1868 = vld [vmem:[%s1164 + $0xe2] sm:$0xff]
      %v1869 = vld [vmem:[%s1164 + $0xf2] sm:$0xff]
      %v1870 = vld [vmem:[%s1164 + $0xfa] sm:$0xff]
      %v1871 = vld [vmem:[%s1164 + $0x10a] sm:$0xff]
      %v1872 = vld [vmem:[%s1164 + $0x112] sm:$0xff]
      %v1873 = vld [vmem:[%s1164 + $0x122] sm:$0xff]
      %v1874 = vld [vmem:[%s1164 + $0x12a] sm:$0xff]
      %v1875 = vld [vmem:[%s1164 + $0x13a] sm:$0xff]
      %v1876 = vld [vmem:[%s1164 + $0x142] sm:$0xff]
      %v1877 = vld [vmem:[%s1164 + $0x152] sm:$0xff]
      %v1878 = vld [vmem:[%s1164 + $0x15a] sm:$0xff]
      %v1879 = vld [vmem:[%s1164 + $0x16a] sm:$0xff]
      %v1880 = vld [vmem:[%s1164 + $0x172] sm:$0xff]
      %s1881 = scalar_lea.vmem %s1, 20
      %v1882 = vld [vmem:[%s1881] sm:$0xf]
      %v1884 = vsel %vm232, %v1849, 0
      %v1887 = vsel %vm232, %v1850, 0
      %v1890 = vsel %vm232, %v1851, 0
      %v1893 = vsel %vm232, %v1852, 0
      %v1896 = vsel %vm232, %v1853, 0
      %v1899 = vsel %vm232, %v1854, 0
      %v1902 = vsel %vm232, %v1855, 0
      %v1905 = vsel %vm232, %v1856, 0
      %v1908 = vsel %vm232, %v1857, 0
      %v1911 = vsel %vm232, %v1858, 0
      %v1914 = vsel %vm232, %v1859, 0
      %v1917 = vsel %vm232, %v1860, 0
      %v1920 = vsel %vm232, %v1861, 0
      %v1923 = vsel %vm232, %v1862, 0
      %v1926 = vsel %vm232, %v1863, 0
      %v1929 = vsel %vm232, %v1864, 0
      %v1932 = vsel %vm232, %v1865, 0
      %v1935 = vsel %vm232, %v1866, 0
      %v1938 = vsel %vm232, %v1867, 0
      %v1941 = vsel %vm232, %v1868, 0
      %v1944 = vsel %vm232, %v1869, 0
      %v1947 = vsel %vm232, %v1870, 0
      %v1950 = vsel %vm232, %v1871, 0
      %v1953 = vsel %vm232, %v1872, 0
      %v1956 = vsel %vm232, %v1873, 0
      %v1959 = vsel %vm232, %v1874, 0
      %v1962 = vsel %vm232, %v1875, 0
      %v1965 = vsel %vm232, %v1876, 0
      %v1968 = vsel %vm232, %v1877, 0
      %v1971 = vsel %vm232, %v1878, 0
      %v1974 = vsel %vm232, %v1879, 0
      %v1977 = vsel %vm232, %v1880, 0
      %v1980 = vsel %vm329, %v1882, 0
      %1982 = vmatpush.msra.mxu0 0.0
      %1983 = vmatpush.msra.mxu0 0.0
      %1984 = vmatpush.msra.mxu0 0.0
      %1985 = vmatpush.msra.mxu0 0.0
      %1986 = vmatpush.msra.mxu0 0.0
      %1987 = vmatpush.msra.mxu0 0.0
      %1988 = vmatpush.msra.mxu0 0.0
      %1989 = vmatpush.msra.mxu0 0.0
      %1990 = vmatpush.msra.mxu0 0.0
      %1991 = vmatpush.msra.mxu0 0.0
      %1992 = vmatpush.msra.mxu0 0.0
      %1993 = vmatpush.msra.mxu0 0.0
      %1994 = vmatpush.msra.mxu0 0.0
      %1995 = vmatpush.msra.mxu0 0.0
      %1996 = vmatpush.msra.mxu0 0.0
      %1997 = vmatpush.msra.mxu0 %v1980
      %1998 = vmatmul.f32.gmra.mxu0 %v1884
      %v1999 = vpop.f32.mrf.mxu0
      %v2000 = vadd.f32 0.0, %v1999
      %2001 = vmatmul.f32.gmra.mxu0 %v1887
      %v2002 = vpop.f32.mrf.mxu0
      %v2003 = vadd.f32 0.0, %v2002
      %2004 = vmatmul.f32.gmra.mxu0 %v1890
      %v2005 = vpop.f32.mrf.mxu0
      %v2006 = vadd.f32 0.0, %v2005
      %2007 = vmatmul.f32.gmra.mxu0 %v1893
      %v2008 = vpop.f32.mrf.mxu0
      %v2009 = vadd.f32 0.0, %v2008
      %2010 = vmatmul.f32.gmra.mxu0 %v1896
      %v2011 = vpop.f32.mrf.mxu0
      %v2012 = vadd.f32 0.0, %v2011
      %2013 = vmatmul.f32.gmra.mxu0 %v1899
      %v2014 = vpop.f32.mrf.mxu0
      %v2015 = vadd.f32 0.0, %v2014
      %2016 = vmatmul.f32.gmra.mxu0 %v1902
      %v2017 = vpop.f32.mrf.mxu0
      %v2018 = vadd.f32 0.0, %v2017
      %2019 = vmatmul.f32.gmra.mxu0 %v1905
      %v2020 = vpop.f32.mrf.mxu0
      %v2021 = vadd.f32 0.0, %v2020
      %2022 = vmatmul.f32.gmra.mxu0 %v1908
      %v2023 = vpop.f32.mrf.mxu0
      %v2024 = vadd.f32 0.0, %v2023
      %2025 = vmatmul.f32.gmra.mxu0 %v1911
      %v2026 = vpop.f32.mrf.mxu0
      %v2027 = vadd.f32 0.0, %v2026
      %2028 = vmatmul.f32.gmra.mxu0 %v1914
      %v2029 = vpop.f32.mrf.mxu0
      %v2030 = vadd.f32 0.0, %v2029
      %2031 = vmatmul.f32.gmra.mxu0 %v1917
      %v2032 = vpop.f32.mrf.mxu0
      %v2033 = vadd.f32 0.0, %v2032
      %2034 = vmatmul.f32.gmra.mxu0 %v1920
      %v2035 = vpop.f32.mrf.mxu0
      %v2036 = vadd.f32 0.0, %v2035
      %2037 = vmatmul.f32.gmra.mxu0 %v1923
      %v2038 = vpop.f32.mrf.mxu0
      %v2039 = vadd.f32 0.0, %v2038
      %2040 = vmatmul.f32.gmra.mxu0 %v1926
      %v2041 = vpop.f32.mrf.mxu0
      %v2042 = vadd.f32 0.0, %v2041
      %2043 = vmatmul.f32.gmra.mxu0 %v1929
      %v2044 = vpop.f32.mrf.mxu0
      %v2045 = vadd.f32 0.0, %v2044
      %2046 = vmatmul.f32.gmra.mxu0 %v1932
      %v2047 = vpop.f32.mrf.mxu0
      %v2048 = vadd.f32 0.0, %v2047
      %2049 = vmatmul.f32.gmra.mxu0 %v1935
      %v2050 = vpop.f32.mrf.mxu0
      %v2051 = vadd.f32 0.0, %v2050
      %2052 = vmatmul.f32.gmra.mxu0 %v1938
      %v2053 = vpop.f32.mrf.mxu0
      %v2054 = vadd.f32 0.0, %v2053
      %2055 = vmatmul.f32.gmra.mxu0 %v1941
      %v2056 = vpop.f32.mrf.mxu0
      %v2057 = vadd.f32 0.0, %v2056
      %2058 = vmatmul.f32.gmra.mxu0 %v1944
      %v2059 = vpop.f32.mrf.mxu0
      %v2060 = vadd.f32 0.0, %v2059
      %2061 = vmatmul.f32.gmra.mxu0 %v1947
      %v2062 = vpop.f32.mrf.mxu0
      %v2063 = vadd.f32 0.0, %v2062
      %2064 = vmatmul.f32.gmra.mxu0 %v1950
      %v2065 = vpop.f32.mrf.mxu0
      %v2066 = vadd.f32 0.0, %v2065
      %2067 = vmatmul.f32.gmra.mxu0 %v1953
      %v2068 = vpop.f32.mrf.mxu0
      %v2069 = vadd.f32 0.0, %v2068
      %2070 = vmatmul.f32.gmra.mxu0 %v1956
      %v2071 = vpop.f32.mrf.mxu0
      %v2072 = vadd.f32 0.0, %v2071
      %2073 = vmatmul.f32.gmra.mxu0 %v1959
      %v2074 = vpop.f32.mrf.mxu0
      %v2075 = vadd.f32 0.0, %v2074
      %2076 = vmatmul.f32.gmra.mxu0 %v1962
      %v2077 = vpop.f32.mrf.mxu0
      %v2078 = vadd.f32 0.0, %v2077
      %2079 = vmatmul.f32.gmra.mxu0 %v1965
      %v2080 = vpop.f32.mrf.mxu0
      %v2081 = vadd.f32 0.0, %v2080
      %2082 = vmatmul.f32.gmra.mxu0 %v1968
      %v2083 = vpop.f32.mrf.mxu0
      %v2084 = vadd.f32 0.0, %v2083
      %2085 = vmatmul.f32.gmra.mxu0 %v1971
      %v2086 = vpop.f32.mrf.mxu0
      %v2087 = vadd.f32 0.0, %v2086
      %2088 = vmatmul.f32.gmra.mxu0 %v1974
      %v2089 = vpop.f32.mrf.mxu0
      %v2090 = vadd.f32 0.0, %v2089
      %2091 = vmatmul.f32.gmra.mxu0 %v1977
      %v2092 = vpop.f32.mrf.mxu0
      %v2093 = vadd.f32 0.0, %v2092
      %2094 = vdwg.mxu0
      %v2095 = vld [vmem:[#allocation2] sm:$0xff]
      %v2096 = vld [vmem:[#allocation2 + $0x8] sm:$0xff]
      %v2097 = vld [vmem:[#allocation2 + $0x10] sm:$0xff]
      %v2098 = vld [vmem:[#allocation2 + $0x18] sm:$0xff]
      %v2099 = vld [vmem:[#allocation2 + $0x20] sm:$0xff]
      %v2100 = vld [vmem:[#allocation2 + $0x28] sm:$0xff]
      %v2101 = vld [vmem:[#allocation2 + $0x30] sm:$0xff]
      %v2102 = vld [vmem:[#allocation2 + $0x38] sm:$0xff]
      %v2103 = vld [vmem:[#allocation2 + $0x40] sm:$0xff]
      %v2104 = vld [vmem:[#allocation2 + $0x48] sm:$0xff]
      %v2105 = vld [vmem:[#allocation2 + $0x50] sm:$0xff]
      %v2106 = vld [vmem:[#allocation2 + $0x58] sm:$0xff]
      %v2107 = vld [vmem:[#allocation2 + $0x60] sm:$0xff]
      %v2108 = vld [vmem:[#allocation2 + $0x68] sm:$0xff]
      %v2109 = vld [vmem:[#allocation2 + $0x70] sm:$0xff]
      %v2110 = vld [vmem:[#allocation2 + $0x78] sm:$0xff]
      %v2111 = vld [vmem:[#allocation2 + $0x80] sm:$0xff]
      %v2112 = vld [vmem:[#allocation2 + $0x88] sm:$0xff]
      %v2113 = vld [vmem:[#allocation2 + $0x90] sm:$0xff]
      %v2114 = vld [vmem:[#allocation2 + $0x98] sm:$0xff]
      %v2115 = vld [vmem:[#allocation2 + $0xa0] sm:$0xff]
      %v2116 = vld [vmem:[#allocation2 + $0xa8] sm:$0xff]
      %v2117 = vld [vmem:[#allocation2 + $0xb0] sm:$0xff]
      %v2118 = vld [vmem:[#allocation2 + $0xb8] sm:$0xff]
      %v2119 = vld [vmem:[#allocation2 + $0xc0] sm:$0xff]
      %v2120 = vld [vmem:[#allocation2 + $0xc8] sm:$0xff]
      %v2121 = vld [vmem:[#allocation2 + $0xd0] sm:$0xff]
      %v2122 = vld [vmem:[#allocation2 + $0xd8] sm:$0xff]
      %v2123 = vld [vmem:[#allocation2 + $0xe0] sm:$0xff]
      %v2124 = vld [vmem:[#allocation2 + $0xe8] sm:$0xff]
      %v2125 = vld [vmem:[#allocation2 + $0xf0] sm:$0xff]
      %v2126 = vld [vmem:[#allocation2 + $0xf8] sm:$0xff]
      %v2127 = vadd.f32 %v2095, %v2000
      %v2128 = vadd.f32 %v2096, %v2003
      %v2129 = vadd.f32 %v2097, %v2006
      %v2130 = vadd.f32 %v2098, %v2009
      %v2131 = vadd.f32 %v2099, %v2012
      %v2132 = vadd.f32 %v2100, %v2015
      %v2133 = vadd.f32 %v2101, %v2018
      %v2134 = vadd.f32 %v2102, %v2021
      %v2135 = vadd.f32 %v2103, %v2024
      %v2136 = vadd.f32 %v2104, %v2027
      %v2137 = vadd.f32 %v2105, %v2030
      %v2138 = vadd.f32 %v2106, %v2033
      %v2139 = vadd.f32 %v2107, %v2036
      %v2140 = vadd.f32 %v2108, %v2039
      %v2141 = vadd.f32 %v2109, %v2042
      %v2142 = vadd.f32 %v2110, %v2045
      %v2143 = vadd.f32 %v2111, %v2048
      %v2144 = vadd.f32 %v2112, %v2051
      %v2145 = vadd.f32 %v2113, %v2054
      %v2146 = vadd.f32 %v2114, %v2057
      %v2147 = vadd.f32 %v2115, %v2060
      %v2148 = vadd.f32 %v2116, %v2063
      %v2149 = vadd.f32 %v2117, %v2066
      %v2150 = vadd.f32 %v2118, %v2069
      %v2151 = vadd.f32 %v2119, %v2072
      %v2152 = vadd.f32 %v2120, %v2075
      %v2153 = vadd.f32 %v2121, %v2078
      %v2154 = vadd.f32 %v2122, %v2081
      %v2155 = vadd.f32 %v2123, %v2084
      %v2156 = vadd.f32 %v2124, %v2087
      %v2157 = vadd.f32 %v2125, %v2090
      %v2158 = vadd.f32 %v2126, %v2093
      %2159 = vst [vmem:[#allocation2] sm:$0xff] %v2127
      %2160 = vst [vmem:[#allocation2 + $0x8] sm:$0xff] %v2128
      %2161 = vst [vmem:[#allocation2 + $0x10] sm:$0xff] %v2129
      %2162 = vst [vmem:[#allocation2 + $0x18] sm:$0xff] %v2130
      %2163 = vst [vmem:[#allocation2 + $0x20] sm:$0xff] %v2131
      %2164 = vst [vmem:[#allocation2 + $0x28] sm:$0xff] %v2132
      %2165 = vst [vmem:[#allocation2 + $0x30] sm:$0xff] %v2133
      %2166 = vst [vmem:[#allocation2 + $0x38] sm:$0xff] %v2134
      %2167 = vst [vmem:[#allocation2 + $0x40] sm:$0xff] %v2135
      %2168 = vst [vmem:[#allocation2 + $0x48] sm:$0xff] %v2136
      %2169 = vst [vmem:[#allocation2 + $0x50] sm:$0xff] %v2137
      %2170 = vst [vmem:[#allocation2 + $0x58] sm:$0xff] %v2138
      %2171 = vst [vmem:[#allocation2 + $0x60] sm:$0xff] %v2139
      %2172 = vst [vmem:[#allocation2 + $0x68] sm:$0xff] %v2140
      %2173 = vst [vmem:[#allocation2 + $0x70] sm:$0xff] %v2141
      %2174 = vst [vmem:[#allocation2 + $0x78] sm:$0xff] %v2142
      %2175 = vst [vmem:[#allocation2 + $0x80] sm:$0xff] %v2143
      %2176 = vst [vmem:[#allocation2 + $0x88] sm:$0xff] %v2144
      %2177 = vst [vmem:[#allocation2 + $0x90] sm:$0xff] %v2145
      %2178 = vst [vmem:[#allocation2 + $0x98] sm:$0xff] %v2146
      %2179 = vst [vmem:[#allocation2 + $0xa0] sm:$0xff] %v2147
      %2180 = vst [vmem:[#allocation2 + $0xa8] sm:$0xff] %v2148
      %2181 = vst [vmem:[#allocation2 + $0xb0] sm:$0xff] %v2149
      %2182 = vst [vmem:[#allocation2 + $0xb8] sm:$0xff] %v2150
      %2183 = vst [vmem:[#allocation2 + $0xc0] sm:$0xff] %v2151
      %2184 = vst [vmem:[#allocation2 + $0xc8] sm:$0xff] %v2152
      %2185 = vst [vmem:[#allocation2 + $0xd0] sm:$0xff] %v2153
      %2186 = vst [vmem:[#allocation2 + $0xd8] sm:$0xff] %v2154
      %2187 = vst [vmem:[#allocation2 + $0xe0] sm:$0xff] %v2155
      %2188 = vst [vmem:[#allocation2 + $0xe8] sm:$0xff] %v2156
      %2189 = vst [vmem:[#allocation2 + $0xf0] sm:$0xff] %v2157
      %2190 = vst [vmem:[#allocation2 + $0xf8] sm:$0xff] %v2158
      %s2191 = sadd.s32 %s196, 2
      %s2192 = smul.u32 %s2191, 24
      %s2193 = scalar_lea.vmem %s184, %s2192
      %v2194 = vld [vmem:[%s2193] sm:$0xff]
      %v2195 = vld [vmem:[%s2193 + $0x8] sm:$0xff]
      %v2196 = vld [vmem:[%s2193 + $0x18] sm:$0xff]
      %v2197 = vld [vmem:[%s2193 + $0x20] sm:$0xff]
      %v2198 = vld [vmem:[%s2193 + $0x30] sm:$0xff]
      %v2199 = vld [vmem:[%s2193 + $0x38] sm:$0xff]
      %v2200 = vld [vmem:[%s2193 + $0x48] sm:$0xff]
      %v2201 = vld [vmem:[%s2193 + $0x50] sm:$0xff]
      %v2202 = vld [vmem:[%s2193 + $0x60] sm:$0xff]
      %v2203 = vld [vmem:[%s2193 + $0x68] sm:$0xff]
      %v2204 = vld [vmem:[%s2193 + $0x78] sm:$0xff]
      %v2205 = vld [vmem:[%s2193 + $0x80] sm:$0xff]
      %v2206 = vld [vmem:[%s2193 + $0x90] sm:$0xff]
      %v2207 = vld [vmem:[%s2193 + $0x98] sm:$0xff]
      %v2208 = vld [vmem:[%s2193 + $0xa8] sm:$0xff]
      %v2209 = vld [vmem:[%s2193 + $0xb0] sm:$0xff]
      %v2210 = vld [vmem:[%s2193 + $0xc0] sm:$0xff]
      %v2211 = vld [vmem:[%s2193 + $0xc8] sm:$0xff]
      %v2212 = vld [vmem:[%s2193 + $0xd8] sm:$0xff]
      %v2213 = vld [vmem:[%s2193 + $0xe0] sm:$0xff]
      %v2214 = vld [vmem:[%s2193 + $0xf0] sm:$0xff]
      %v2215 = vld [vmem:[%s2193 + $0xf8] sm:$0xff]
      %v2216 = vld [vmem:[%s2193 + $0x108] sm:$0xff]
      %v2217 = vld [vmem:[%s2193 + $0x110] sm:$0xff]
      %v2218 = vld [vmem:[%s2193 + $0x120] sm:$0xff]
      %v2219 = vld [vmem:[%s2193 + $0x128] sm:$0xff]
      %v2220 = vld [vmem:[%s2193 + $0x138] sm:$0xff]
      %v2221 = vld [vmem:[%s2193 + $0x140] sm:$0xff]
      %v2222 = vld [vmem:[%s2193 + $0x150] sm:$0xff]
      %v2223 = vld [vmem:[%s2193 + $0x158] sm:$0xff]
      %v2224 = vld [vmem:[%s2193 + $0x168] sm:$0xff]
      %v2225 = vld [vmem:[%s2193 + $0x170] sm:$0xff]
      %s2226 = scalar_lea.vmem %s1, 24
      %v2227 = vld [vmem:[%s2226] sm:$0xf]
      %v2229 = vsel %vm232, %v2194, 0
      %v2232 = vsel %vm232, %v2195, 0
      %v2235 = vsel %vm232, %v2196, 0
      %v2238 = vsel %vm232, %v2197, 0
      %v2241 = vsel %vm232, %v2198, 0
      %v2244 = vsel %vm232, %v2199, 0
      %v2247 = vsel %vm232, %v2200, 0
      %v2250 = vsel %vm232, %v2201, 0
      %v2253 = vsel %vm232, %v2202, 0
      %v2256 = vsel %vm232, %v2203, 0
      %v2259 = vsel %vm232, %v2204, 0
      %v2262 = vsel %vm232, %v2205, 0
      %v2265 = vsel %vm232, %v2206, 0
      %v2268 = vsel %vm232, %v2207, 0
      %v2271 = vsel %vm232, %v2208, 0
      %v2274 = vsel %vm232, %v2209, 0
      %v2277 = vsel %vm232, %v2210, 0
      %v2280 = vsel %vm232, %v2211, 0
      %v2283 = vsel %vm232, %v2212, 0
      %v2286 = vsel %vm232, %v2213, 0
      %v2289 = vsel %vm232, %v2214, 0
      %v2292 = vsel %vm232, %v2215, 0
      %v2295 = vsel %vm232, %v2216, 0
      %v2298 = vsel %vm232, %v2217, 0
      %v2301 = vsel %vm232, %v2218, 0
      %v2304 = vsel %vm232, %v2219, 0
      %v2307 = vsel %vm232, %v2220, 0
      %v2310 = vsel %vm232, %v2221, 0
      %v2313 = vsel %vm232, %v2222, 0
      %v2316 = vsel %vm232, %v2223, 0
      %v2319 = vsel %vm232, %v2224, 0
      %v2322 = vsel %vm232, %v2225, 0
      %v2325 = vsel %vm329, %v2227, 0
      %2327 = vmatpush.msra.mxu0 0.0
      %2328 = vmatpush.msra.mxu0 0.0
      %2329 = vmatpush.msra.mxu0 0.0
      %2330 = vmatpush.msra.mxu0 0.0
      %2331 = vmatpush.msra.mxu0 0.0
      %2332 = vmatpush.msra.mxu0 0.0
      %2333 = vmatpush.msra.mxu0 0.0
      %2334 = vmatpush.msra.mxu0 0.0
      %2335 = vmatpush.msra.mxu0 0.0
      %2336 = vmatpush.msra.mxu0 0.0
      %2337 = vmatpush.msra.mxu0 0.0
      %2338 = vmatpush.msra.mxu0 0.0
      %2339 = vmatpush.msra.mxu0 0.0
      %2340 = vmatpush.msra.mxu0 0.0
      %2341 = vmatpush.msra.mxu0 0.0
      %2342 = vmatpush.msra.mxu0 %v2325
      %2343 = vmatmul.f32.gmra.mxu0 %v2229
      %v2344 = vpop.f32.mrf.mxu0
      %v2345 = vadd.f32 0.0, %v2344
      %2346 = vmatmul.f32.gmra.mxu0 %v2232
      %v2347 = vpop.f32.mrf.mxu0
      %v2348 = vadd.f32 0.0, %v2347
      %2349 = vmatmul.f32.gmra.mxu0 %v2235
      %v2350 = vpop.f32.mrf.mxu0
      %v2351 = vadd.f32 0.0, %v2350
      %2352 = vmatmul.f32.gmra.mxu0 %v2238
      %v2353 = vpop.f32.mrf.mxu0
      %v2354 = vadd.f32 0.0, %v2353
      %2355 = vmatmul.f32.gmra.mxu0 %v2241
      %v2356 = vpop.f32.mrf.mxu0
      %v2357 = vadd.f32 0.0, %v2356
      %2358 = vmatmul.f32.gmra.mxu0 %v2244
      %v2359 = vpop.f32.mrf.mxu0
      %v2360 = vadd.f32 0.0, %v2359
      %2361 = vmatmul.f32.gmra.mxu0 %v2247
      %v2362 = vpop.f32.mrf.mxu0
      %v2363 = vadd.f32 0.0, %v2362
      %2364 = vmatmul.f32.gmra.mxu0 %v2250
      %v2365 = vpop.f32.mrf.mxu0
      %v2366 = vadd.f32 0.0, %v2365
      %2367 = vmatmul.f32.gmra.mxu0 %v2253
      %v2368 = vpop.f32.mrf.mxu0
      %v2369 = vadd.f32 0.0, %v2368
      %2370 = vmatmul.f32.gmra.mxu0 %v2256
      %v2371 = vpop.f32.mrf.mxu0
      %v2372 = vadd.f32 0.0, %v2371
      %2373 = vmatmul.f32.gmra.mxu0 %v2259
      %v2374 = vpop.f32.mrf.mxu0
      %v2375 = vadd.f32 0.0, %v2374
      %2376 = vmatmul.f32.gmra.mxu0 %v2262
      %v2377 = vpop.f32.mrf.mxu0
      %v2378 = vadd.f32 0.0, %v2377
      %2379 = vmatmul.f32.gmra.mxu0 %v2265
      %v2380 = vpop.f32.mrf.mxu0
      %v2381 = vadd.f32 0.0, %v2380
      %2382 = vmatmul.f32.gmra.mxu0 %v2268
      %v2383 = vpop.f32.mrf.mxu0
      %v2384 = vadd.f32 0.0, %v2383
      %2385 = vmatmul.f32.gmra.mxu0 %v2271
      %v2386 = vpop.f32.mrf.mxu0
      %v2387 = vadd.f32 0.0, %v2386
      %2388 = vmatmul.f32.gmra.mxu0 %v2274
      %v2389 = vpop.f32.mrf.mxu0
      %v2390 = vadd.f32 0.0, %v2389
      %2391 = vmatmul.f32.gmra.mxu0 %v2277
      %v2392 = vpop.f32.mrf.mxu0
      %v2393 = vadd.f32 0.0, %v2392
      %2394 = vmatmul.f32.gmra.mxu0 %v2280
      %v2395 = vpop.f32.mrf.mxu0
      %v2396 = vadd.f32 0.0, %v2395
      %2397 = vmatmul.f32.gmra.mxu0 %v2283
      %v2398 = vpop.f32.mrf.mxu0
      %v2399 = vadd.f32 0.0, %v2398
      %2400 = vmatmul.f32.gmra.mxu0 %v2286
      %v2401 = vpop.f32.mrf.mxu0
      %v2402 = vadd.f32 0.0, %v2401
      %2403 = vmatmul.f32.gmra.mxu0 %v2289
      %v2404 = vpop.f32.mrf.mxu0
      %v2405 = vadd.f32 0.0, %v2404
      %2406 = vmatmul.f32.gmra.mxu0 %v2292
      %v2407 = vpop.f32.mrf.mxu0
      %v2408 = vadd.f32 0.0, %v2407
      %2409 = vmatmul.f32.gmra.mxu0 %v2295
      %v2410 = vpop.f32.mrf.mxu0
      %v2411 = vadd.f32 0.0, %v2410
      %2412 = vmatmul.f32.gmra.mxu0 %v2298
      %v2413 = vpop.f32.mrf.mxu0
      %v2414 = vadd.f32 0.0, %v2413
      %2415 = vmatmul.f32.gmra.mxu0 %v2301
      %v2416 = vpop.f32.mrf.mxu0
      %v2417 = vadd.f32 0.0, %v2416
      %2418 = vmatmul.f32.gmra.mxu0 %v2304
      %v2419 = vpop.f32.mrf.mxu0
      %v2420 = vadd.f32 0.0, %v2419
      %2421 = vmatmul.f32.gmra.mxu0 %v2307
      %v2422 = vpop.f32.mrf.mxu0
      %v2423 = vadd.f32 0.0, %v2422
      %2424 = vmatmul.f32.gmra.mxu0 %v2310
      %v2425 = vpop.f32.mrf.mxu0
      %v2426 = vadd.f32 0.0, %v2425
      %2427 = vmatmul.f32.gmra.mxu0 %v2313
      %v2428 = vpop.f32.mrf.mxu0
      %v2429 = vadd.f32 0.0, %v2428
      %2430 = vmatmul.f32.gmra.mxu0 %v2316
      %v2431 = vpop.f32.mrf.mxu0
      %v2432 = vadd.f32 0.0, %v2431
      %2433 = vmatmul.f32.gmra.mxu0 %v2319
      %v2434 = vpop.f32.mrf.mxu0
      %v2435 = vadd.f32 0.0, %v2434
      %2436 = vmatmul.f32.gmra.mxu0 %v2322
      %v2437 = vpop.f32.mrf.mxu0
      %v2438 = vadd.f32 0.0, %v2437
      %2439 = vdwg.mxu0
      %v2440 = vld [vmem:[#allocation2] sm:$0xff]
      %v2441 = vld [vmem:[#allocation2 + $0x8] sm:$0xff]
      %v2442 = vld [vmem:[#allocation2 + $0x10] sm:$0xff]
      %v2443 = vld [vmem:[#allocation2 + $0x18] sm:$0xff]
      %v2444 = vld [vmem:[#allocation2 + $0x20] sm:$0xff]
      %v2445 = vld [vmem:[#allocation2 + $0x28] sm:$0xff]
      %v2446 = vld [vmem:[#allocation2 + $0x30] sm:$0xff]
      %v2447 = vld [vmem:[#allocation2 + $0x38] sm:$0xff]
      %v2448 = vld [vmem:[#allocation2 + $0x40] sm:$0xff]
      %v2449 = vld [vmem:[#allocation2 + $0x48] sm:$0xff]
      %v2450 = vld [vmem:[#allocation2 + $0x50] sm:$0xff]
      %v2451 = vld [vmem:[#allocation2 + $0x58] sm:$0xff]
      %v2452 = vld [vmem:[#allocation2 + $0x60] sm:$0xff]
      %v2453 = vld [vmem:[#allocation2 + $0x68] sm:$0xff]
      %v2454 = vld [vmem:[#allocation2 + $0x70] sm:$0xff]
      %v2455 = vld [vmem:[#allocation2 + $0x78] sm:$0xff]
      %v2456 = vld [vmem:[#allocation2 + $0x80] sm:$0xff]
      %v2457 = vld [vmem:[#allocation2 + $0x88] sm:$0xff]
      %v2458 = vld [vmem:[#allocation2 + $0x90] sm:$0xff]
      %v2459 = vld [vmem:[#allocation2 + $0x98] sm:$0xff]
      %v2460 = vld [vmem:[#allocation2 + $0xa0] sm:$0xff]
      %v2461 = vld [vmem:[#allocation2 + $0xa8] sm:$0xff]
      %v2462 = vld [vmem:[#allocation2 + $0xb0] sm:$0xff]
      %v2463 = vld [vmem:[#allocation2 + $0xb8] sm:$0xff]
      %v2464 = vld [vmem:[#allocation2 + $0xc0] sm:$0xff]
      %v2465 = vld [vmem:[#allocation2 + $0xc8] sm:$0xff]
      %v2466 = vld [vmem:[#allocation2 + $0xd0] sm:$0xff]
      %v2467 = vld [vmem:[#allocation2 + $0xd8] sm:$0xff]
      %v2468 = vld [vmem:[#allocation2 + $0xe0] sm:$0xff]
      %v2469 = vld [vmem:[#allocation2 + $0xe8] sm:$0xff]
      %v2470 = vld [vmem:[#allocation2 + $0xf0] sm:$0xff]
      %v2471 = vld [vmem:[#allocation2 + $0xf8] sm:$0xff]
      %v2472 = vadd.f32 %v2440, %v2345
      %v2473 = vadd.f32 %v2441, %v2348
      %v2474 = vadd.f32 %v2442, %v2351
      %v2475 = vadd.f32 %v2443, %v2354
      %v2476 = vadd.f32 %v2444, %v2357
      %v2477 = vadd.f32 %v2445, %v2360
      %v2478 = vadd.f32 %v2446, %v2363
      %v2479 = vadd.f32 %v2447, %v2366
      %v2480 = vadd.f32 %v2448, %v2369
      %v2481 = vadd.f32 %v2449, %v2372
      %v2482 = vadd.f32 %v2450, %v2375
      %v2483 = vadd.f32 %v2451, %v2378
      %v2484 = vadd.f32 %v2452, %v2381
      %v2485 = vadd.f32 %v2453, %v2384
      %v2486 = vadd.f32 %v2454, %v2387
      %v2487 = vadd.f32 %v2455, %v2390
      %v2488 = vadd.f32 %v2456, %v2393
      %v2489 = vadd.f32 %v2457, %v2396
      %v2490 = vadd.f32 %v2458, %v2399
      %v2491 = vadd.f32 %v2459, %v2402
      %v2492 = vadd.f32 %v2460, %v2405
      %v2493 = vadd.f32 %v2461, %v2408
      %v2494 = vadd.f32 %v2462, %v2411
      %v2495 = vadd.f32 %v2463, %v2414
      %v2496 = vadd.f32 %v2464, %v2417
      %v2497 = vadd.f32 %v2465, %v2420
      %v2498 = vadd.f32 %v2466, %v2423
      %v2499 = vadd.f32 %v2467, %v2426
      %v2500 = vadd.f32 %v2468, %v2429
      %v2501 = vadd.f32 %v2469, %v2432
      %v2502 = vadd.f32 %v2470, %v2435
      %v2503 = vadd.f32 %v2471, %v2438
      %2504 = vst [vmem:[#allocation2] sm:$0xff] %v2472
      %2505 = vst [vmem:[#allocation2 + $0x8] sm:$0xff] %v2473
      %2506 = vst [vmem:[#allocation2 + $0x10] sm:$0xff] %v2474
      %2507 = vst [vmem:[#allocation2 + $0x18] sm:$0xff] %v2475
      %2508 = vst [vmem:[#allocation2 + $0x20] sm:$0xff] %v2476
      %2509 = vst [vmem:[#allocation2 + $0x28] sm:$0xff] %v2477
      %2510 = vst [vmem:[#allocation2 + $0x30] sm:$0xff] %v2478
      %2511 = vst [vmem:[#allocation2 + $0x38] sm:$0xff] %v2479
      %2512 = vst [vmem:[#allocation2 + $0x40] sm:$0xff] %v2480
      %2513 = vst [vmem:[#allocation2 + $0x48] sm:$0xff] %v2481
      %2514 = vst [vmem:[#allocation2 + $0x50] sm:$0xff] %v2482
      %2515 = vst [vmem:[#allocation2 + $0x58] sm:$0xff] %v2483
      %2516 = vst [vmem:[#allocation2 + $0x60] sm:$0xff] %v2484
      %2517 = vst [vmem:[#allocation2 + $0x68] sm:$0xff] %v2485
      %2518 = vst [vmem:[#allocation2 + $0x70] sm:$0xff] %v2486
      %2519 = vst [vmem:[#allocation2 + $0x78] sm:$0xff] %v2487
      %2520 = vst [vmem:[#allocation2 + $0x80] sm:$0xff] %v2488
      %2521 = vst [vmem:[#allocation2 + $0x88] sm:$0xff] %v2489
      %2522 = vst [vmem:[#allocation2 + $0x90] sm:$0xff] %v2490
      %2523 = vst [vmem:[#allocation2 + $0x98] sm:$0xff] %v2491
      %2524 = vst [vmem:[#allocation2 + $0xa0] sm:$0xff] %v2492
      %2525 = vst [vmem:[#allocation2 + $0xa8] sm:$0xff] %v2493
      %2526 = vst [vmem:[#allocation2 + $0xb0] sm:$0xff] %v2494
      %2527 = vst [vmem:[#allocation2 + $0xb8] sm:$0xff] %v2495
      %2528 = vst [vmem:[#allocation2 + $0xc0] sm:$0xff] %v2496
      %2529 = vst [vmem:[#allocation2 + $0xc8] sm:$0xff] %v2497
      %2530 = vst [vmem:[#allocation2 + $0xd0] sm:$0xff] %v2498
      %2531 = vst [vmem:[#allocation2 + $0xd8] sm:$0xff] %v2499
      %2532 = vst [vmem:[#allocation2 + $0xe0] sm:$0xff] %v2500
      %2533 = vst [vmem:[#allocation2 + $0xe8] sm:$0xff] %v2501
      %2534 = vst [vmem:[#allocation2 + $0xf0] sm:$0xff] %v2502
      %2535 = vst [vmem:[#allocation2 + $0xf8] sm:$0xff] %v2503
      %v2536 = vld [vmem:[%s2193 + $0x1] sm:$0xff]
      %v2537 = vld [vmem:[%s2193 + $0x9] sm:$0xff]
      %v2538 = vld [vmem:[%s2193 + $0x19] sm:$0xff]
      %v2539 = vld [vmem:[%s2193 + $0x21] sm:$0xff]
      %v2540 = vld [vmem:[%s2193 + $0x31] sm:$0xff]
      %v2541 = vld [vmem:[%s2193 + $0x39] sm:$0xff]
      %v2542 = vld [vmem:[%s2193 + $0x49] sm:$0xff]
      %v2543 = vld [vmem:[%s2193 + $0x51] sm:$0xff]
      %v2544 = vld [vmem:[%s2193 + $0x61] sm:$0xff]
      %v2545 = vld [vmem:[%s2193 + $0x69] sm:$0xff]
      %v2546 = vld [vmem:[%s2193 + $0x79] sm:$0xff]
      %v2547 = vld [vmem:[%s2193 + $0x81] sm:$0xff]
      %v2548 = vld [vmem:[%s2193 + $0x91] sm:$0xff]
      %v2549 = vld [vmem:[%s2193 + $0x99] sm:$0xff]
      %v2550 = vld [vmem:[%s2193 + $0xa9] sm:$0xff]
      %v2551 = vld [vmem:[%s2193 + $0xb1] sm:$0xff]
      %v2552 = vld [vmem:[%s2193 + $0xc1] sm:$0xff]
      %v2553 = vld [vmem:[%s2193 + $0xc9] sm:$0xff]
      %v2554 = vld [vmem:[%s2193 + $0xd9] sm:$0xff]
      %v2555 = vld [vmem:[%s2193 + $0xe1] sm:$0xff]
      %v2556 = vld [vmem:[%s2193 + $0xf1] sm:$0xff]
      %v2557 = vld [vmem:[%s2193 + $0xf9] sm:$0xff]
      %v2558 = vld [vmem:[%s2193 + $0x109] sm:$0xff]
      %v2559 = vld [vmem:[%s2193 + $0x111] sm:$0xff]
      %v2560 = vld [vmem:[%s2193 + $0x121] sm:$0xff]
      %v2561 = vld [vmem:[%s2193 + $0x129] sm:$0xff]
      %v2562 = vld [vmem:[%s2193 + $0x139] sm:$0xff]
      %v2563 = vld [vmem:[%s2193 + $0x141] sm:$0xff]
      %v2564 = vld [vmem:[%s2193 + $0x151] sm:$0xff]
      %v2565 = vld [vmem:[%s2193 + $0x159] sm:$0xff]
      %v2566 = vld [vmem:[%s2193 + $0x169] sm:$0xff]
      %v2567 = vld [vmem:[%s2193 + $0x171] sm:$0xff]
      %s2568 = scalar_lea.vmem %s1, 28
      %v2569 = vld [vmem:[%s2568] sm:$0xf]
      %v2571 = vsel %vm232, %v2536, 0
      %v2574 = vsel %vm232, %v2537, 0
      %v2577 = vsel %vm232, %v2538, 0
      %v2580 = vsel %vm232, %v2539, 0
      %v2583 = vsel %vm232, %v2540, 0
      %v2586 = vsel %vm232, %v2541, 0
      %v2589 = vsel %vm232, %v2542, 0
      %v2592 = vsel %vm232, %v2543, 0
      %v2595 = vsel %vm232, %v2544, 0
      %v2598 = vsel %vm232, %v2545, 0
      %v2601 = vsel %vm232, %v2546, 0
      %v2604 = vsel %vm232, %v2547, 0
      %v2607 = vsel %vm232, %v2548, 0
      %v2610 = vsel %vm232, %v2549, 0
      %v2613 = vsel %vm232, %v2550, 0
      %v2616 = vsel %vm232, %v2551, 0
      %v2619 = vsel %vm232, %v2552, 0
      %v2622 = vsel %vm232, %v2553, 0
      %v2625 = vsel %vm232, %v2554, 0
      %v2628 = vsel %vm232, %v2555, 0
      %v2631 = vsel %vm232, %v2556, 0
      %v2634 = vsel %vm232, %v2557, 0
      %v2637 = vsel %vm232, %v2558, 0
      %v2640 = vsel %vm232, %v2559, 0
      %v2643 = vsel %vm232, %v2560, 0
      %v2646 = vsel %vm232, %v2561, 0
      %v2649 = vsel %vm232, %v2562, 0
      %v2652 = vsel %vm232, %v2563, 0
      %v2655 = vsel %vm232, %v2564, 0
      %v2658 = vsel %vm232, %v2565, 0
      %v2661 = vsel %vm232, %v2566, 0
      %v2664 = vsel %vm232, %v2567, 0
      %v2667 = vsel %vm329, %v2569, 0
      %2669 = vmatpush.msra.mxu0 0.0
      %2670 = vmatpush.msra.mxu0 0.0
      %2671 = vmatpush.msra.mxu0 0.0
      %2672 = vmatpush.msra.mxu0 0.0
      %2673 = vmatpush.msra.mxu0 0.0
      %2674 = vmatpush.msra.mxu0 0.0
      %2675 = vmatpush.msra.mxu0 0.0
      %2676 = vmatpush.msra.mxu0 0.0
      %2677 = vmatpush.msra.mxu0 0.0
      %2678 = vmatpush.msra.mxu0 0.0
      %2679 = vmatpush.msra.mxu0 0.0
      %2680 = vmatpush.msra.mxu0 0.0
      %2681 = vmatpush.msra.mxu0 0.0
      %2682 = vmatpush.msra.mxu0 0.0
      %2683 = vmatpush.msra.mxu0 0.0
      %2684 = vmatpush.msra.mxu0 %v2667
      %2685 = vmatmul.f32.gmra.mxu0 %v2571
      %v2686 = vpop.f32.mrf.mxu0
      %v2687 = vadd.f32 0.0, %v2686
      %2688 = vmatmul.f32.gmra.mxu0 %v2574
      %v2689 = vpop.f32.mrf.mxu0
      %v2690 = vadd.f32 0.0, %v2689
      %2691 = vmatmul.f32.gmra.mxu0 %v2577
      %v2692 = vpop.f32.mrf.mxu0
      %v2693 = vadd.f32 0.0, %v2692
      %2694 = vmatmul.f32.gmra.mxu0 %v2580
      %v2695 = vpop.f32.mrf.mxu0
      %v2696 = vadd.f32 0.0, %v2695
      %2697 = vmatmul.f32.gmra.mxu0 %v2583
      %v2698 = vpop.f32.mrf.mxu0
      %v2699 = vadd.f32 0.0, %v2698
      %2700 = vmatmul.f32.gmra.mxu0 %v2586
      %v2701 = vpop.f32.mrf.mxu0
      %v2702 = vadd.f32 0.0, %v2701
      %2703 = vmatmul.f32.gmra.mxu0 %v2589
      %v2704 = vpop.f32.mrf.mxu0
      %v2705 = vadd.f32 0.0, %v2704
      %2706 = vmatmul.f32.gmra.mxu0 %v2592
      %v2707 = vpop.f32.mrf.mxu0
      %v2708 = vadd.f32 0.0, %v2707
      %2709 = vmatmul.f32.gmra.mxu0 %v2595
      %v2710 = vpop.f32.mrf.mxu0
      %v2711 = vadd.f32 0.0, %v2710
      %2712 = vmatmul.f32.gmra.mxu0 %v2598
      %v2713 = vpop.f32.mrf.mxu0
      %v2714 = vadd.f32 0.0, %v2713
      %2715 = vmatmul.f32.gmra.mxu0 %v2601
      %v2716 = vpop.f32.mrf.mxu0
      %v2717 = vadd.f32 0.0, %v2716
      %2718 = vmatmul.f32.gmra.mxu0 %v2604
      %v2719 = vpop.f32.mrf.mxu0
      %v2720 = vadd.f32 0.0, %v2719
      %2721 = vmatmul.f32.gmra.mxu0 %v2607
      %v2722 = vpop.f32.mrf.mxu0
      %v2723 = vadd.f32 0.0, %v2722
      %2724 = vmatmul.f32.gmra.mxu0 %v2610
      %v2725 = vpop.f32.mrf.mxu0
      %v2726 = vadd.f32 0.0, %v2725
      %2727 = vmatmul.f32.gmra.mxu0 %v2613
      %v2728 = vpop.f32.mrf.mxu0
      %v2729 = vadd.f32 0.0, %v2728
      %2730 = vmatmul.f32.gmra.mxu0 %v2616
      %v2731 = vpop.f32.mrf.mxu0
      %v2732 = vadd.f32 0.0, %v2731
      %2733 = vmatmul.f32.gmra.mxu0 %v2619
      %v2734 = vpop.f32.mrf.mxu0
      %v2735 = vadd.f32 0.0, %v2734
      %2736 = vmatmul.f32.gmra.mxu0 %v2622
      %v2737 = vpop.f32.mrf.mxu0
      %v2738 = vadd.f32 0.0, %v2737
      %2739 = vmatmul.f32.gmra.mxu0 %v2625
      %v2740 = vpop.f32.mrf.mxu0
      %v2741 = vadd.f32 0.0, %v2740
      %2742 = vmatmul.f32.gmra.mxu0 %v2628
      %v2743 = vpop.f32.mrf.mxu0
      %v2744 = vadd.f32 0.0, %v2743
      %2745 = vmatmul.f32.gmra.mxu0 %v2631
      %v2746 = vpop.f32.mrf.mxu0
      %v2747 = vadd.f32 0.0, %v2746
      %2748 = vmatmul.f32.gmra.mxu0 %v2634
      %v2749 = vpop.f32.mrf.mxu0
      %v2750 = vadd.f32 0.0, %v2749
      %2751 = vmatmul.f32.gmra.mxu0 %v2637
      %v2752 = vpop.f32.mrf.mxu0
      %v2753 = vadd.f32 0.0, %v2752
      %2754 = vmatmul.f32.gmra.mxu0 %v2640
      %v2755 = vpop.f32.mrf.mxu0
      %v2756 = vadd.f32 0.0, %v2755
      %2757 = vmatmul.f32.gmra.mxu0 %v2643
      %v2758 = vpop.f32.mrf.mxu0
      %v2759 = vadd.f32 0.0, %v2758
      %2760 = vmatmul.f32.gmra.mxu0 %v2646
      %v2761 = vpop.f32.mrf.mxu0
      %v2762 = vadd.f32 0.0, %v2761
      %2763 = vmatmul.f32.gmra.mxu0 %v2649
      %v2764 = vpop.f32.mrf.mxu0
      %v2765 = vadd.f32 0.0, %v2764
      %2766 = vmatmul.f32.gmra.mxu0 %v2652
      %v2767 = vpop.f32.mrf.mxu0
      %v2768 = vadd.f32 0.0, %v2767
      %2769 = vmatmul.f32.gmra.mxu0 %v2655
      %v2770 = vpop.f32.mrf.mxu0
      %v2771 = vadd.f32 0.0, %v2770
      %2772 = vmatmul.f32.gmra.mxu0 %v2658
      %v2773 = vpop.f32.mrf.mxu0
      %v2774 = vadd.f32 0.0, %v2773
      %2775 = vmatmul.f32.gmra.mxu0 %v2661
      %v2776 = vpop.f32.mrf.mxu0
      %v2777 = vadd.f32 0.0, %v2776
      %2778 = vmatmul.f32.gmra.mxu0 %v2664
      %v2779 = vpop.f32.mrf.mxu0
      %v2780 = vadd.f32 0.0, %v2779
      %2781 = vdwg.mxu0
      %v2782 = vld [vmem:[#allocation2] sm:$0xff]
      %v2783 = vld [vmem:[#allocation2 + $0x8] sm:$0xff]
      %v2784 = vld [vmem:[#allocation2 + $0x10] sm:$0xff]
      %v2785 = vld [vmem:[#allocation2 + $0x18] sm:$0xff]
      %v2786 = vld [vmem:[#allocation2 + $0x20] sm:$0xff]
      %v2787 = vld [vmem:[#allocation2 + $0x28] sm:$0xff]
      %v2788 = vld [vmem:[#allocation2 + $0x30] sm:$0xff]
      %v2789 = vld [vmem:[#allocation2 + $0x38] sm:$0xff]
      %v2790 = vld [vmem:[#allocation2 + $0x40] sm:$0xff]
      %v2791 = vld [vmem:[#allocation2 + $0x48] sm:$0xff]
      %v2792 = vld [vmem:[#allocation2 + $0x50] sm:$0xff]
      %v2793 = vld [vmem:[#allocation2 + $0x58] sm:$0xff]
      %v2794 = vld [vmem:[#allocation2 + $0x60] sm:$0xff]
      %v2795 = vld [vmem:[#allocation2 + $0x68] sm:$0xff]
      %v2796 = vld [vmem:[#allocation2 + $0x70] sm:$0xff]
      %v2797 = vld [vmem:[#allocation2 + $0x78] sm:$0xff]
      %v2798 = vld [vmem:[#allocation2 + $0x80] sm:$0xff]
      %v2799 = vld [vmem:[#allocation2 + $0x88] sm:$0xff]
      %v2800 = vld [vmem:[#allocation2 + $0x90] sm:$0xff]
      %v2801 = vld [vmem:[#allocation2 + $0x98] sm:$0xff]
      %v2802 = vld [vmem:[#allocation2 + $0xa0] sm:$0xff]
      %v2803 = vld [vmem:[#allocation2 + $0xa8] sm:$0xff]
      %v2804 = vld [vmem:[#allocation2 + $0xb0] sm:$0xff]
      %v2805 = vld [vmem:[#allocation2 + $0xb8] sm:$0xff]
      %v2806 = vld [vmem:[#allocation2 + $0xc0] sm:$0xff]
      %v2807 = vld [vmem:[#allocation2 + $0xc8] sm:$0xff]
      %v2808 = vld [vmem:[#allocation2 + $0xd0] sm:$0xff]
      %v2809 = vld [vmem:[#allocation2 + $0xd8] sm:$0xff]
      %v2810 = vld [vmem:[#allocation2 + $0xe0] sm:$0xff]
      %v2811 = vld [vmem:[#allocation2 + $0xe8] sm:$0xff]
      %v2812 = vld [vmem:[#allocation2 + $0xf0] sm:$0xff]
      %v2813 = vld [vmem:[#allocation2 + $0xf8] sm:$0xff]
      %v2814 = vadd.f32 %v2782, %v2687
      %v2815 = vadd.f32 %v2783, %v2690
      %v2816 = vadd.f32 %v2784, %v2693
      %v2817 = vadd.f32 %v2785, %v2696
      %v2818 = vadd.f32 %v2786, %v2699
      %v2819 = vadd.f32 %v2787, %v2702
      %v2820 = vadd.f32 %v2788, %v2705
      %v2821 = vadd.f32 %v2789, %v2708
      %v2822 = vadd.f32 %v2790, %v2711
      %v2823 = vadd.f32 %v2791, %v2714
      %v2824 = vadd.f32 %v2792, %v2717
      %v2825 = vadd.f32 %v2793, %v2720
      %v2826 = vadd.f32 %v2794, %v2723
      %v2827 = vadd.f32 %v2795, %v2726
      %v2828 = vadd.f32 %v2796, %v2729
      %v2829 = vadd.f32 %v2797, %v2732
      %v2830 = vadd.f32 %v2798, %v2735
      %v2831 = vadd.f32 %v2799, %v2738
      %v2832 = vadd.f32 %v2800, %v2741
      %v2833 = vadd.f32 %v2801, %v2744
      %v2834 = vadd.f32 %v2802, %v2747
      %v2835 = vadd.f32 %v2803, %v2750
      %v2836 = vadd.f32 %v2804, %v2753
      %v2837 = vadd.f32 %v2805, %v2756
      %v2838 = vadd.f32 %v2806, %v2759
      %v2839 = vadd.f32 %v2807, %v2762
      %v2840 = vadd.f32 %v2808, %v2765
      %v2841 = vadd.f32 %v2809, %v2768
      %v2842 = vadd.f32 %v2810, %v2771
      %v2843 = vadd.f32 %v2811, %v2774
      %v2844 = vadd.f32 %v2812, %v2777
      %v2845 = vadd.f32 %v2813, %v2780
      %2846 = vst [vmem:[#allocation2] sm:$0xff] %v2814
      %2847 = vst [vmem:[#allocation2 + $0x8] sm:$0xff] %v2815
      %2848 = vst [vmem:[#allocation2 + $0x10] sm:$0xff] %v2816
      %2849 = vst [vmem:[#allocation2 + $0x18] sm:$0xff] %v2817
      %2850 = vst [vmem:[#allocation2 + $0x20] sm:$0xff] %v2818
      %2851 = vst [vmem:[#allocation2 + $0x28] sm:$0xff] %v2819
      %2852 = vst [vmem:[#allocation2 + $0x30] sm:$0xff] %v2820
      %2853 = vst [vmem:[#allocation2 + $0x38] sm:$0xff] %v2821
      %2854 = vst [vmem:[#allocation2 + $0x40] sm:$0xff] %v2822
      %2855 = vst [vmem:[#allocation2 + $0x48] sm:$0xff] %v2823
      %2856 = vst [vmem:[#allocation2 + $0x50] sm:$0xff] %v2824
      %2857 = vst [vmem:[#allocation2 + $0x58] sm:$0xff] %v2825
      %2858 = vst [vmem:[#allocation2 + $0x60] sm:$0xff] %v2826
      %2859 = vst [vmem:[#allocation2 + $0x68] sm:$0xff] %v2827
      %2860 = vst [vmem:[#allocation2 + $0x70] sm:$0xff] %v2828
      %2861 = vst [vmem:[#allocation2 + $0x78] sm:$0xff] %v2829
      %2862 = vst [vmem:[#allocation2 + $0x80] sm:$0xff] %v2830
      %2863 = vst [vmem:[#allocation2 + $0x88] sm:$0xff] %v2831
      %2864 = vst [vmem:[#allocation2 + $0x90] sm:$0xff] %v2832
      %2865 = vst [vmem:[#allocation2 + $0x98] sm:$0xff] %v2833
      %2866 = vst [vmem:[#allocation2 + $0xa0] sm:$0xff] %v2834
      %2867 = vst [vmem:[#allocation2 + $0xa8] sm:$0xff] %v2835
      %2868 = vst [vmem:[#allocation2 + $0xb0] sm:$0xff] %v2836
      %2869 = vst [vmem:[#allocation2 + $0xb8] sm:$0xff] %v2837
      %2870 = vst [vmem:[#allocation2 + $0xc0] sm:$0xff] %v2838
      %2871 = vst [vmem:[#allocation2 + $0xc8] sm:$0xff] %v2839
      %2872 = vst [vmem:[#allocation2 + $0xd0] sm:$0xff] %v2840
      %2873 = vst [vmem:[#allocation2 + $0xd8] sm:$0xff] %v2841
      %2874 = vst [vmem:[#allocation2 + $0xe0] sm:$0xff] %v2842
      %2875 = vst [vmem:[#allocation2 + $0xe8] sm:$0xff] %v2843
      %2876 = vst [vmem:[#allocation2 + $0xf0] sm:$0xff] %v2844
      %2877 = vst [vmem:[#allocation2 + $0xf8] sm:$0xff] %v2845
      %v2878 = vld [vmem:[%s2193 + $0x2] sm:$0xff]
      %v2879 = vld [vmem:[%s2193 + $0xa] sm:$0xff]
      %v2880 = vld [vmem:[%s2193 + $0x1a] sm:$0xff]
      %v2881 = vld [vmem:[%s2193 + $0x22] sm:$0xff]
      %v2882 = vld [vmem:[%s2193 + $0x32] sm:$0xff]
      %v2883 = vld [vmem:[%s2193 + $0x3a] sm:$0xff]
      %v2884 = vld [vmem:[%s2193 + $0x4a] sm:$0xff]
      %v2885 = vld [vmem:[%s2193 + $0x52] sm:$0xff]
      %v2886 = vld [vmem:[%s2193 + $0x62] sm:$0xff]
      %v2887 = vld [vmem:[%s2193 + $0x6a] sm:$0xff]
      %v2888 = vld [vmem:[%s2193 + $0x7a] sm:$0xff]
      %v2889 = vld [vmem:[%s2193 + $0x82] sm:$0xff]
      %v2890 = vld [vmem:[%s2193 + $0x92] sm:$0xff]
      %v2891 = vld [vmem:[%s2193 + $0x9a] sm:$0xff]
      %v2892 = vld [vmem:[%s2193 + $0xaa] sm:$0xff]
      %v2893 = vld [vmem:[%s2193 + $0xb2] sm:$0xff]
      %v2894 = vld [vmem:[%s2193 + $0xc2] sm:$0xff]
      %v2895 = vld [vmem:[%s2193 + $0xca] sm:$0xff]
      %v2896 = vld [vmem:[%s2193 + $0xda] sm:$0xff]
      %v2897 = vld [vmem:[%s2193 + $0xe2] sm:$0xff]
      %v2898 = vld [vmem:[%s2193 + $0xf2] sm:$0xff]
      %v2899 = vld [vmem:[%s2193 + $0xfa] sm:$0xff]
      %v2900 = vld [vmem:[%s2193 + $0x10a] sm:$0xff]
      %v2901 = vld [vmem:[%s2193 + $0x112] sm:$0xff]
      %v2902 = vld [vmem:[%s2193 + $0x122] sm:$0xff]
      %v2903 = vld [vmem:[%s2193 + $0x12a] sm:$0xff]
      %v2904 = vld [vmem:[%s2193 + $0x13a] sm:$0xff]
      %v2905 = vld [vmem:[%s2193 + $0x142] sm:$0xff]
      %v2906 = vld [vmem:[%s2193 + $0x152] sm:$0xff]
      %v2907 = vld [vmem:[%s2193 + $0x15a] sm:$0xff]
      %v2908 = vld [vmem:[%s2193 + $0x16a] sm:$0xff]
      %v2909 = vld [vmem:[%s2193 + $0x172] sm:$0xff]
      %s2910 = scalar_lea.vmem %s1, 32
      %v2911 = vld [vmem:[%s2910] sm:$0xf]
      %v2913 = vsel %vm232, %v2878, 0
      %v2916 = vsel %vm232, %v2879, 0
      %v2919 = vsel %vm232, %v2880, 0
      %v2922 = vsel %vm232, %v2881, 0
      %v2925 = vsel %vm232, %v2882, 0
      %v2928 = vsel %vm232, %v2883, 0
      %v2931 = vsel %vm232, %v2884, 0
      %v2934 = vsel %vm232, %v2885, 0
      %v2937 = vsel %vm232, %v2886, 0
      %v2940 = vsel %vm232, %v2887, 0
      %v2943 = vsel %vm232, %v2888, 0
      %v2946 = vsel %vm232, %v2889, 0
      %v2949 = vsel %vm232, %v2890, 0
      %v2952 = vsel %vm232, %v2891, 0
      %v2955 = vsel %vm232, %v2892, 0
      %v2958 = vsel %vm232, %v2893, 0
      %v2961 = vsel %vm232, %v2894, 0
      %v2964 = vsel %vm232, %v2895, 0
      %v2967 = vsel %vm232, %v2896, 0
      %v2970 = vsel %vm232, %v2897, 0
      %v2973 = vsel %vm232, %v2898, 0
      %v2976 = vsel %vm232, %v2899, 0
      %v2979 = vsel %vm232, %v2900, 0
      %v2982 = vsel %vm232, %v2901, 0
      %v2985 = vsel %vm232, %v2902, 0
      %v2988 = vsel %vm232, %v2903, 0
      %v2991 = vsel %vm232, %v2904, 0
      %v2994 = vsel %vm232, %v2905, 0
      %v2997 = vsel %vm232, %v2906, 0
      %v3000 = vsel %vm232, %v2907, 0
      %v3003 = vsel %vm232, %v2908, 0
      %v3006 = vsel %vm232, %v2909, 0
      %v3009 = vsel %vm329, %v2911, 0
      %3011 = vmatpush.msra.mxu0 0.0
      %3012 = vmatpush.msra.mxu0 0.0
      %3013 = vmatpush.msra.mxu0 0.0
      %3014 = vmatpush.msra.mxu0 0.0
      %3015 = vmatpush.msra.mxu0 0.0
      %3016 = vmatpush.msra.mxu0 0.0
      %3017 = vmatpush.msra.mxu0 0.0
      %3018 = vmatpush.msra.mxu0 0.0
      %3019 = vmatpush.msra.mxu0 0.0
      %3020 = vmatpush.msra.mxu0 0.0
      %3021 = vmatpush.msra.mxu0 0.0
      %3022 = vmatpush.msra.mxu0 0.0
      %3023 = vmatpush.msra.mxu0 0.0
      %3024 = vmatpush.msra.mxu0 0.0
      %3025 = vmatpush.msra.mxu0 0.0
      %3026 = vmatpush.msra.mxu0 %v3009
      %3027 = vmatmul.f32.gmra.mxu0 %v2913
      %v3028 = vpop.f32.mrf.mxu0
      %v3029 = vadd.f32 0.0, %v3028
      %3030 = vmatmul.f32.gmra.mxu0 %v2916
      %v3031 = vpop.f32.mrf.mxu0
      %v3032 = vadd.f32 0.0, %v3031
      %3033 = vmatmul.f32.gmra.mxu0 %v2919
      %v3034 = vpop.f32.mrf.mxu0
      %v3035 = vadd.f32 0.0, %v3034
      %3036 = vmatmul.f32.gmra.mxu0 %v2922
      %v3037 = vpop.f32.mrf.mxu0
      %v3038 = vadd.f32 0.0, %v3037
      %3039 = vmatmul.f32.gmra.mxu0 %v2925
      %v3040 = vpop.f32.mrf.mxu0
      %v3041 = vadd.f32 0.0, %v3040
      %3042 = vmatmul.f32.gmra.mxu0 %v2928
      %v3043 = vpop.f32.mrf.mxu0
      %v3044 = vadd.f32 0.0, %v3043
      %3045 = vmatmul.f32.gmra.mxu0 %v2931
      %v3046 = vpop.f32.mrf.mxu0
      %v3047 = vadd.f32 0.0, %v3046
      %3048 = vmatmul.f32.gmra.mxu0 %v2934
      %v3049 = vpop.f32.mrf.mxu0
      %v3050 = vadd.f32 0.0, %v3049
      %3051 = vmatmul.f32.gmra.mxu0 %v2937
      %v3052 = vpop.f32.mrf.mxu0
      %v3053 = vadd.f32 0.0, %v3052
      %3054 = vmatmul.f32.gmra.mxu0 %v2940
      %v3055 = vpop.f32.mrf.mxu0
      %v3056 = vadd.f32 0.0, %v3055
      %3057 = vmatmul.f32.gmra.mxu0 %v2943
      %v3058 = vpop.f32.mrf.mxu0
      %v3059 = vadd.f32 0.0, %v3058
      %3060 = vmatmul.f32.gmra.mxu0 %v2946
      %v3061 = vpop.f32.mrf.mxu0
      %v3062 = vadd.f32 0.0, %v3061
      %3063 = vmatmul.f32.gmra.mxu0 %v2949
      %v3064 = vpop.f32.mrf.mxu0
      %v3065 = vadd.f32 0.0, %v3064
      %3066 = vmatmul.f32.gmra.mxu0 %v2952
      %v3067 = vpop.f32.mrf.mxu0
      %v3068 = vadd.f32 0.0, %v3067
      %3069 = vmatmul.f32.gmra.mxu0 %v2955
      %v3070 = vpop.f32.mrf.mxu0
      %v3071 = vadd.f32 0.0, %v3070
      %3072 = vmatmul.f32.gmra.mxu0 %v2958
      %v3073 = vpop.f32.mrf.mxu0
      %v3074 = vadd.f32 0.0, %v3073
      %3075 = vmatmul.f32.gmra.mxu0 %v2961
      %v3076 = vpop.f32.mrf.mxu0
      %v3077 = vadd.f32 0.0, %v3076
      %3078 = vmatmul.f32.gmra.mxu0 %v2964
      %v3079 = vpop.f32.mrf.mxu0
      %v3080 = vadd.f32 0.0, %v3079
      %3081 = vmatmul.f32.gmra.mxu0 %v2967
      %v3082 = vpop.f32.mrf.mxu0
      %v3083 = vadd.f32 0.0, %v3082
      %3084 = vmatmul.f32.gmra.mxu0 %v2970
      %v3085 = vpop.f32.mrf.mxu0
      %v3086 = vadd.f32 0.0, %v3085
      %3087 = vmatmul.f32.gmra.mxu0 %v2973
      %v3088 = vpop.f32.mrf.mxu0
      %v3089 = vadd.f32 0.0, %v3088
      %3090 = vmatmul.f32.gmra.mxu0 %v2976
      %v3091 = vpop.f32.mrf.mxu0
      %v3092 = vadd.f32 0.0, %v3091
      %3093 = vmatmul.f32.gmra.mxu0 %v2979
      %v3094 = vpop.f32.mrf.mxu0
      %v3095 = vadd.f32 0.0, %v3094
      %3096 = vmatmul.f32.gmra.mxu0 %v2982
      %v3097 = vpop.f32.mrf.mxu0
      %v3098 = vadd.f32 0.0, %v3097
      %3099 = vmatmul.f32.gmra.mxu0 %v2985
      %v3100 = vpop.f32.mrf.mxu0
      %v3101 = vadd.f32 0.0, %v3100
      %3102 = vmatmul.f32.gmra.mxu0 %v2988
      %v3103 = vpop.f32.mrf.mxu0
      %v3104 = vadd.f32 0.0, %v3103
      %3105 = vmatmul.f32.gmra.mxu0 %v2991
      %v3106 = vpop.f32.mrf.mxu0
      %v3107 = vadd.f32 0.0, %v3106
      %3108 = vmatmul.f32.gmra.mxu0 %v2994
      %v3109 = vpop.f32.mrf.mxu0
      %v3110 = vadd.f32 0.0, %v3109
      %3111 = vmatmul.f32.gmra.mxu0 %v2997
      %v3112 = vpop.f32.mrf.mxu0
      %v3113 = vadd.f32 0.0, %v3112
      %3114 = vmatmul.f32.gmra.mxu0 %v3000
      %v3115 = vpop.f32.mrf.mxu0
      %v3116 = vadd.f32 0.0, %v3115
      %3117 = vmatmul.f32.gmra.mxu0 %v3003
      %v3118 = vpop.f32.mrf.mxu0
      %v3119 = vadd.f32 0.0, %v3118
      %3120 = vmatmul.f32.gmra.mxu0 %v3006
      %v3121 = vpop.f32.mrf.mxu0
      %v3122 = vadd.f32 0.0, %v3121
      %3123 = vdwg.mxu0
      %v3124 = vld [vmem:[#allocation2] sm:$0xff]
      %v3125 = vld [vmem:[#allocation2 + $0x8] sm:$0xff]
      %v3126 = vld [vmem:[#allocation2 + $0x10] sm:$0xff]
      %v3127 = vld [vmem:[#allocation2 + $0x18] sm:$0xff]
      %v3128 = vld [vmem:[#allocation2 + $0x20] sm:$0xff]
      %v3129 = vld [vmem:[#allocation2 + $0x28] sm:$0xff]
      %v3130 = vld [vmem:[#allocation2 + $0x30] sm:$0xff]
      %v3131 = vld [vmem:[#allocation2 + $0x38] sm:$0xff]
      %v3132 = vld [vmem:[#allocation2 + $0x40] sm:$0xff]
      %v3133 = vld [vmem:[#allocation2 + $0x48] sm:$0xff]
      %v3134 = vld [vmem:[#allocation2 + $0x50] sm:$0xff]
      %v3135 = vld [vmem:[#allocation2 + $0x58] sm:$0xff]
      %v3136 = vld [vmem:[#allocation2 + $0x60] sm:$0xff]
      %v3137 = vld [vmem:[#allocation2 + $0x68] sm:$0xff]
      %v3138 = vld [vmem:[#allocation2 + $0x70] sm:$0xff]
      %v3139 = vld [vmem:[#allocation2 + $0x78] sm:$0xff]
      %v3140 = vld [vmem:[#allocation2 + $0x80] sm:$0xff]
      %v3141 = vld [vmem:[#allocation2 + $0x88] sm:$0xff]
      %v3142 = vld [vmem:[#allocation2 + $0x90] sm:$0xff]
      %v3143 = vld [vmem:[#allocation2 + $0x98] sm:$0xff]
      %v3144 = vld [vmem:[#allocation2 + $0xa0] sm:$0xff]
      %v3145 = vld [vmem:[#allocation2 + $0xa8] sm:$0xff]
      %v3146 = vld [vmem:[#allocation2 + $0xb0] sm:$0xff]
      %v3147 = vld [vmem:[#allocation2 + $0xb8] sm:$0xff]
      %v3148 = vld [vmem:[#allocation2 + $0xc0] sm:$0xff]
      %v3149 = vld [vmem:[#allocation2 + $0xc8] sm:$0xff]
      %v3150 = vld [vmem:[#allocation2 + $0xd0] sm:$0xff]
      %v3151 = vld [vmem:[#allocation2 + $0xd8] sm:$0xff]
      %v3152 = vld [vmem:[#allocation2 + $0xe0] sm:$0xff]
      %v3153 = vld [vmem:[#allocation2 + $0xe8] sm:$0xff]
      %v3154 = vld [vmem:[#allocation2 + $0xf0] sm:$0xff]
      %v3155 = vld [vmem:[#allocation2 + $0xf8] sm:$0xff]
      %v3156 = vadd.f32 %v3124, %v3029
      %v3157 = vadd.f32 %v3125, %v3032
      %v3158 = vadd.f32 %v3126, %v3035
      %v3159 = vadd.f32 %v3127, %v3038
      %v3160 = vadd.f32 %v3128, %v3041
      %v3161 = vadd.f32 %v3129, %v3044
      %v3162 = vadd.f32 %v3130, %v3047
      %v3163 = vadd.f32 %v3131, %v3050
      %v3164 = vadd.f32 %v3132, %v3053
      %v3165 = vadd.f32 %v3133, %v3056
      %v3166 = vadd.f32 %v3134, %v3059
      %v3167 = vadd.f32 %v3135, %v3062
      %v3168 = vadd.f32 %v3136, %v3065
      %v3169 = vadd.f32 %v3137, %v3068
      %v3170 = vadd.f32 %v3138, %v3071
      %v3171 = vadd.f32 %v3139, %v3074
      %v3172 = vadd.f32 %v3140, %v3077
      %v3173 = vadd.f32 %v3141, %v3080
      %v3174 = vadd.f32 %v3142, %v3083
      %v3175 = vadd.f32 %v3143, %v3086
      %v3176 = vadd.f32 %v3144, %v3089
      %v3177 = vadd.f32 %v3145, %v3092
      %v3178 = vadd.f32 %v3146, %v3095
      %v3179 = vadd.f32 %v3147, %v3098
      %v3180 = vadd.f32 %v3148, %v3101
      %v3181 = vadd.f32 %v3149, %v3104
      %v3182 = vadd.f32 %v3150, %v3107
      %v3183 = vadd.f32 %v3151, %v3110
      %v3184 = vadd.f32 %v3152, %v3113
      %v3185 = vadd.f32 %v3153, %v3116
      %v3186 = vadd.f32 %v3154, %v3119
      %v3187 = vadd.f32 %v3155, %v3122
      %3188 = vst [vmem:[#allocation2] sm:$0xff] %v3156
      %3189 = vst [vmem:[#allocation2 + $0x8] sm:$0xff] %v3157
      %3190 = vst [vmem:[#allocation2 + $0x10] sm:$0xff] %v3158
      %3191 = vst [vmem:[#allocation2 + $0x18] sm:$0xff] %v3159
      %3192 = vst [vmem:[#allocation2 + $0x20] sm:$0xff] %v3160
      %3193 = vst [vmem:[#allocation2 + $0x28] sm:$0xff] %v3161
      %3194 = vst [vmem:[#allocation2 + $0x30] sm:$0xff] %v3162
      %3195 = vst [vmem:[#allocation2 + $0x38] sm:$0xff] %v3163
      %3196 = vst [vmem:[#allocation2 + $0x40] sm:$0xff] %v3164
      %3197 = vst [vmem:[#allocation2 + $0x48] sm:$0xff] %v3165
      %3198 = vst [vmem:[#allocation2 + $0x50] sm:$0xff] %v3166
      %3199 = vst [vmem:[#allocation2 + $0x58] sm:$0xff] %v3167
      %3200 = vst [vmem:[#allocation2 + $0x60] sm:$0xff] %v3168
      %3201 = vst [vmem:[#allocation2 + $0x68] sm:$0xff] %v3169
      %3202 = vst [vmem:[#allocation2 + $0x70] sm:$0xff] %v3170
      %3203 = vst [vmem:[#allocation2 + $0x78] sm:$0xff] %v3171
      %3204 = vst [vmem:[#allocation2 + $0x80] sm:$0xff] %v3172
      %3205 = vst [vmem:[#allocation2 + $0x88] sm:$0xff] %v3173
      %3206 = vst [vmem:[#allocation2 + $0x90] sm:$0xff] %v3174
      %3207 = vst [vmem:[#allocation2 + $0x98] sm:$0xff] %v3175
      %3208 = vst [vmem:[#allocation2 + $0xa0] sm:$0xff] %v3176
      %3209 = vst [vmem:[#allocation2 + $0xa8] sm:$0xff] %v3177
      %3210 = vst [vmem:[#allocation2 + $0xb0] sm:$0xff] %v3178
      %3211 = vst [vmem:[#allocation2 + $0xb8] sm:$0xff] %v3179
      %3212 = vst [vmem:[#allocation2 + $0xc0] sm:$0xff] %v3180
      %3213 = vst [vmem:[#allocation2 + $0xc8] sm:$0xff] %v3181
      %3214 = vst [vmem:[#allocation2 + $0xd0] sm:$0xff] %v3182
      %3215 = vst [vmem:[#allocation2 + $0xd8] sm:$0xff] %v3183
      %3216 = vst [vmem:[#allocation2 + $0xe0] sm:$0xff] %v3184
      %3217 = vst [vmem:[#allocation2 + $0xe8] sm:$0xff] %v3185
      %3218 = vst [vmem:[#allocation2 + $0xf0] sm:$0xff] %v3186
      %3219 = vst [vmem:[#allocation2 + $0xf8] sm:$0xff] %v3187
      %v3220 = vld [vmem:[#allocation2] sm:$0xff]
      %v3221 = vld [vmem:[#allocation2 + $0x8] sm:$0xff]
      %v3222 = vld [vmem:[#allocation2 + $0x10] sm:$0xff]
      %v3223 = vld [vmem:[#allocation2 + $0x18] sm:$0xff]
      %v3224 = vld [vmem:[#allocation2 + $0x20] sm:$0xff]
      %v3225 = vld [vmem:[#allocation2 + $0x28] sm:$0xff]
      %v3226 = vld [vmem:[#allocation2 + $0x30] sm:$0xff]
      %v3227 = vld [vmem:[#allocation2 + $0x38] sm:$0xff]
      %v3228 = vld [vmem:[#allocation2 + $0x40] sm:$0xff]
      %v3229 = vld [vmem:[#allocation2 + $0x48] sm:$0xff]
      %v3230 = vld [vmem:[#allocation2 + $0x50] sm:$0xff]
      %v3231 = vld [vmem:[#allocation2 + $0x58] sm:$0xff]
      %v3232 = vld [vmem:[#allocation2 + $0x60] sm:$0xff]
      %v3233 = vld [vmem:[#allocation2 + $0x68] sm:$0xff]
      %v3234 = vld [vmem:[#allocation2 + $0x70] sm:$0xff]
      %v3235 = vld [vmem:[#allocation2 + $0x78] sm:$0xff]
      %v3236 = vld [vmem:[#allocation2 + $0x80] sm:$0xff]
      %v3237 = vld [vmem:[#allocation2 + $0x88] sm:$0xff]
      %v3238 = vld [vmem:[#allocation2 + $0x90] sm:$0xff]
      %v3239 = vld [vmem:[#allocation2 + $0x98] sm:$0xff]
      %v3240 = vld [vmem:[#allocation2 + $0xa0] sm:$0xff]
      %v3241 = vld [vmem:[#allocation2 + $0xa8] sm:$0xff]
      %v3242 = vld [vmem:[#allocation2 + $0xb0] sm:$0xff]
      %v3243 = vld [vmem:[#allocation2 + $0xb8] sm:$0xff]
      %v3244 = vld [vmem:[#allocation2 + $0xc0] sm:$0xff]
      %v3245 = vld [vmem:[#allocation2 + $0xc8] sm:$0xff]
      %v3246 = vld [vmem:[#allocation2 + $0xd0] sm:$0xff]
      %v3247 = vld [vmem:[#allocation2 + $0xd8] sm:$0xff]
      %v3248 = vld [vmem:[#allocation2 + $0xe0] sm:$0xff]
      %v3249 = vld [vmem:[#allocation2 + $0xe8] sm:$0xff]
      %v3250 = vld [vmem:[#allocation2 + $0xf0] sm:$0xff]
      %v3251 = vld [vmem:[#allocation2 + $0xf8] sm:$0xff]
      %v3252 = vld [vmem:[%s2] sm:$0x1]
      %v3254 = vperm.slane %v3252, 0
      %v3256 = vadd.f32 %v3220, %v3254
      %v3257 = vadd.f32 %v3221, %v3254
      %v3258 = vadd.f32 %v3222, %v3254
      %v3259 = vadd.f32 %v3223, %v3254
      %v3260 = vadd.f32 %v3224, %v3254
      %v3261 = vadd.f32 %v3225, %v3254
      %v3262 = vadd.f32 %v3226, %v3254
      %v3263 = vadd.f32 %v3227, %v3254
      %v3264 = vadd.f32 %v3228, %v3254
      %v3265 = vadd.f32 %v3229, %v3254
      %v3266 = vadd.f32 %v3230, %v3254
      %v3267 = vadd.f32 %v3231, %v3254
      %v3268 = vadd.f32 %v3232, %v3254
      %v3269 = vadd.f32 %v3233, %v3254
      %v3270 = vadd.f32 %v3234, %v3254
      %v3271 = vadd.f32 %v3235, %v3254
      %v3272 = vadd.f32 %v3236, %v3254
      %v3273 = vadd.f32 %v3237, %v3254
      %v3274 = vadd.f32 %v3238, %v3254
      %v3275 = vadd.f32 %v3239, %v3254
      %v3276 = vadd.f32 %v3240, %v3254
      %v3277 = vadd.f32 %v3241, %v3254
      %v3278 = vadd.f32 %v3242, %v3254
      %v3279 = vadd.f32 %v3243, %v3254
      %v3280 = vadd.f32 %v3244, %v3254
      %v3281 = vadd.f32 %v3245, %v3254
      %v3282 = vadd.f32 %v3246, %v3254
      %v3283 = vadd.f32 %v3247, %v3254
      %v3284 = vadd.f32 %v3248, %v3254
      %v3285 = vadd.f32 %v3249, %v3254
      %v3286 = vadd.f32 %v3250, %v3254
      %v3287 = vadd.f32 %v3251, %v3254
      %3288 = vst [vmem:[%s194] sm:$0xff] %v3256
      %3289 = vst [vmem:[%s194 + $0x8] sm:$0xff] %v3257
      %3290 = vst [vmem:[%s194 + $0x10] sm:$0xff] %v3258
      %3291 = vst [vmem:[%s194 + $0x18] sm:$0xff] %v3259
      %3292 = vst [vmem:[%s194 + $0x20] sm:$0xff] %v3260
      %3293 = vst [vmem:[%s194 + $0x28] sm:$0xff] %v3261
      %3294 = vst [vmem:[%s194 + $0x30] sm:$0xff] %v3262
      %3295 = vst [vmem:[%s194 + $0x38] sm:$0xff] %v3263
      %3296 = vst [vmem:[%s194 + $0x40] sm:$0xff] %v3264
      %3297 = vst [vmem:[%s194 + $0x48] sm:$0xff] %v3265
      %3298 = vst [vmem:[%s194 + $0x50] sm:$0xff] %v3266
      %3299 = vst [vmem:[%s194 + $0x58] sm:$0xff] %v3267
      %3300 = vst [vmem:[%s194 + $0x60] sm:$0xff] %v3268
      %3301 = vst [vmem:[%s194 + $0x68] sm:$0xff] %v3269
      %3302 = vst [vmem:[%s194 + $0x70] sm:$0xff] %v3270
      %3303 = vst [vmem:[%s194 + $0x78] sm:$0xff] %v3271
      %3304 = vst [vmem:[%s194 + $0x80] sm:$0xff] %v3272
      %3305 = vst [vmem:[%s194 + $0x88] sm:$0xff] %v3273
      %3306 = vst [vmem:[%s194 + $0x90] sm:$0xff] %v3274
      %3307 = vst [vmem:[%s194 + $0x98] sm:$0xff] %v3275
      %3308 = vst [vmem:[%s194 + $0xa0] sm:$0xff] %v3276
      %3309 = vst [vmem:[%s194 + $0xa8] sm:$0xff] %v3277
      %3310 = vst [vmem:[%s194 + $0xb0] sm:$0xff] %v3278
      %3311 = vst [vmem:[%s194 + $0xb8] sm:$0xff] %v3279
      %3312 = vst [vmem:[%s194 + $0xc0] sm:$0xff] %v3280
      %3313 = vst [vmem:[%s194 + $0xc8] sm:$0xff] %v3281
      %3314 = vst [vmem:[%s194 + $0xd0] sm:$0xff] %v3282
      %3315 = vst [vmem:[%s194 + $0xd8] sm:$0xff] %v3283
      %3316 = vst [vmem:[%s194 + $0xe0] sm:$0xff] %v3284
      %3317 = vst [vmem:[%s194 + $0xe8] sm:$0xff] %v3285
      %3318 = vst [vmem:[%s194 + $0xf0] sm:$0xff] %v3286
      %3319 = vst [vmem:[%s194 + $0xf8] sm:$0xff] %v3287
      %s3320 = smul.u32 16, %s19
      %p3321 = scmp.lt.s32.totalorder %s18, 1
      %s3322 = scalar_select %p3321, %s18, 1
      %p3323 = scmp.lt.s32.totalorder %s3320, 15
      %s3324 = scalar_select %p3323, %s3320, 15
      %s3325 = smul.addr %s3324, 2
      %s3326 = smul.addr %s3322, 32
      %s3327 = sadd.s32 %s3325, %s3326
      %s3328 = smul.addr %s3327, 8
      %s3329 = scalar_lea.vmem %s3, %s3328
      // Predicated region
      $region33: #{normalized_conv2d.1} parent=31 // pred_check
        %p3330 = pneg %p114
      $region34: #{normalized_conv2d.1} parent=31 // pred_check_branch
        %3332 = sbr.rel (%p3330) target = $region36
      $region35: #{normalized_conv2d.1} parent=31 // pred_region
        %s3333 = smul.u32 16, %s19
      $region36: #{normalized_conv2d.1} parent=31 // pred_fallthru
        _
    $region32: #{normalized_conv2d.1} parent=5 // pred_fallthru
      _
    %p3334 = scmp.le.s32.totalorder 2, %s9
    // Predicated region
    $region37: #{normalized_conv2d.1} parent=5 // pred_check
      %p3335 = pneg %p3334
    $region38: #{normalized_conv2d.1} parent=5 // pred_check_branch
      %3337 = sbr.rel (%p3335) target = $region40
    $region39: #{normalized_conv2d.1} parent=5 // pred_region
      %s3338 = ssub.s32 %s9, 2
      // Predicated region
      $region41: #{normalized_conv2d.1} parent=39 // pred_check
        %p3339 = pneg %p120
      $region42: #{normalized_conv2d.1} parent=39 // pred_check_branch
        %3341 = sbr.rel (%p3339) target = $region44
      $region43: #{normalized_conv2d.1} parent=39 // pred_region
        %s3342 = smul.u32 16, %s21
        %p3343 = scmp.lt.s32.totalorder %s20, 1
        %s3344 = scalar_select %p3343, %s20, 1
        %p3345 = scmp.lt.s32.totalorder %s3342, 15
        %s3346 = scalar_select %p3345, %s3342, 15
        %s3347 = smul.addr %s3346, 2
        %s3348 = smul.addr %s3344, 32
        %s3349 = sadd.s32 %s3347, %s3348
        %s3350 = smul.addr %s3349, 8
        %s3351 = scalar_lea.vmem %s3, %s3350
      $region44: #{normalized_conv2d.1} parent=39 // pred_fallthru
        _
    $region40: #{normalized_conv2d.1} parent=5 // pred_fallthru
      _
  $region6: #{normalized_conv2d.1} parent=0 // loop_footer
    %s13 = sadd.s32 1, %s9
  $region7: #{normalized_conv2d.1} parent=0 // loop_footer_branch
    %8 = sbr.rel target = $region3
  $region8: #{normalized_conv2d.1} parent=0 // loop_exit
    _

</llo_original>
